<compile_context>
chip_gen: v7x
topology: tpu7x:2x2x1
jax: 0.10.0
libtpu: 0.0.40
codegen_flags: <defaults>
</compile_context>

<pallas_src>
import jax
import jax.numpy as jnp
from jax.experimental import pallas as pl
from jax.experimental.pallas import tpu as pltpu

_LANE = 128


def _round_up(x: int, m: int) -> int:
    return ((x + m - 1) // m) * m


def _make_kernel(num_layers: int, repeat: int, acts, f_pads, tm: int, mxu_dtype):
    """Kernel refs = (A_tile, h0, W0^T, b0, ..., out, a_res_scratch, h_scratch)."""
    f0 = f_pads[0]

    def kernel(*refs):
        a_tile_ref = refs[0]                       # (tm, n_pad)  mxu_dtype (streamed)
        h0_ref = refs[1]                           # (n_pad, f0)  f32 (resident)
        wb = refs[2:2 + 2 * num_layers]            # W_i^T (f_in_pad, f_out_pad), b_i (1, f_out_pad)
        o_ref = refs[2 + 2 * num_layers]           # (n_pad, f_pads[-1]) f32
        a_res = refs[3 + 2 * num_layers]           # (n_pad, n_pad) mxu_dtype scratch
        h_acc = refs[4 + 2 * num_layers]           # (n_pad, f_max) f32 scratch

        k = pl.program_id(0)
        nk = pl.num_programs(0)
        off = pl.multiple_of(k * tm, tm)

        # Stash this row-tile of A into the resident copy and fold its rows of the
        # FIRST propagate right away -> the A HBM->VMEM stream overlaps MXU work.
        a_tile = a_tile_ref[...]
        a_res[pl.ds(off, tm), :] = a_tile
        h_acc[pl.ds(off, tm), :f0] = jnp.dot(
            a_tile, h0_ref[...].astype(mxu_dtype),
            preferred_element_type=jnp.float32)

        # A fully resident -> finish the remaining propagates, linears, activations.
        @pl.when(k == nk - 1)
        def _finish():
            a = a_res[...]
            cur = f0                                # current (padded) width of h
            for i in range(num_layers):
                w_t = wb[2 * i][...]                # factor**repeat folded in
                b = wb[2 * i + 1][...].astype(jnp.float32)

                n_prop = repeat - 1 if i == 0 else repeat
                for _ in range(n_prop):
                    h_acc[:, :cur] = jnp.dot(
                        a, h_acc[:, :cur].astype(mxu_dtype),
                        preferred_element_type=jnp.float32)

                h = jnp.dot(h_acc[:, :cur].astype(mxu_dtype), w_t,
                            preferred_element_type=jnp.float32) + b

                act = acts[i]
                if act == "tanh":
                    h = jnp.tanh(h)
                elif act == "relu":
                    h = jnp.maximum(h, 0.0)
                elif act != "identity":
                    raise ValueError(f"unsupported activation: {act}")

                cur = f_pads[i + 1]
                if i + 1 < num_layers:
                    h_acc[:, :cur] = h              # in-place carry, bounded footprint
                else:
                    o_ref[...] = h.astype(o_ref.dtype)

    return kernel


def gcn_apply(x, support, weights, biases, activations, *, repeat=1, factor=1.0,
              mxu_dtype=jnp.bfloat16, row_tile=_LANE):
    """Mirrors GCN.forward (eval mode) with one fused Pallas call.

    weights[i] follows PyTorch convention [F_out, F_in]; biases[i] is [F_out].
    """
    assert int(repeat) >= 1
    n_nodes, f_in0 = x.shape
    num_layers = len(weights)
    acts = tuple(list(activations) + ["identity"] * (num_layers - len(activations)))

    f_dims = [int(f_in0)] + [int(w.shape[0]) for w in weights]
    for i, w in enumerate(weights):
        assert int(w.shape[1]) == f_dims[i], "layer width chain mismatch"
    f_pads = [_round_up(d, _LANE) for d in f_dims]   # per-layer padding (review #6)
    f_max = max(f_pads)

    n_pad = _round_up(n_nodes, _LANE)
    tm = row_tile if (row_tile <= n_pad and n_pad % row_tile == 0) else _LANE
    nk = n_pad // tm
    itemsize = jnp.dtype(mxu_dtype).itemsize

    # ---- one-time parameter / input prep (hoist out of hot path in real use) ----
    a_pad = jnp.zeros((n_pad, n_pad), dtype=mxu_dtype).at[:n_nodes, :n_nodes].set(
        support.astype(mxu_dtype))
    x_pad = jnp.zeros((n_pad, f_pads[0]), jnp.float32).at[:n_nodes, :f_in0].set(
        x.astype(jnp.float32))

    scale = float(factor) ** int(repeat)   # spmm(factor*A, ., repeat) == factor**repeat * A^repeat
    w_pads, b_pads = [], []
    for i, (w, b) in enumerate(zip(weights, biases)):
        f_out, f_in = int(w.shape[0]), int(w.shape[1])
        w_t = jnp.transpose(w).astype(jnp.float32) * scale          # [F_in, F_out]
        w_p = jnp.zeros((f_pads[i], f_pads[i + 1]), jnp.float32).at[:f_in, :f_out].set(w_t)
        w_pads.append(w_p.astype(mxu_dtype))
        b_pads.append(jnp.zeros((1, f_pads[i + 1]), jnp.float32).at[0, :f_out].set(
            b.astype(jnp.float32)))

    inputs = [a_pad, x_pad]
    for w_p, b_p in zip(w_pads, b_pads):
        inputs += [w_p, b_p]

    # ---- cost estimate (advisory) ----
    flops, transcend = 0, 0
    for i in range(num_layers):
        flops += int(repeat) * 2 * n_pad * n_pad * f_pads[i]
        flops += 2 * n_pad * f_pads[i] * f_pads[i + 1]
        if acts[i] == "tanh":
            transcend += n_pad * f_pads[i + 1]
    in_bytes = sum(int(v.size) * v.dtype.itemsize for v in inputs)
    out_bytes = n_pad * f_pads[-1] * 4

    # ---- generation-aware VMEM budget (review #4) ----
    resident = (
        2 * tm * n_pad * itemsize                                  # streamed A tile (2 bufs)
        + n_pad * f_pads[0] * 4                                    # h0 block
        + sum(f_pads[i] * f_pads[i + 1] * itemsize + f_pads[i + 1] * 4
              for i in range(num_layers))                          # W/b blocks
        + n_pad * f_pads[-1] * 4                                   # output block
        + n_pad * n_pad * itemsize                                 # resident A scratch
        + n_pad * f_max * 4                                        # running-h scratch
    )
    headroom = 6 * n_pad * f_max * 4 + (4 << 20)                   # casts / matmul temps
    try:
        cap = int(0.9 * pltpu.get_tpu_info().vmem_capacity_bytes)  # 128 MiB v5e/v6e, 64 MiB v7x
    except Exception:
        cap = 48 << 20                                             # conservative fallback
    vmem_limit = int(min(max(resident + headroom, 16 << 20), cap))

    kernel = _make_kernel(num_layers, int(repeat), acts, f_pads, tm, mxu_dtype)

    def build(single_buffer: bool):
        def const_spec(shape):
            # Block index constant across the grid -> one buffer suffices (review #1).
            if single_buffer:
                return pl.BlockSpec(shape, lambda k: (0, 0), pipeline_mode=pl.Buffered(1))
            return pl.BlockSpec(shape, lambda k: (0, 0))

        in_specs = [pl.BlockSpec((tm, n_pad), lambda k: (k, 0)),   # streamed A row tiles
                    const_spec((n_pad, f_pads[0]))]
        for i in range(num_layers):
            in_specs += [const_spec((f_pads[i], f_pads[i + 1])),
                         const_spec((1, f_pads[i + 1]))]

        return pl.pallas_call(
            kernel,
            out_shape=jax.ShapeDtypeStruct((n_pad, f_pads[-1]), jnp.float32),
            grid=(nk,),
            in_specs=in_specs,
            out_specs=const_spec((n_pad, f_pads[-1])),
            scratch_shapes=[pltpu.VMEM((n_pad, n_pad), mxu_dtype),
                            pltpu.VMEM((n_pad, f_max), jnp.float32)],
            compiler_params=pltpu.CompilerParams(
                dimension_semantics=("arbitrary",),   # grid axis carries scratch state
                vmem_limit_bytes=vmem_limit),
            cost_estimate=pl.CostEstimate(
                flops=flops, transcendentals=transcend,
                bytes_accessed=in_bytes + out_bytes),
        )

    try:
        out_pad = jax.block_until_ready(build(True)(*inputs))
    except Exception:
        # If this jax build rejects single-buffered blocks, fall back to defaults
        # (identical results, slightly larger VMEM footprint).
        out_pad = jax.block_until_ready(build(False)(*inputs))

    return out_pad[:n_nodes, :f_dims[-1]]


def _reference(x, support, weights, biases, activations, *, repeat, factor):
    """Pure-JAX f32 (highest-precision matmul) reference mirroring the PyTorch forward."""
    num_layers = len(weights)
    acts = list(activations) + ["identity"] * (num_layers - len(activations))
    hp = jax.lax.Precision.HIGHEST
    h = x.astype(jnp.float32)
    a = support.astype(jnp.float32) * factor
    for w, b, act in zip(weights, biases, acts):
        for _ in range(repeat):
            h = jnp.dot(a, h, precision=hp)
        h = jnp.dot(h, w.astype(jnp.float32).T, precision=hp) + b.astype(jnp.float32)
        if act == "tanh":
            h = jnp.tanh(h)
        elif act == "relu":
            h = jnp.maximum(h, 0.0)
    return h


if __name__ == "__main__":
    # Module config (synthetic, deterministic)
    nodes = [8, 32, 16]                      # -> 2 linear layers: 8->32, 32->16
    activations = ["tanh", "identity"]
    repeat = 2
    factor = 0.5
    n_nodes = 200                            # graph size -> n_pad=256, 2 streamed A tiles

    key = jax.random.PRNGKey(0)
    k_x, k_a, k_w0, k_b0, k_w1, k_b1 = jax.random.split(key, 6)

    x = jax.random.normal(k_x, (n_nodes, nodes[0]), dtype=jnp.float32)
    # dense "support" (e.g. normalized adjacency); small deterministic values
    support = jax.random.uniform(k_a, (n_nodes, n_nodes), dtype=jnp.float32) / n_nodes

    # Linear params, PyTorch convention: W_i has shape [F_out, F_in]
    weights = [
        0.1 * jax.random.normal(k_w0, (nodes[1], nodes[0]), dtype=jnp.float32),
        0.1 * jax.random.normal(k_w1, (nodes[2], nodes[1]), dtype=jnp.float32),
    ]
    biases = [
        0.1 * jax.random.normal(k_b0, (nodes[1],), dtype=jnp.float32),
        0.1 * jax.random.normal(k_b1, (nodes[2],), dtype=jnp.float32),
    ]

    ref = _reference(x, support, weights, biases, activations,
                     repeat=repeat, factor=factor)

    # Exact-ish path: f32 MXU operands, tight tolerance vs f32 reference.
    out_f32 = gcn_apply(x, support, weights, biases, activations,
                        repeat=repeat, factor=factor, mxu_dtype=jnp.float32)
    out_f32 = jax.block_until_ready(out_f32)
    assert out_f32.shape == (n_nodes, nodes[-1]), out_f32.shape
    assert jnp.allclose(out_f32, ref, atol=1e-4, rtol=1e-4), "f32 mismatch vs reference"

    # Fast path (all generations incl. v5e): bf16 MXU operands, f32 accumulation.
    out_bf16 = gcn_apply(x, support, weights, biases, activations,
                         repeat=repeat, factor=factor, mxu_dtype=jnp.bfloat16)
    out_bf16 = jax.block_until_ready(out_bf16)
    assert out_bf16.shape == (n_nodes, nodes[-1]), out_bf16.shape
    assert jnp.allclose(out_bf16, ref, atol=5e-2, rtol=5e-2), "bf16 mismatch vs reference"

    print("KERNEL_OK")
</pallas_src>

<mosaic_0001>
module attributes {stable_mosaic.version = 11 : i64} {
  func.func @kernel(%arg0: i32, %arg1: memref<128x256xf32, #tpu.memory_space<vmem>>, %arg2: memref<256x128xf32, #tpu.memory_space<vmem>>, %arg3: memref<128x128xf32, #tpu.memory_space<vmem>>, %arg4: memref<1x128xf32, #tpu.memory_space<vmem>>, %arg5: memref<128x128xf32, #tpu.memory_space<vmem>>, %arg6: memref<1x128xf32, #tpu.memory_space<vmem>>, %arg7: memref<256x128xf32, #tpu.memory_space<vmem>>, %arg8: memref<256x256xf32, #tpu.memory_space<vmem>>, %arg9: memref<256x128xf32, #tpu.memory_space<vmem>>) attributes {dimension_semantics = [#tpu.dimension_semantics<arbitrary>], iteration_bounds = array<i64: 2>, scalar_prefetch = 0 : i64, scratch_operands = 2 : i64, tpu.core_type = #tpu.core_type<tc>, window_params = [{transform_indices = @transform_0, window_bounds = array<i64: 128, 256>}, {pipeline_mode = #tpu.pipeline_mode<synchronous>, transform_indices = @transform_1, window_bounds = array<i64: 256, 128>}, {pipeline_mode = #tpu.pipeline_mode<synchronous>, transform_indices = @transform_2, window_bounds = array<i64: 128, 128>}, {pipeline_mode = #tpu.pipeline_mode<synchronous>, transform_indices = @transform_3, window_bounds = array<i64: 1, 128>}, {pipeline_mode = #tpu.pipeline_mode<synchronous>, transform_indices = @transform_4, window_bounds = array<i64: 128, 128>}, {pipeline_mode = #tpu.pipeline_mode<synchronous>, transform_indices = @transform_5, window_bounds = array<i64: 1, 128>}, {pipeline_mode = #tpu.pipeline_mode<synchronous>, transform_indices = @transform_6, window_bounds = array<i64: 256, 128>}]} {
    %c128_i32 = arith.constant 128 : i32
    %0 = arith.muli %arg0, %c128_i32 : i32
    %1 = tpu.assume_multiple %0, 128 : i32
    %c0 = arith.constant 0 : index
    %c0_0 = arith.constant 0 : index
    %2 = vector.load %arg1[%c0, %c0_0] : memref<128x256xf32, #tpu.memory_space<vmem>>, vector<128x256xf32>
    %3 = arith.index_cast %1 : i32 to index
    %c0_1 = arith.constant 0 : index
    %4 = vector.load %arg8[%3, %c0_1] : memref<256x256xf32, #tpu.memory_space<vmem>>, vector<128x256xf32>
    tpu.vector_store %arg8[%3, %c0_1], %2 {strides = array<i32>} : memref<256x256xf32, #tpu.memory_space<vmem>>, vector<128x256xf32>,
    %c0_2 = arith.constant 0 : index
    %c0_3 = arith.constant 0 : index
    %5 = vector.load %arg2[%c0_2, %c0_3] : memref<256x128xf32, #tpu.memory_space<vmem>>, vector<256x128xf32>
    %cst = arith.constant dense<0.000000e+00> : vector<128x128xf32>
    %6 = tpu.matmul %2, %5, %cst {dimension_numbers = #tpu.dot_dimension_numbers<[1], [0], [0], [1], [0, 0, 1, 1], [], []>} : vector<128x256xf32>, vector<256x128xf32>, vector<128x128xf32> -> vector<128x128xf32>
    %7 = arith.index_cast %1 : i32 to index
    %c0_4 = arith.constant 0 : index
    %8 = vector.load %arg9[%7, %c0_4] : memref<256x128xf32, #tpu.memory_space<vmem>>, vector<128x128xf32>
    tpu.vector_store %arg9[%7, %c0_4], %6 {strides = array<i32>} : memref<256x128xf32, #tpu.memory_space<vmem>>, vector<128x128xf32>,
    %c1_i32 = arith.constant 1 : i32
    %9 = arith.cmpi eq, %arg0, %c1_i32 : i32
    %10 = arith.extui %9 : i1 to i32
    %c0_i32 = arith.constant 0 : i32
    %11 = arith.cmpi ne, %10, %c0_i32 : i32
    scf.if %11 {
      %c0_5 = arith.constant 0 : index
      %c0_6 = arith.constant 0 : index
      %12 = vector.load %arg8[%c0_5, %c0_6] : memref<256x256xf32, #tpu.memory_space<vmem>>, vector<256x256xf32>
      %c0_7 = arith.constant 0 : index
      %c0_8 = arith.constant 0 : index
      %13 = vector.load %arg3[%c0_7, %c0_8] : memref<128x128xf32, #tpu.memory_space<vmem>>, vector<128x128xf32>
      %c0_9 = arith.constant 0 : index
      %c0_10 = arith.constant 0 : index
      %14 = vector.load %arg4[%c0_9, %c0_10] : memref<1x128xf32, #tpu.memory_space<vmem>>, vector<1x128xf32>
      %c0_11 = arith.constant 0 : index
      %c0_12 = arith.constant 0 : index
      %15 = vector.load %arg9[%c0_11, %c0_12] : memref<256x128xf32, #tpu.memory_space<vmem>>, vector<256x128xf32>
      %cst_13 = arith.constant dense<0.000000e+00> : vector<256x128xf32>
      %16 = tpu.matmul %12, %15, %cst_13 {dimension_numbers = #tpu.dot_dimension_numbers<[1], [0], [0], [1], [0, 0, 1, 1], [], []>} : vector<256x256xf32>, vector<256x128xf32>, vector<256x128xf32> -> vector<256x128xf32>
      %c0_14 = arith.constant 0 : index
      %c0_15 = arith.constant 0 : index
      %17 = vector.load %arg9[%c0_14, %c0_15] : memref<256x128xf32, #tpu.memory_space<vmem>>, vector<256x128xf32>
      tpu.vector_store %arg9[%c0_14, %c0_15], %16 {strides = array<i32>} : memref<256x128xf32, #tpu.memory_space<vmem>>, vector<256x128xf32>,
      %c0_16 = arith.constant 0 : index
      %c0_17 = arith.constant 0 : index
      %18 = vector.load %arg9[%c0_16, %c0_17] : memref<256x128xf32, #tpu.memory_space<vmem>>, vector<256x128xf32>
      %cst_18 = arith.constant dense<0.000000e+00> : vector<256x128xf32>
      %19 = tpu.matmul %18, %13, %cst_18 {dimension_numbers = #tpu.dot_dimension_numbers<[1], [0], [0], [1], [0, 0, 1, 1], [], []>} : vector<256x128xf32>, vector<128x128xf32>, vector<256x128xf32> -> vector<256x128xf32>
      %20 = vector.broadcast %14 : vector<1x128xf32> to vector<256x128xf32>
      %21 = arith.addf %19, %20 : vector<256x128xf32>
      %22 = math.tanh %21 : vector<256x128xf32>
      %c0_19 = arith.constant 0 : index
      %c0_20 = arith.constant 0 : index
      %23 = vector.load %arg9[%c0_19, %c0_20] : memref<256x128xf32, #tpu.memory_space<vmem>>, vector<256x128xf32>
      tpu.vector_store %arg9[%c0_19, %c0_20], %22 {strides = array<i32>} : memref<256x128xf32, #tpu.memory_space<vmem>>, vector<256x128xf32>,
      %c0_21 = arith.constant 0 : index
      %c0_22 = arith.constant 0 : index
      %24 = vector.load %arg5[%c0_21, %c0_22] : memref<128x128xf32, #tpu.memory_space<vmem>>, vector<128x128xf32>
      %c0_23 = arith.constant 0 : index
      %c0_24 = arith.constant 0 : index
      %25 = vector.load %arg6[%c0_23, %c0_24] : memref<1x128xf32, #tpu.memory_space<vmem>>, vector<1x128xf32>
      %c0_25 = arith.constant 0 : index
      %c0_26 = arith.constant 0 : index
      %26 = vector.load %arg9[%c0_25, %c0_26] : memref<256x128xf32, #tpu.memory_space<vmem>>, vector<256x128xf32>
      %cst_27 = arith.constant dense<0.000000e+00> : vector<256x128xf32>
      %27 = tpu.matmul %12, %26, %cst_27 {dimension_numbers = #tpu.dot_dimension_numbers<[1], [0], [0], [1], [0, 0, 1, 1], [], []>} : vector<256x256xf32>, vector<256x128xf32>, vector<256x128xf32> -> vector<256x128xf32>
      %c0_28 = arith.constant 0 : index
      %c0_29 = arith.constant 0 : index
      %28 = vector.load %arg9[%c0_28, %c0_29] : memref<256x128xf32, #tpu.memory_space<vmem>>, vector<256x128xf32>
      tpu.vector_store %arg9[%c0_28, %c0_29], %27 {strides = array<i32>} : memref<256x128xf32, #tpu.memory_space<vmem>>, vector<256x128xf32>,
      %c0_30 = arith.constant 0 : index
      %c0_31 = arith.constant 0 : index
      %29 = vector.load %arg9[%c0_30, %c0_31] : memref<256x128xf32, #tpu.memory_space<vmem>>, vector<256x128xf32>
      %cst_32 = arith.constant dense<0.000000e+00> : vector<256x128xf32>
      %30 = tpu.matmul %12, %29, %cst_32 {dimension_numbers = #tpu.dot_dimension_numbers<[1], [0], [0], [1], [0, 0, 1, 1], [], []>} : vector<256x256xf32>, vector<256x128xf32>, vector<256x128xf32> -> vector<256x128xf32>
      %c0_33 = arith.constant 0 : index
      %c0_34 = arith.constant 0 : index
      %31 = vector.load %arg9[%c0_33, %c0_34] : memref<256x128xf32, #tpu.memory_space<vmem>>, vector<256x128xf32>
      tpu.vector_store %arg9[%c0_33, %c0_34], %30 {strides = array<i32>} : memref<256x128xf32, #tpu.memory_space<vmem>>, vector<256x128xf32>,
      %c0_35 = arith.constant 0 : index
      %c0_36 = arith.constant 0 : index
      %32 = vector.load %arg9[%c0_35, %c0_36] : memref<256x128xf32, #tpu.memory_space<vmem>>, vector<256x128xf32>
      %cst_37 = arith.constant dense<0.000000e+00> : vector<256x128xf32>
      %33 = tpu.matmul %32, %24, %cst_37 {dimension_numbers = #tpu.dot_dimension_numbers<[1], [0], [0], [1], [0, 0, 1, 1], [], []>} : vector<256x128xf32>, vector<128x128xf32>, vector<256x128xf32> -> vector<256x128xf32>
      %34 = vector.broadcast %25 : vector<1x128xf32> to vector<256x128xf32>
      %35 = arith.addf %33, %34 : vector<256x128xf32>
      %c0_38 = arith.constant 0 : index
      %c0_39 = arith.constant 0 : index
      %36 = vector.load %arg7[%c0_38, %c0_39] : memref<256x128xf32, #tpu.memory_space<vmem>>, vector<256x128xf32>
      tpu.vector_store %arg7[%c0_38, %c0_39], %35 {strides = array<i32>} : memref<256x128xf32, #tpu.memory_space<vmem>>, vector<256x128xf32>,
    } else {
    }
    return
  }
  func.func @transform_0(%arg0: i32) -> (i32, i32) {
    %c0_i32 = arith.constant 0 : i32
    %c0_i32_0 = arith.constant 0 : i32
    return %arg0, %c0_i32 : i32, i32
  }
  func.func @transform_1(%arg0: i32) -> (i32, i32) {
    %c0_i32 = arith.constant 0 : i32
    %c0_i32_0 = arith.constant 0 : i32
    %c0_i32_1 = arith.constant 0 : i32
    return %c0_i32, %c0_i32_0 : i32, i32
  }
  func.func @transform_2(%arg0: i32) -> (i32, i32) {
    %c0_i32 = arith.constant 0 : i32
    %c0_i32_0 = arith.constant 0 : i32
    %c0_i32_1 = arith.constant 0 : i32
    return %c0_i32, %c0_i32_0 : i32, i32
  }
  func.func @transform_3(%arg0: i32) -> (i32, i32) {
    %c0_i32 = arith.constant 0 : i32
    %c0_i32_0 = arith.constant 0 : i32
    %c0_i32_1 = arith.constant 0 : i32
    return %c0_i32, %c0_i32_0 : i32, i32
  }
  func.func @transform_4(%arg0: i32) -> (i32, i32) {
    %c0_i32 = arith.constant 0 : i32
    %c0_i32_0 = arith.constant 0 : i32
    %c0_i32_1 = arith.constant 0 : i32
    return %c0_i32, %c0_i32_0 : i32, i32
  }
  func.func @transform_5(%arg0: i32) -> (i32, i32) {
    %c0_i32 = arith.constant 0 : i32
    %c0_i32_0 = arith.constant 0 : i32
    %c0_i32_1 = arith.constant 0 : i32
    return %c0_i32, %c0_i32_0 : i32, i32
  }
  func.func @transform_6(%arg0: i32) -> (i32, i32) {
    %c0_i32 = arith.constant 0 : i32
    %c0_i32_0 = arith.constant 0 : i32
    %c0_i32_1 = arith.constant 0 : i32
    return %c0_i32, %c0_i32_0 : i32, i32
  }
}

module attributes {stable_mosaic.version = 11 : i64} {
  func.func @kernel(%arg0: i32, %arg1: memref<128x256xf32, #tpu.memory_space<vmem>>, %arg2: memref<256x128xf32, #tpu.memory_space<vmem>>, %arg3: memref<128x128xf32, #tpu.memory_space<vmem>>, %arg4: memref<1x128xf32, #tpu.memory_space<vmem>>, %arg5: memref<128x128xf32, #tpu.memory_space<vmem>>, %arg6: memref<1x128xf32, #tpu.memory_space<vmem>>, %arg7: memref<256x128xf32, #tpu.memory_space<vmem>>, %arg8: memref<256x256xf32, #tpu.memory_space<vmem>>, %arg9: memref<256x128xf32, #tpu.memory_space<vmem>>) attributes {dimension_semantics = [#tpu.dimension_semantics<arbitrary>], iteration_bounds = array<i64: 2>, scalar_prefetch = 0 : i64, scratch_operands = 2 : i64, tpu.core_type = #tpu.core_type<tc>, window_params = [{transform_indices = @transform_0, window_bounds = array<i64: 128, 256>}, {pipeline_mode = #tpu.pipeline_mode<synchronous>, transform_indices = @transform_1, window_bounds = array<i64: 256, 128>}, {pipeline_mode = #tpu.pipeline_mode<synchronous>, transform_indices = @transform_2, window_bounds = array<i64: 128, 128>}, {pipeline_mode = #tpu.pipeline_mode<synchronous>, transform_indices = @transform_3, window_bounds = array<i64: 1, 128>}, {pipeline_mode = #tpu.pipeline_mode<synchronous>, transform_indices = @transform_4, window_bounds = array<i64: 128, 128>}, {pipeline_mode = #tpu.pipeline_mode<synchronous>, transform_indices = @transform_5, window_bounds = array<i64: 1, 128>}, {pipeline_mode = #tpu.pipeline_mode<synchronous>, transform_indices = @transform_6, window_bounds = array<i64: 256, 128>}]} {
    %c128_i32 = arith.constant 128 : i32
    %0 = arith.muli %arg0, %c128_i32 : i32
    %1 = tpu.assume_multiple %0, 128 : i32
    %c0 = arith.constant 0 : index
    %c0_0 = arith.constant 0 : index
    %2 = vector.load %arg1[%c0, %c0_0] : memref<128x256xf32, #tpu.memory_space<vmem>>, vector<128x256xf32>
    %3 = arith.index_cast %1 : i32 to index
    %c0_1 = arith.constant 0 : index
    %4 = vector.load %arg8[%3, %c0_1] : memref<256x256xf32, #tpu.memory_space<vmem>>, vector<128x256xf32>
    tpu.vector_store %arg8[%3, %c0_1], %2 {strides = array<i32>} : memref<256x256xf32, #tpu.memory_space<vmem>>, vector<128x256xf32>,
    %c0_2 = arith.constant 0 : index
    %c0_3 = arith.constant 0 : index
    %5 = vector.load %arg2[%c0_2, %c0_3] : memref<256x128xf32, #tpu.memory_space<vmem>>, vector<256x128xf32>
    %cst = arith.constant dense<0.000000e+00> : vector<128x128xf32>
    %6 = tpu.matmul %2, %5, %cst {dimension_numbers = #tpu.dot_dimension_numbers<[1], [0], [0], [1], [0, 0, 1, 1], [], []>} : vector<128x256xf32>, vector<256x128xf32>, vector<128x128xf32> -> vector<128x128xf32>
    %7 = arith.index_cast %1 : i32 to index
    %c0_4 = arith.constant 0 : index
    %8 = vector.load %arg9[%7, %c0_4] : memref<256x128xf32, #tpu.memory_space<vmem>>, vector<128x128xf32>
    tpu.vector_store %arg9[%7, %c0_4], %6 {strides = array<i32>} : memref<256x128xf32, #tpu.memory_space<vmem>>, vector<128x128xf32>,
    %c1_i32 = arith.constant 1 : i32
    %9 = arith.cmpi eq, %arg0, %c1_i32 : i32
    %10 = arith.extui %9 : i1 to i32
    %c0_i32 = arith.constant 0 : i32
    %11 = arith.cmpi ne, %10, %c0_i32 : i32
    scf.if %11 {
      %c0_5 = arith.constant 0 : index
      %c0_6 = arith.constant 0 : index
      %12 = vector.load %arg8[%c0_5, %c0_6] : memref<256x256xf32, #tpu.memory_space<vmem>>, vector<256x256xf32>
      %c0_7 = arith.constant 0 : index
      %c0_8 = arith.constant 0 : index
      %13 = vector.load %arg3[%c0_7, %c0_8] : memref<128x128xf32, #tpu.memory_space<vmem>>, vector<128x128xf32>
      %c0_9 = arith.constant 0 : index
      %c0_10 = arith.constant 0 : index
      %14 = vector.load %arg4[%c0_9, %c0_10] : memref<1x128xf32, #tpu.memory_space<vmem>>, vector<1x128xf32>
      %c0_11 = arith.constant 0 : index
      %c0_12 = arith.constant 0 : index
      %15 = vector.load %arg9[%c0_11, %c0_12] : memref<256x128xf32, #tpu.memory_space<vmem>>, vector<256x128xf32>
      %cst_13 = arith.constant dense<0.000000e+00> : vector<256x128xf32>
      %16 = tpu.matmul %12, %15, %cst_13 {dimension_numbers = #tpu.dot_dimension_numbers<[1], [0], [0], [1], [0, 0, 1, 1], [], []>} : vector<256x256xf32>, vector<256x128xf32>, vector<256x128xf32> -> vector<256x128xf32>
      %c0_14 = arith.constant 0 : index
      %c0_15 = arith.constant 0 : index
      %17 = vector.load %arg9[%c0_14, %c0_15] : memref<256x128xf32, #tpu.memory_space<vmem>>, vector<256x128xf32>
      tpu.vector_store %arg9[%c0_14, %c0_15], %16 {strides = array<i32>} : memref<256x128xf32, #tpu.memory_space<vmem>>, vector<256x128xf32>,
      %c0_16 = arith.constant 0 : index
      %c0_17 = arith.constant 0 : index
      %18 = vector.load %arg9[%c0_16, %c0_17] : memref<256x128xf32, #tpu.memory_space<vmem>>, vector<256x128xf32>
      %cst_18 = arith.constant dense<0.000000e+00> : vector<256x128xf32>
      %19 = tpu.matmul %18, %13, %cst_18 {dimension_numbers = #tpu.dot_dimension_numbers<[1], [0], [0], [1], [0, 0, 1, 1], [], []>} : vector<256x128xf32>, vector<128x128xf32>, vector<256x128xf32> -> vector<256x128xf32>
      %20 = vector.broadcast %14 : vector<1x128xf32> to vector<256x128xf32>
      %21 = arith.addf %19, %20 : vector<256x128xf32>
      %22 = math.tanh %21 : vector<256x128xf32>
      %c0_19 = arith.constant 0 : index
      %c0_20 = arith.constant 0 : index
      %23 = vector.load %arg9[%c0_19, %c0_20] : memref<256x128xf32, #tpu.memory_space<vmem>>, vector<256x128xf32>
      tpu.vector_store %arg9[%c0_19, %c0_20], %22 {strides = array<i32>} : memref<256x128xf32, #tpu.memory_space<vmem>>, vector<256x128xf32>,
      %c0_21 = arith.constant 0 : index
      %c0_22 = arith.constant 0 : index
      %24 = vector.load %arg5[%c0_21, %c0_22] : memref<128x128xf32, #tpu.memory_space<vmem>>, vector<128x128xf32>
      %c0_23 = arith.constant 0 : index
      %c0_24 = arith.constant 0 : index
      %25 = vector.load %arg6[%c0_23, %c0_24] : memref<1x128xf32, #tpu.memory_space<vmem>>, vector<1x128xf32>
      %c0_25 = arith.constant 0 : index
      %c0_26 = arith.constant 0 : index
      %26 = vector.load %arg9[%c0_25, %c0_26] : memref<256x128xf32, #tpu.memory_space<vmem>>, vector<256x128xf32>
      %cst_27 = arith.constant dense<0.000000e+00> : vector<256x128xf32>
      %27 = tpu.matmul %12, %26, %cst_27 {dimension_numbers = #tpu.dot_dimension_numbers<[1], [0], [0], [1], [0, 0, 1, 1], [], []>} : vector<256x256xf32>, vector<256x128xf32>, vector<256x128xf32> -> vector<256x128xf32>
      %c0_28 = arith.constant 0 : index
      %c0_29 = arith.constant 0 : index
      %28 = vector.load %arg9[%c0_28, %c0_29] : memref<256x128xf32, #tpu.memory_space<vmem>>, vector<256x128xf32>
      tpu.vector_store %arg9[%c0_28, %c0_29], %27 {strides = array<i32>} : memref<256x128xf32, #tpu.memory_space<vmem>>, vector<256x128xf32>,
      %c0_30 = arith.constant 0 : index
      %c0_31 = arith.constant 0 : index
      %29 = vector.load %arg9[%c0_30, %c0_31] : memref<256x128xf32, #tpu.memory_space<vmem>>, vector<256x128xf32>
      %cst_32 = arith.constant dense<0.000000e+00> : vector<256x128xf32>
      %30 = tpu.matmul %12, %29, %cst_32 {dimension_numbers = #tpu.dot_dimension_numbers<[1], [0], [0], [1], [0, 0, 1, 1], [], []>} : vector<256x256xf32>, vector<256x128xf32>, vector<256x128xf32> -> vector<256x128xf32>
      %c0_33 = arith.constant 0 : index
      %c0_34 = arith.constant 0 : index
      %31 = vector.load %arg9[%c0_33, %c0_34] : memref<256x128xf32, #tpu.memory_space<vmem>>, vector<256x128xf32>
      tpu.vector_store %arg9[%c0_33, %c0_34], %30 {strides = array<i32>} : memref<256x128xf32, #tpu.memory_space<vmem>>, vector<256x128xf32>,
      %c0_35 = arith.constant 0 : index
      %c0_36 = arith.constant 0 : index
      %32 = vector.load %arg9[%c0_35, %c0_36] : memref<256x128xf32, #tpu.memory_space<vmem>>, vector<256x128xf32>
      %cst_37 = arith.constant dense<0.000000e+00> : vector<256x128xf32>
      %33 = tpu.matmul %32, %24, %cst_37 {dimension_numbers = #tpu.dot_dimension_numbers<[1], [0], [0], [1], [0, 0, 1, 1], [], []>} : vector<256x128xf32>, vector<128x128xf32>, vector<256x128xf32> -> vector<256x128xf32>
      %34 = vector.broadcast %25 : vector<1x128xf32> to vector<256x128xf32>
      %35 = arith.addf %33, %34 : vector<256x128xf32>
      %c0_38 = arith.constant 0 : index
      %c0_39 = arith.constant 0 : index
      %36 = vector.load %arg7[%c0_38, %c0_39] : memref<256x128xf32, #tpu.memory_space<vmem>>, vector<256x128xf32>
      tpu.vector_store %arg7[%c0_38, %c0_39], %35 {strides = array<i32>} : memref<256x128xf32, #tpu.memory_space<vmem>>, vector<256x128xf32>,
    } else {
    }
    return
  }
  func.func @transform_0(%arg0: i32) -> (i32, i32) {
    %c0_i32 = arith.constant 0 : i32
    %c0_i32_0 = arith.constant 0 : i32
    return %arg0, %c0_i32 : i32, i32
  }
  func.func @transform_1(%arg0: i32) -> (i32, i32) {
    %c0_i32 = arith.constant 0 : i32
    %c0_i32_0 = arith.constant 0 : i32
    %c0_i32_1 = arith.constant 0 : i32
    return %c0_i32, %c0_i32_0 : i32, i32
  }
  func.func @transform_2(%arg0: i32) -> (i32, i32) {
    %c0_i32 = arith.constant 0 : i32
    %c0_i32_0 = arith.constant 0 : i32
    %c0_i32_1 = arith.constant 0 : i32
    return %c0_i32, %c0_i32_0 : i32, i32
  }
  func.func @transform_3(%arg0: i32) -> (i32, i32) {
    %c0_i32 = arith.constant 0 : i32
    %c0_i32_0 = arith.constant 0 : i32
    %c0_i32_1 = arith.constant 0 : i32
    return %c0_i32, %c0_i32_0 : i32, i32
  }
  func.func @transform_4(%arg0: i32) -> (i32, i32) {
    %c0_i32 = arith.constant 0 : i32
    %c0_i32_0 = arith.constant 0 : i32
    %c0_i32_1 = arith.constant 0 : i32
    return %c0_i32, %c0_i32_0 : i32, i32
  }
  func.func @transform_5(%arg0: i32) -> (i32, i32) {
    %c0_i32 = arith.constant 0 : i32
    %c0_i32_0 = arith.constant 0 : i32
    %c0_i32_1 = arith.constant 0 : i32
    return %c0_i32, %c0_i32_0 : i32, i32
  }
  func.func @transform_6(%arg0: i32) -> (i32, i32) {
    %c0_i32 = arith.constant 0 : i32
    %c0_i32_0 = arith.constant 0 : i32
    %c0_i32_1 = arith.constant 0 : i32
    return %c0_i32, %c0_i32_0 : i32, i32
  }
}

</mosaic_0001>

<llo_original>
// kernel: tpu_custom_call.1
$region0: #{tpu_custom_call.1}
  #allocation0 [shape = 'u32[]', space=smem, size = 0x4, offset = 0x4, fixed_abs, tag = 'smem constant byte address 0x4 - core index']
  #allocation1 [shape = 'u32[144,128]{1,0:T(1,128)}', space=vmem, size = 0x12000, scoped, tag = 'internal scratch']
  #allocation2 [shape = 'f32[256,256]{1,0:T(8,128)}', space=vmem, size = 0x40000, scoped, tag = 'scratch operand']
  #allocation3 [shape = 'f32[256,128]{1,0:T(8,128)}', space=vmem, size = 0x20000, scoped, tag = 'scratch operand']
  %s0 = inlined_call_operand.hbm [shape: f32[256,256], index: 0, kind: input, shape index: {}]
  %s1 = inlined_call_operand.hbm [shape: f32[256,128], index: 1, kind: input, shape index: {}]
  %s2 = inlined_call_operand.hbm [shape: f32[128,128], index: 2, kind: input, shape index: {}]
  %s3 = inlined_call_operand.vmem [shape: f32[1,128], index: 3, kind: input, shape index: {}]
  %s4 = inlined_call_operand.hbm [shape: f32[128,128], index: 4, kind: input, shape index: {}]
  %s5 = inlined_call_operand.vmem [shape: f32[1,128], index: 5, kind: input, shape index: {}]
  %s6 = inlined_call_operand.hbm [shape: f32[256,128], index: 6, kind: output, shape index: {}]
  %s7 = sld [smem:[#allocation0]]
  $region77: #{tpu_custom_call.1} parent=0
    _
  %s9 = ssub.s32 1, %s7
  %s10 = scalar_select 0, %s9, %s7
  $region1: #{tpu_custom_call.1} parent=0
    #allocation4 [shape = 'u8[262144]{0}', space=vmem, size = 0x40000, scoped, tag = 'input window, operand 0']
    #allocation5 [shape = 's32[2]{0}', space=sflag, size = 0x8, scoped, tag = 'scoped memory for tpu_custom_call.1']
    #allocation6 [shape = 's32[2]{0}', space=sflag, size = 0x8, scoped, tag = 'scoped memory for tpu_custom_call.1']
    #allocation7 [shape = 'u8[131072]{0}', space=vmem, size = 0x20000, scoped, tag = 'input window, operand 1, single buffered']
    #allocation8 [shape = 's32[1]{0}', space=sflag, size = 0x4, scoped, tag = 'scoped memory for tpu_custom_call.1']
    #allocation9 [shape = 'u8[65536]{0}', space=vmem, size = 0x10000, scoped, tag = 'input window, operand 2, single buffered']
    #allocation10 [shape = 'u8[65536]{0}', space=vmem, size = 0x10000, scoped, tag = 'input window, operand 4, single buffered']
    #allocation11 [shape = 's32[1]{0}', space=sflag, size = 0x4, scoped, tag = 'scoped memory for tpu_custom_call.1']
    #allocation12 [shape = 'u8[131072]{0}', space=vmem, size = 0x20000, scoped, tag = 'output window, operand 0, single buffered']
    %11 = vsyncpa [#allocation5], 0
    %s12 = scalar_lea.sflag [#allocation5], 1
    %13 = vsyncpa %s12, 0
    %14 = vsyncpa [#allocation8], 0
    %15 = vsyncpa [#allocation11], 0
    %16 = vsyncpa [#allocation6], 0
    loop: start=0, step=1, limit=4
    $region2: #{tpu_custom_call.1} parent=1 // loop_pre_header
      _
    $region3: #{tpu_custom_call.1} parent=1 // loop_header
      %s18 = sphi 0, %s22
      %p19 = scmp.ge.s32.totalorder %s18, 4
      %s28 = sphi 0, %s30
      %s31 = sphi 0, %s28
      %s32 = sphi 0, %s31
      %s48 = sphi 0, %s32
      %s52 = sphi 0, %s52
      %s54 = sphi 0, %s52
      %s55 = sphi 0, %s54
      %s69 = sphi 0, %s55
      %s73 = sphi 0, %s73
      %s75 = sphi 0, %s73
      %s76 = sphi 0, %s75
      %s90 = sphi 0, %s76
      %s94 = sphi 0, %s94
      %s96 = sphi 0, %s94
      %s97 = sphi 0, %s96
      %s111 = sphi 0, %s97
      %s115 = sphi 0, %s115
      %s117 = sphi 0, %s115
      %s118 = sphi 0, %s117
      %s132 = sphi 0, %s118
      %s136 = sphi 0, %s136
      %s138 = sphi 0, %s136
      %s139 = sphi 0, %s138
      %s153 = sphi 0, %s139
      %s157 = sphi 0, %s157
      %s159 = sphi 0, %s157
      %s160 = sphi 0, %s159
      %s174 = sphi 0, %s160
    $region4: #{tpu_custom_call.1} parent=1 // loop_header_branch
      %21 = sbr.rel (%p19) target = $region8
    $region5: #{tpu_custom_call.1} parent=1 // loop_body
      %s23 = ssub.s32 %s18, 1
      %s24 = ssub.s32 %s18, 2
      %s25 = sadd.s32 %s18, 1
      %s26 = ssub.s32 %s18, %s25
      %p27 = scmp.eq.s32.totalorder %s26, 0
      %s29 = sadd.s32 %s28, 1
      %s30 = scalar_select %p27, %s28, %s29
      %p33 = pneg %p27
      %p34 = scmp.eq.s32.totalorder %s18, 1
      %p35 = por %p33, %p34
      %p36 = scmp.ne.s32.totalorder %s28, %s31
      %p37 = scmp.eq.s32.totalorder %s18, 0
      %p38 = por %p36, %p37
      %p39 = scmp.ne.s32.totalorder %s28, %s31
      %p40 = scmp.eq.s32.totalorder %s23, 1
      %p41 = por %p39, %p40
      %p42 = scmp.ne.s32.totalorder %s31, %s32
      %p43 = scmp.eq.s32.totalorder %s23, 0
      %p44 = por %p42, %p43
      %p45 = scmp.ne.s32.totalorder %s31, %s32
      %p46 = scmp.eq.s32.totalorder %s24, 1
      %p47 = por %p45, %p46
      %p49 = scmp.ne.s32.totalorder %s32, %s48
      %p50 = scmp.eq.s32.totalorder %s24, 0
      %p51 = por %p49, %p50
      %s53 = sadd.s32 %s52, 1
      %p56 = scmp.eq.s32.totalorder %s18, 1
      %p57 = scmp.ne.s32.totalorder %s52, %s54
      %p58 = scmp.eq.s32.totalorder %s18, 0
      %p59 = por %p57, %p58
      %p60 = scmp.ne.s32.totalorder %s52, %s54
      %p61 = scmp.eq.s32.totalorder %s23, 1
      %p62 = por %p60, %p61
      %p63 = scmp.ne.s32.totalorder %s54, %s55
      %p64 = scmp.eq.s32.totalorder %s23, 0
      %p65 = por %p63, %p64
      %p66 = scmp.ne.s32.totalorder %s54, %s55
      %p67 = scmp.eq.s32.totalorder %s24, 1
      %p68 = por %p66, %p67
      %p70 = scmp.ne.s32.totalorder %s55, %s69
      %p71 = scmp.eq.s32.totalorder %s24, 0
      %p72 = por %p70, %p71
      %s74 = sadd.s32 %s73, 1
      %p77 = scmp.eq.s32.totalorder %s18, 1
      %p78 = scmp.ne.s32.totalorder %s73, %s75
      %p79 = scmp.eq.s32.totalorder %s18, 0
      %p80 = por %p78, %p79
      %p81 = scmp.ne.s32.totalorder %s73, %s75
      %p82 = scmp.eq.s32.totalorder %s23, 1
      %p83 = por %p81, %p82
      %p84 = scmp.ne.s32.totalorder %s75, %s76
      %p85 = scmp.eq.s32.totalorder %s23, 0
      %p86 = por %p84, %p85
      %p87 = scmp.ne.s32.totalorder %s75, %s76
      %p88 = scmp.eq.s32.totalorder %s24, 1
      %p89 = por %p87, %p88
      %p91 = scmp.ne.s32.totalorder %s76, %s90
      %p92 = scmp.eq.s32.totalorder %s24, 0
      %p93 = por %p91, %p92
      %s95 = sadd.s32 %s94, 1
      %p98 = scmp.eq.s32.totalorder %s18, 1
      %p99 = scmp.ne.s32.totalorder %s94, %s96
      %p100 = scmp.eq.s32.totalorder %s18, 0
      %p101 = por %p99, %p100
      %p102 = scmp.ne.s32.totalorder %s94, %s96
      %p103 = scmp.eq.s32.totalorder %s23, 1
      %p104 = por %p102, %p103
      %p105 = scmp.ne.s32.totalorder %s96, %s97
      %p106 = scmp.eq.s32.totalorder %s23, 0
      %p107 = por %p105, %p106
      %p108 = scmp.ne.s32.totalorder %s96, %s97
      %p109 = scmp.eq.s32.totalorder %s24, 1
      %p110 = por %p108, %p109
      %p112 = scmp.ne.s32.totalorder %s97, %s111
      %p113 = scmp.eq.s32.totalorder %s24, 0
      %p114 = por %p112, %p113
      %s116 = sadd.s32 %s115, 1
      %p119 = scmp.eq.s32.totalorder %s18, 1
      %p120 = scmp.ne.s32.totalorder %s115, %s117
      %p121 = scmp.eq.s32.totalorder %s18, 0
      %p122 = por %p120, %p121
      %p123 = scmp.ne.s32.totalorder %s115, %s117
      %p124 = scmp.eq.s32.totalorder %s23, 1
      %p125 = por %p123, %p124
      %p126 = scmp.ne.s32.totalorder %s117, %s118
      %p127 = scmp.eq.s32.totalorder %s23, 0
      %p128 = por %p126, %p127
      %p129 = scmp.ne.s32.totalorder %s117, %s118
      %p130 = scmp.eq.s32.totalorder %s24, 1
      %p131 = por %p129, %p130
      %p133 = scmp.ne.s32.totalorder %s118, %s132
      %p134 = scmp.eq.s32.totalorder %s24, 0
      %p135 = por %p133, %p134
      %s137 = sadd.s32 %s136, 1
      %p140 = scmp.eq.s32.totalorder %s18, 1
      %p141 = scmp.ne.s32.totalorder %s136, %s138
      %p142 = scmp.eq.s32.totalorder %s18, 0
      %p143 = por %p141, %p142
      %p144 = scmp.ne.s32.totalorder %s136, %s138
      %p145 = scmp.eq.s32.totalorder %s23, 1
      %p146 = por %p144, %p145
      %p147 = scmp.ne.s32.totalorder %s138, %s139
      %p148 = scmp.eq.s32.totalorder %s23, 0
      %p149 = por %p147, %p148
      %p150 = scmp.ne.s32.totalorder %s138, %s139
      %p151 = scmp.eq.s32.totalorder %s24, 1
      %p152 = por %p150, %p151
      %p154 = scmp.ne.s32.totalorder %s139, %s153
      %p155 = scmp.eq.s32.totalorder %s24, 0
      %p156 = por %p154, %p155
      %s158 = sadd.s32 %s157, 1
      %p161 = scmp.eq.s32.totalorder %s18, 1
      %p162 = scmp.ne.s32.totalorder %s157, %s159
      %p163 = scmp.eq.s32.totalorder %s18, 0
      %p164 = por %p162, %p163
      %p165 = scmp.ne.s32.totalorder %s157, %s159
      %p166 = scmp.eq.s32.totalorder %s23, 1
      %p167 = por %p165, %p166
      %p168 = scmp.ne.s32.totalorder %s159, %s160
      %p169 = scmp.eq.s32.totalorder %s23, 0
      %p170 = por %p168, %p169
      %p171 = scmp.ne.s32.totalorder %s159, %s160
      %p172 = scmp.eq.s32.totalorder %s24, 1
      %p173 = por %p171, %p172
      %p175 = scmp.ne.s32.totalorder %s160, %s174
      %p176 = scmp.eq.s32.totalorder %s24, 0
      %p177 = por %p175, %p176
      %p178 = scmp.le.s32.totalorder 1, %s18
      %p179 = scmp.lt.s32.totalorder %s18, 3
      %p180 = pnand %p178, %p179
      %p181 = pneg %p180
      // Predicated region
      $region9: #{tpu_custom_call.1} parent=5 // pred_check
        _
      $region10: #{tpu_custom_call.1} parent=5 // pred_check_branch
        %183 = sbr.rel (%p180) target = $region12
      $region11: #{tpu_custom_call.1} parent=5 // pred_region
        %s184 = ssub.s32 %s18, 1
        // Predicated region
        $region13: #{tpu_custom_call.1} parent=11 // pred_check
          %p185 = pneg %p65
        $region14: #{tpu_custom_call.1} parent=11 // pred_check_branch
          %187 = sbr.rel (%p185) target = $region16
        $region15: #{tpu_custom_call.1} parent=11 // pred_region
          %s189 = ssub.s32 4096, 4096
          %190 = vsyncadd [#allocation8], %s189
          %s191 = sshll.u32 [#allocation7], 4
          %s192 = int_to_ptr.vmem [resolvable:$true] %s191
          %197 = dma.hbm_to_vmem [thread:$0]  %s1, 4096, %s192, [#allocation8], 128, 128, 8
        $region16: #{tpu_custom_call.1} parent=11 // pred_fallthru
          _
        // Predicated region
        $region17: #{tpu_custom_call.1} parent=11 // pred_check
          %p198 = pneg %p86
        $region18: #{tpu_custom_call.1} parent=11 // pred_check_branch
          %200 = sbr.rel (%p198) target = $region20
        $region19: #{tpu_custom_call.1} parent=11 // pred_region
          %s202 = ssub.s32 2048, 2048
          %203 = vsyncadd [#allocation8], %s202
          %s204 = sshll.u32 [#allocation9], 4
          %s205 = int_to_ptr.vmem [resolvable:$true] %s204
          %210 = dma.hbm_to_vmem [thread:$0]  %s2, 2048, %s205, [#allocation8], 128, 128, 8
        $region20: #{tpu_custom_call.1} parent=11 // pred_fallthru
          _
        // Predicated region
        $region21: #{tpu_custom_call.1} parent=11 // pred_check
          %p211 = pneg %p107
        $region22: #{tpu_custom_call.1} parent=11 // pred_check_branch
          %213 = sbr.rel (%p211) target = $region24
        $region23: #{tpu_custom_call.1} parent=11 // pred_region
          _
        $region24: #{tpu_custom_call.1} parent=11 // pred_fallthru
          _
        // Predicated region
        $region25: #{tpu_custom_call.1} parent=11 // pred_check
          %p214 = pneg %p128
        $region26: #{tpu_custom_call.1} parent=11 // pred_check_branch
          %216 = sbr.rel (%p214) target = $region28
        $region27: #{tpu_custom_call.1} parent=11 // pred_region
          %s218 = ssub.s32 2048, 2048
          %219 = vsyncadd [#allocation11], %s218
          %s220 = sshll.u32 [#allocation10], 4
          %s221 = int_to_ptr.vmem [resolvable:$true] %s220
          %226 = dma.hbm_to_vmem [thread:$0]  %s4, 2048, %s221, [#allocation11], 128, 128, 8
        $region28: #{tpu_custom_call.1} parent=11 // pred_fallthru
          _
        // Predicated region
        $region29: #{tpu_custom_call.1} parent=11 // pred_check
          %p227 = pneg %p149
        $region30: #{tpu_custom_call.1} parent=11 // pred_check_branch
          %229 = sbr.rel (%p227) target = $region32
        $region31: #{tpu_custom_call.1} parent=11 // pred_region
          _
        $region32: #{tpu_custom_call.1} parent=11 // pred_fallthru
          _
      $region12: #{tpu_custom_call.1} parent=5 // pred_fallthru
        _
      %p230 = scmp.lt.s32.totalorder %s18, 2
      // Predicated region
      $region33: #{tpu_custom_call.1} parent=5 // pred_check
        %p231 = pneg %p230
      $region34: #{tpu_custom_call.1} parent=5 // pred_check_branch
        %233 = sbr.rel (%p231) target = $region36
      $region35: #{tpu_custom_call.1} parent=5 // pred_region
        // Predicated region
        $region37: #{tpu_custom_call.1} parent=35 // pred_check
          %p234 = pneg %p38
        $region38: #{tpu_custom_call.1} parent=35 // pred_check_branch
          %236 = sbr.rel (%p234) target = $region40
        $region39: #{tpu_custom_call.1} parent=35 // pred_region
          %s237 = sand.u32 %s28, 1
          %s238 = scalar_lea.sflag [#allocation5], %s237
          %s239 = sand.u32 %s28, 1
          %s240 = smul.addr %s239, 256
          %s241 = scalar_lea.vmem [#allocation4], %s240
          %s242 = smul.u32 16, %s18
          %s244 = ssub.s32 4096, 4096
          %245 = vsyncadd %s238, %s244
          %s246 = smul.addr %s242, 2
          %s247 = smul.addr %s246, 128
          %s248 = scalar_lea.hbm %s0, %s247
          %s249 = sshll.u32 %s241, 4
          %s250 = int_to_ptr.vmem [resolvable:$true] %s249
          %255 = dma.hbm_to_vmem [thread:$0]  %s248, 4096, %s250, %s238, 256, 256, 16
        $region40: #{tpu_custom_call.1} parent=35 // pred_fallthru
          _
      $region36: #{tpu_custom_call.1} parent=5 // pred_fallthru
        _
      %p256 = scmp.le.s32.totalorder 1, %s18
      %p257 = scmp.lt.s32.totalorder %s18, 3
      %p258 = pnand %p256, %p257
      %p259 = pneg %p258
      // Predicated region
      $region41: #{tpu_custom_call.1} parent=5 // pred_check
        _
      $region42: #{tpu_custom_call.1} parent=5 // pred_check_branch
        %261 = sbr.rel (%p258) target = $region44
      $region43: #{tpu_custom_call.1} parent=5 // pred_region
        %s262 = ssub.s32 %s18, 1
        %s263 = sand.u32 %s31, 1
        %s264 = scalar_lea.sflag [#allocation5], %s263
        %s265 = sand.u32 %s31, 1
        %s266 = smul.addr %s265, 256
        %s267 = scalar_lea.vmem [#allocation4], %s266
        // Predicated region
        $region45: #{tpu_custom_call.1} parent=43 // pred_check
          %p268 = pneg %p44
        $region46: #{tpu_custom_call.1} parent=43 // pred_check_branch
          %270 = sbr.rel (%p268) target = $region48
        $region47: #{tpu_custom_call.1} parent=43 // pred_region
          %271 = dma.done %s264, 4096
        $region48: #{tpu_custom_call.1} parent=43 // pred_fallthru
          _
        // Predicated region
        $region49: #{tpu_custom_call.1} parent=43 // pred_check
          %p272 = pneg %p65
        $region50: #{tpu_custom_call.1} parent=43 // pred_check_branch
          %274 = sbr.rel (%p272) target = $region52
        $region51: #{tpu_custom_call.1} parent=43 // pred_region
          %275 = dma.done [#allocation8], 4096
        $region52: #{tpu_custom_call.1} parent=43 // pred_fallthru
          _
        // Predicated region
        $region53: #{tpu_custom_call.1} parent=43 // pred_check
          %p276 = pneg %p86
        $region54: #{tpu_custom_call.1} parent=43 // pred_check_branch
          %278 = sbr.rel (%p276) target = $region56
        $region55: #{tpu_custom_call.1} parent=43 // pred_region
          %279 = dma.done [#allocation8], 2048
        $region56: #{tpu_custom_call.1} parent=43 // pred_fallthru
          _
        // Predicated region
        $region57: #{tpu_custom_call.1} parent=43 // pred_check
          %p280 = pneg %p128
        $region58: #{tpu_custom_call.1} parent=43 // pred_check_branch
          %282 = sbr.rel (%p280) target = $region60
        $region59: #{tpu_custom_call.1} parent=43 // pred_region
          %283 = dma.done [#allocation11], 2048
        $region60: #{tpu_custom_call.1} parent=43 // pred_fallthru
          _
        %s284 = sand.u32 %s31, 1
        %s285 = scalar_lea.sflag [#allocation5], %s284
        %s286 = sand.u32 %s31, 1
        %s287 = smul.addr %s286, 256
        %s288 = scalar_lea.vmem [#allocation4], %s287
        %p289 = pneg %p44
        %p290 = pneg %p41
        %p291 = pneg %p65
        %p292 = pneg %p62
        %p293 = pneg %p86
        %p294 = pneg %p83
        %p295 = pneg %p107
        %p296 = pneg %p104
        %p297 = pneg %p128
        %p298 = pneg %p125
        %p299 = pneg %p149
        %p300 = pneg %p146
        %p301 = pneg %p170
        %p302 = pneg %p167
        %s303 = smul.u32 16, %s23
        %s304 = smul.u32 %s23, 128
        %v305 = vld [vmem:[%s267] sm:$0xff]
        %v306 = vld [vmem:[%s267 + $0x8] sm:$0xff]
        %v307 = vld [vmem:[%s267 + $0x10] sm:$0xff]
        %v308 = vld [vmem:[%s267 + $0x18] sm:$0xff]
        %v309 = vld [vmem:[%s267 + $0x20] sm:$0xff]
        %v310 = vld [vmem:[%s267 + $0x28] sm:$0xff]
        %v311 = vld [vmem:[%s267 + $0x30] sm:$0xff]
        %v312 = vld [vmem:[%s267 + $0x38] sm:$0xff]
        %v313 = vld [vmem:[%s267 + $0x40] sm:$0xff]
        %v314 = vld [vmem:[%s267 + $0x48] sm:$0xff]
        %v315 = vld [vmem:[%s267 + $0x50] sm:$0xff]
        %v316 = vld [vmem:[%s267 + $0x58] sm:$0xff]
        %v317 = vld [vmem:[%s267 + $0x60] sm:$0xff]
        %v318 = vld [vmem:[%s267 + $0x68] sm:$0xff]
        %v319 = vld [vmem:[%s267 + $0x70] sm:$0xff]
        %v320 = vld [vmem:[%s267 + $0x78] sm:$0xff]
        %v321 = vld [vmem:[%s267 + $0x80] sm:$0xff]
        %v322 = vld [vmem:[%s267 + $0x88] sm:$0xff]
        %v323 = vld [vmem:[%s267 + $0x90] sm:$0xff]
        %v324 = vld [vmem:[%s267 + $0x98] sm:$0xff]
        %v325 = vld [vmem:[%s267 + $0xa0] sm:$0xff]
        %v326 = vld [vmem:[%s267 + $0xa8] sm:$0xff]
        %v327 = vld [vmem:[%s267 + $0xb0] sm:$0xff]
        %v328 = vld [vmem:[%s267 + $0xb8] sm:$0xff]
        %v329 = vld [vmem:[%s267 + $0xc0] sm:$0xff]
        %v330 = vld [vmem:[%s267 + $0xc8] sm:$0xff]
        %v331 = vld [vmem:[%s267 + $0xd0] sm:$0xff]
        %v332 = vld [vmem:[%s267 + $0xd8] sm:$0xff]
        %v333 = vld [vmem:[%s267 + $0xe0] sm:$0xff]
        %v334 = vld [vmem:[%s267 + $0xe8] sm:$0xff]
        %v335 = vld [vmem:[%s267 + $0xf0] sm:$0xff]
        %v336 = vld [vmem:[%s267 + $0xf8] sm:$0xff]
        %s337 = sshra.s32 %s304, 3
        %s338 = sand.u32 %s304, 7
        %s339 = smul.u32 %s337, 2
        %s340 = smul.addr %s339, 8
        %s341 = scalar_lea.vmem [#allocation2], %s340
        %342 = vst [vmem:[%s341] sm:$0xff] %v305
        %343 = vst [vmem:[%s341 + $0x8] sm:$0xff] %v306
        %344 = vst [vmem:[%s341 + $0x10] sm:$0xff] %v307
        %345 = vst [vmem:[%s341 + $0x18] sm:$0xff] %v308
        %346 = vst [vmem:[%s341 + $0x20] sm:$0xff] %v309
        %347 = vst [vmem:[%s341 + $0x28] sm:$0xff] %v310
        %348 = vst [vmem:[%s341 + $0x30] sm:$0xff] %v311
        %349 = vst [vmem:[%s341 + $0x38] sm:$0xff] %v312
        %350 = vst [vmem:[%s341 + $0x40] sm:$0xff] %v313
        %351 = vst [vmem:[%s341 + $0x48] sm:$0xff] %v314
        %352 = vst [vmem:[%s341 + $0x50] sm:$0xff] %v315
        %353 = vst [vmem:[%s341 + $0x58] sm:$0xff] %v316
        %354 = vst [vmem:[%s341 + $0x60] sm:$0xff] %v317
        %355 = vst [vmem:[%s341 + $0x68] sm:$0xff] %v318
        %356 = vst [vmem:[%s341 + $0x70] sm:$0xff] %v319
        %357 = vst [vmem:[%s341 + $0x78] sm:$0xff] %v320
        %358 = vst [vmem:[%s341 + $0x80] sm:$0xff] %v321
        %359 = vst [vmem:[%s341 + $0x88] sm:$0xff] %v322
        %360 = vst [vmem:[%s341 + $0x90] sm:$0xff] %v323
        %361 = vst [vmem:[%s341 + $0x98] sm:$0xff] %v324
        %362 = vst [vmem:[%s341 + $0xa0] sm:$0xff] %v325
        %363 = vst [vmem:[%s341 + $0xa8] sm:$0xff] %v326
        %364 = vst [vmem:[%s341 + $0xb0] sm:$0xff] %v327
        %365 = vst [vmem:[%s341 + $0xb8] sm:$0xff] %v328
        %366 = vst [vmem:[%s341 + $0xc0] sm:$0xff] %v329
        %367 = vst [vmem:[%s341 + $0xc8] sm:$0xff] %v330
        %368 = vst [vmem:[%s341 + $0xd0] sm:$0xff] %v331
        %369 = vst [vmem:[%s341 + $0xd8] sm:$0xff] %v332
        %370 = vst [vmem:[%s341 + $0xe0] sm:$0xff] %v333
        %371 = vst [vmem:[%s341 + $0xe8] sm:$0xff] %v334
        %372 = vst [vmem:[%s341 + $0xf0] sm:$0xff] %v335
        %373 = vst [vmem:[%s341 + $0xf8] sm:$0xff] %v336
        %v374 = vld [vmem:[#allocation7] sm:$0xff]
        %v375 = vld [vmem:[#allocation7 + $0x8] sm:$0xff]
        %v376 = vld [vmem:[#allocation7 + $0x10] sm:$0xff]
        %v377 = vld [vmem:[#allocation7 + $0x18] sm:$0xff]
        %v378 = vld [vmem:[#allocation7 + $0x20] sm:$0xff]
        %v379 = vld [vmem:[#allocation7 + $0x28] sm:$0xff]
        %v380 = vld [vmem:[#allocation7 + $0x30] sm:$0xff]
        %v381 = vld [vmem:[#allocation7 + $0x38] sm:$0xff]
        %v382 = vld [vmem:[#allocation7 + $0x40] sm:$0xff]
        %v383 = vld [vmem:[#allocation7 + $0x48] sm:$0xff]
        %v384 = vld [vmem:[#allocation7 + $0x50] sm:$0xff]
        %v385 = vld [vmem:[#allocation7 + $0x58] sm:$0xff]
        %v386 = vld [vmem:[#allocation7 + $0x60] sm:$0xff]
        %v387 = vld [vmem:[#allocation7 + $0x68] sm:$0xff]
        %v388 = vld [vmem:[#allocation7 + $0x70] sm:$0xff]
        %v389 = vld [vmem:[#allocation7 + $0x78] sm:$0xff]
        %v390 = vld [vmem:[#allocation7 + $0x80] sm:$0xff]
        %v391 = vld [vmem:[#allocation7 + $0x88] sm:$0xff]
        %v392 = vld [vmem:[#allocation7 + $0x90] sm:$0xff]
        %v393 = vld [vmem:[#allocation7 + $0x98] sm:$0xff]
        %v394 = vld [vmem:[#allocation7 + $0xa0] sm:$0xff]
        %v395 = vld [vmem:[#allocation7 + $0xa8] sm:$0xff]
        %v396 = vld [vmem:[#allocation7 + $0xb0] sm:$0xff]
        %v397 = vld [vmem:[#allocation7 + $0xb8] sm:$0xff]
        %v398 = vld [vmem:[#allocation7 + $0xc0] sm:$0xff]
        %v399 = vld [vmem:[#allocation7 + $0xc8] sm:$0xff]
        %v400 = vld [vmem:[#allocation7 + $0xd0] sm:$0xff]
        %v401 = vld [vmem:[#allocation7 + $0xd8] sm:$0xff]
        %v402 = vld [vmem:[#allocation7 + $0xe0] sm:$0xff]
        %v403 = vld [vmem:[#allocation7 + $0xe8] sm:$0xff]
        %v404 = vld [vmem:[#allocation7 + $0xf0] sm:$0xff]
        %v405 = vld [vmem:[#allocation7 + $0xf8] sm:$0xff]
        %406 = vmatprep.subr.mxu0 0.0
        %407 = vmatpush1.msra.mxu0 %v374
        %408 = vmatprep.subr.mxu0 0.0
        %409 = vmatpush1.msra.mxu0 %v375
        %410 = vmatprep.subr.mxu0 0.0
        %411 = vmatpush1.msra.mxu0 %v376
        %412 = vmatprep.subr.mxu0 0.0
        %413 = vmatpush1.msra.mxu0 %v377
        %414 = vmatprep.subr.mxu0 0.0
        %415 = vmatpush1.msra.mxu0 %v378
        %416 = vmatprep.subr.mxu0 0.0
        %417 = vmatpush1.msra.mxu0 %v379
        %418 = vmatprep.subr.mxu0 0.0
        %419 = vmatpush1.msra.mxu0 %v380
        %420 = vmatprep.subr.mxu0 0.0
        %421 = vmatpush1.msra.mxu0 %v381
        %422 = vmatprep.subr.mxu0 0.0
        %423 = vmatpush1.msra.mxu0 %v382
        %424 = vmatprep.subr.mxu0 0.0
        %425 = vmatpush1.msra.mxu0 %v383
        %426 = vmatprep.subr.mxu0 0.0
        %427 = vmatpush1.msra.mxu0 %v384
        %428 = vmatprep.subr.mxu0 0.0
        %429 = vmatpush1.msra.mxu0 %v385
        %430 = vmatprep.subr.mxu0 0.0
        %431 = vmatpush1.msra.mxu0 %v386
        %432 = vmatprep.subr.mxu0 0.0
        %433 = vmatpush1.msra.mxu0 %v387
        %434 = vmatprep.subr.mxu0 0.0
        %435 = vmatpush1.msra.mxu0 %v388
        %436 = vmatprep.subr.mxu0 0.0
        %437 = vmatpush1.msra.mxu0 %v389
        %438 = vmatprep.subr.mxu0 0.0
        %439 = vmatpush1.msra.mxu0 %v390
        %440 = vmatprep.subr.mxu0 0.0
        %441 = vmatpush1.msra.mxu0 %v391
        %442 = vmatprep.subr.mxu0 0.0
        %443 = vmatpush1.msra.mxu0 %v392
        %444 = vmatprep.subr.mxu0 0.0
        %445 = vmatpush1.msra.mxu0 %v393
        %446 = vmatprep.subr.mxu0 0.0
        %447 = vmatpush1.msra.mxu0 %v394
        %448 = vmatprep.subr.mxu0 0.0
        %449 = vmatpush1.msra.mxu0 %v395
        %450 = vmatprep.subr.mxu0 0.0
        %451 = vmatpush1.msra.mxu0 %v396
        %452 = vmatprep.subr.mxu0 0.0
        %453 = vmatpush1.msra.mxu0 %v397
        %454 = vmatprep.subr.mxu0 0.0
        %455 = vmatpush1.msra.mxu0 %v398
        %456 = vmatprep.subr.mxu0 0.0
        %457 = vmatpush1.msra.mxu0 %v399
        %458 = vmatprep.subr.mxu0 0.0
        %459 = vmatpush1.msra.mxu0 %v400
        %460 = vmatprep.subr.mxu0 0.0
        %461 = vmatpush1.msra.mxu0 %v401
        %462 = vmatprep.subr.mxu0 0.0
        %463 = vmatpush1.msra.mxu0 %v402
        %464 = vmatprep.subr.mxu0 0.0
        %465 = vmatpush1.msra.mxu0 %v403
        %466 = vmatprep.subr.mxu0 0.0
        %467 = vmatpush1.msra.mxu0 %v404
        %468 = vmatprep.subr.mxu0 0.0
        %469 = vmatpush1.msra.mxu0 %v405
        %470 = vmatprep.mubr.f32.mxu0 %v306
        %471 = vmatmul.mubr.f32.gmra.mrb[0].mxu0 %v305
        %v472 = vpop.f32.mrb[0].mxu0
        %v473 = vadd.f32 0.0, %v472
        %v474 = vpop.f32.mrb[0].mxu0
        %475 = vmatprep.mubr.f32.mxu0 %v308
        %476 = vmatmul.mubr.f32.gmra.mrb[0].mxu0 %v307
        %v477 = vpop.f32.mrb[0].mxu0
        %v478 = vadd.f32 0.0, %v477
        %v479 = vpop.f32.mrb[0].mxu0
        %480 = vmatprep.mubr.f32.mxu0 %v310
        %481 = vmatmul.mubr.f32.gmra.mrb[0].mxu0 %v309
        %v482 = vpop.f32.mrb[0].mxu0
        %v483 = vadd.f32 0.0, %v482
        %v484 = vpop.f32.mrb[0].mxu0
        %485 = vmatprep.mubr.f32.mxu0 %v312
        %486 = vmatmul.mubr.f32.gmra.mrb[0].mxu0 %v311
        %v487 = vpop.f32.mrb[0].mxu0
        %v488 = vadd.f32 0.0, %v487
        %v489 = vpop.f32.mrb[0].mxu0
        %490 = vmatprep.mubr.f32.mxu0 %v314
        %491 = vmatmul.mubr.f32.gmra.mrb[0].mxu0 %v313
        %v492 = vpop.f32.mrb[0].mxu0
        %v493 = vadd.f32 0.0, %v492
        %v494 = vpop.f32.mrb[0].mxu0
        %495 = vmatprep.mubr.f32.mxu0 %v316
        %496 = vmatmul.mubr.f32.gmra.mrb[0].mxu0 %v315
        %v497 = vpop.f32.mrb[0].mxu0
        %v498 = vadd.f32 0.0, %v497
        %v499 = vpop.f32.mrb[0].mxu0
        %500 = vmatprep.mubr.f32.mxu0 %v318
        %501 = vmatmul.mubr.f32.gmra.mrb[0].mxu0 %v317
        %v502 = vpop.f32.mrb[0].mxu0
        %v503 = vadd.f32 0.0, %v502
        %v504 = vpop.f32.mrb[0].mxu0
        %505 = vmatprep.mubr.f32.mxu0 %v320
        %506 = vmatmul.mubr.f32.gmra.mrb[0].mxu0 %v319
        %v507 = vpop.f32.mrb[0].mxu0
        %v508 = vadd.f32 0.0, %v507
        %v509 = vpop.f32.mrb[0].mxu0
        %510 = vmatprep.mubr.f32.mxu0 %v322
        %511 = vmatmul.mubr.f32.gmra.mrb[0].mxu0 %v321
        %v512 = vpop.f32.mrb[0].mxu0
        %v513 = vadd.f32 0.0, %v512
        %v514 = vpop.f32.mrb[0].mxu0
        %515 = vmatprep.mubr.f32.mxu0 %v324
        %516 = vmatmul.mubr.f32.gmra.mrb[0].mxu0 %v323
        %v517 = vpop.f32.mrb[0].mxu0
        %v518 = vadd.f32 0.0, %v517
        %v519 = vpop.f32.mrb[0].mxu0
        %520 = vmatprep.mubr.f32.mxu0 %v326
        %521 = vmatmul.mubr.f32.gmra.mrb[0].mxu0 %v325
        %v522 = vpop.f32.mrb[0].mxu0
        %v523 = vadd.f32 0.0, %v522
        %v524 = vpop.f32.mrb[0].mxu0
        %525 = vmatprep.mubr.f32.mxu0 %v328
        %526 = vmatmul.mubr.f32.gmra.mrb[0].mxu0 %v327
        %v527 = vpop.f32.mrb[0].mxu0
        %v528 = vadd.f32 0.0, %v527
        %v529 = vpop.f32.mrb[0].mxu0
        %530 = vmatprep.mubr.f32.mxu0 %v330
        %531 = vmatmul.mubr.f32.gmra.mrb[0].mxu0 %v329
        %v532 = vpop.f32.mrb[0].mxu0
        %v533 = vadd.f32 0.0, %v532
        %v534 = vpop.f32.mrb[0].mxu0
        %535 = vmatprep.mubr.f32.mxu0 %v332
        %536 = vmatmul.mubr.f32.gmra.mrb[0].mxu0 %v331
        %v537 = vpop.f32.mrb[0].mxu0
        %v538 = vadd.f32 0.0, %v537
        %v539 = vpop.f32.mrb[0].mxu0
        %540 = vmatprep.mubr.f32.mxu0 %v334
        %541 = vmatmul.mubr.f32.gmra.mrb[0].mxu0 %v333
        %v542 = vpop.f32.mrb[0].mxu0
        %v543 = vadd.f32 0.0, %v542
        %v544 = vpop.f32.mrb[0].mxu0
        %545 = vmatprep.mubr.f32.mxu0 %v336
        %546 = vmatmul.mubr.f32.gmra.mrb[0].mxu0 %v335
        %v547 = vpop.f32.mrb[0].mxu0
        %v548 = vadd.f32 0.0, %v547
        %v549 = vpop.f32.mrb[0].mxu0
        %550 = vdwg.mxu0
        %s551 = scalar_lea.vmem [#allocation3], %s304
        %552 = vst [vmem:[%s551] sm:$0xff] %v473
        %553 = vst [vmem:[%s551 + $0x8] sm:$0xff] %v478
        %554 = vst [vmem:[%s551 + $0x10] sm:$0xff] %v483
        %555 = vst [vmem:[%s551 + $0x18] sm:$0xff] %v488
        %556 = vst [vmem:[%s551 + $0x20] sm:$0xff] %v493
        %557 = vst [vmem:[%s551 + $0x28] sm:$0xff] %v498
        %558 = vst [vmem:[%s551 + $0x30] sm:$0xff] %v503
        %559 = vst [vmem:[%s551 + $0x38] sm:$0xff] %v508
        %560 = vst [vmem:[%s551 + $0x40] sm:$0xff] %v513
        %561 = vst [vmem:[%s551 + $0x48] sm:$0xff] %v518
        %562 = vst [vmem:[%s551 + $0x50] sm:$0xff] %v523
        %563 = vst [vmem:[%s551 + $0x58] sm:$0xff] %v528
        %564 = vst [vmem:[%s551 + $0x60] sm:$0xff] %v533
        %565 = vst [vmem:[%s551 + $0x68] sm:$0xff] %v538
        %566 = vst [vmem:[%s551 + $0x70] sm:$0xff] %v543
        %567 = vst [vmem:[%s551 + $0x78] sm:$0xff] %v548
        %p568 = scmp.eq.s32.totalorder %s23, 1
        // Predicated region
        $region61: #{tpu_custom_call.1} parent=43 // pred_check
          %p569 = pneg %p568
        $region62: #{tpu_custom_call.1} parent=43 // pred_check_branch
          %571 = sbr.rel (%p569) target = $region64
        $region63: #{tpu_custom_call.1} parent=43 // pred_region
          %v572 = vld [vmem:[#allocation2] sm:$0xff]
          %v573 = vld [vmem:[#allocation2 + $0x8] sm:$0xff]
          %v574 = vld [vmem:[#allocation2 + $0x10] sm:$0xff]
          %v575 = vld [vmem:[#allocation2 + $0x18] sm:$0xff]
          %v576 = vld [vmem:[#allocation2 + $0x20] sm:$0xff]
          %v577 = vld [vmem:[#allocation2 + $0x28] sm:$0xff]
          %v578 = vld [vmem:[#allocation2 + $0x30] sm:$0xff]
          %v579 = vld [vmem:[#allocation2 + $0x38] sm:$0xff]
          %v580 = vld [vmem:[#allocation2 + $0x40] sm:$0xff]
          %v581 = vld [vmem:[#allocation2 + $0x48] sm:$0xff]
          %v582 = vld [vmem:[#allocation2 + $0x50] sm:$0xff]
          %v583 = vld [vmem:[#allocation2 + $0x58] sm:$0xff]
          %v584 = vld [vmem:[#allocation2 + $0x60] sm:$0xff]
          %v585 = vld [vmem:[#allocation2 + $0x68] sm:$0xff]
          %v586 = vld [vmem:[#allocation2 + $0x70] sm:$0xff]
          %v587 = vld [vmem:[#allocation2 + $0x78] sm:$0xff]
          %v588 = vld [vmem:[#allocation2 + $0x80] sm:$0xff]
          %v589 = vld [vmem:[#allocation2 + $0x88] sm:$0xff]
          %v590 = vld [vmem:[#allocation2 + $0x90] sm:$0xff]
          %v591 = vld [vmem:[#allocation2 + $0x98] sm:$0xff]
          %v592 = vld [vmem:[#allocation2 + $0xa0] sm:$0xff]
          %v593 = vld [vmem:[#allocation2 + $0xa8] sm:$0xff]
          %v594 = vld [vmem:[#allocation2 + $0xb0] sm:$0xff]
          %v595 = vld [vmem:[#allocation2 + $0xb8] sm:$0xff]
          %v596 = vld [vmem:[#allocation2 + $0xc0] sm:$0xff]
          %v597 = vld [vmem:[#allocation2 + $0xc8] sm:$0xff]
          %v598 = vld [vmem:[#allocation2 + $0xd0] sm:$0xff]
          %v599 = vld [vmem:[#allocation2 + $0xd8] sm:$0xff]
          %v600 = vld [vmem:[#allocation2 + $0xe0] sm:$0xff]
          %v601 = vld [vmem:[#allocation2 + $0xe8] sm:$0xff]
          %v602 = vld [vmem:[#allocation2 + $0xf0] sm:$0xff]
          %v603 = vld [vmem:[#allocation2 + $0xf8] sm:$0xff]
          %v604 = vld [vmem:[#allocation2 + $0x100] sm:$0xff]
          %v605 = vld [vmem:[#allocation2 + $0x108] sm:$0xff]
          %v606 = vld [vmem:[#allocation2 + $0x110] sm:$0xff]
          %v607 = vld [vmem:[#allocation2 + $0x118] sm:$0xff]
          %v608 = vld [vmem:[#allocation2 + $0x120] sm:$0xff]
          %v609 = vld [vmem:[#allocation2 + $0x128] sm:$0xff]
          %v610 = vld [vmem:[#allocation2 + $0x130] sm:$0xff]
          %v611 = vld [vmem:[#allocation2 + $0x138] sm:$0xff]
          %v612 = vld [vmem:[#allocation2 + $0x140] sm:$0xff]
          %v613 = vld [vmem:[#allocation2 + $0x148] sm:$0xff]
          %v614 = vld [vmem:[#allocation2 + $0x150] sm:$0xff]
          %v615 = vld [vmem:[#allocation2 + $0x158] sm:$0xff]
          %v616 = vld [vmem:[#allocation2 + $0x160] sm:$0xff]
          %v617 = vld [vmem:[#allocation2 + $0x168] sm:$0xff]
          %v618 = vld [vmem:[#allocation2 + $0x170] sm:$0xff]
          %v619 = vld [vmem:[#allocation2 + $0x178] sm:$0xff]
          %v620 = vld [vmem:[#allocation2 + $0x180] sm:$0xff]
          %v621 = vld [vmem:[#allocation2 + $0x188] sm:$0xff]
          %v622 = vld [vmem:[#allocation2 + $0x190] sm:$0xff]
          %v623 = vld [vmem:[#allocation2 + $0x198] sm:$0xff]
          %v624 = vld [vmem:[#allocation2 + $0x1a0] sm:$0xff]
          %v625 = vld [vmem:[#allocation2 + $0x1a8] sm:$0xff]
          %v626 = vld [vmem:[#allocation2 + $0x1b0] sm:$0xff]
          %v627 = vld [vmem:[#allocation2 + $0x1b8] sm:$0xff]
          %v628 = vld [vmem:[#allocation2 + $0x1c0] sm:$0xff]
          %v629 = vld [vmem:[#allocation2 + $0x1c8] sm:$0xff]
          %v630 = vld [vmem:[#allocation2 + $0x1d0] sm:$0xff]
          %v631 = vld [vmem:[#allocation2 + $0x1d8] sm:$0xff]
          %v632 = vld [vmem:[#allocation2 + $0x1e0] sm:$0xff]
          %v633 = vld [vmem:[#allocation2 + $0x1e8] sm:$0xff]
          %v634 = vld [vmem:[#allocation2 + $0x1f0] sm:$0xff]
          %v635 = vld [vmem:[#allocation2 + $0x1f8] sm:$0xff]
          %v636 = vld [vmem:[#allocation9] sm:$0xff]
          %v637 = vld [vmem:[#allocation9 + $0x8] sm:$0xff]
          %v638 = vld [vmem:[#allocation9 + $0x10] sm:$0xff]
          %v639 = vld [vmem:[#allocation9 + $0x18] sm:$0xff]
          %v640 = vld [vmem:[#allocation9 + $0x20] sm:$0xff]
          %v641 = vld [vmem:[#allocation9 + $0x28] sm:$0xff]
          %v642 = vld [vmem:[#allocation9 + $0x30] sm:$0xff]
          %v643 = vld [vmem:[#allocation9 + $0x38] sm:$0xff]
          %v644 = vld [vmem:[#allocation9 + $0x40] sm:$0xff]
          %v645 = vld [vmem:[#allocation9 + $0x48] sm:$0xff]
          %v646 = vld [vmem:[#allocation9 + $0x50] sm:$0xff]
          %v647 = vld [vmem:[#allocation9 + $0x58] sm:$0xff]
          %v648 = vld [vmem:[#allocation9 + $0x60] sm:$0xff]
          %v649 = vld [vmem:[#allocation9 + $0x68] sm:$0xff]
          %v650 = vld [vmem:[#allocation9 + $0x70] sm:$0xff]
          %v651 = vld [vmem:[#allocation9 + $0x78] sm:$0xff]
          %v652 = vld [vmem:[%s3] sm:$0x1]
          %v653 = vld [vmem:[#allocation3] sm:$0xff]
          %v654 = vld [vmem:[#allocation3 + $0x8] sm:$0xff]
          %v655 = vld [vmem:[#allocation3 + $0x10] sm:$0xff]
          %v656 = vld [vmem:[#allocation3 + $0x18] sm:$0xff]
          %v657 = vld [vmem:[#allocation3 + $0x20] sm:$0xff]
          %v658 = vld [vmem:[#allocation3 + $0x28] sm:$0xff]
          %v659 = vld [vmem:[#allocation3 + $0x30] sm:$0xff]
          %v660 = vld [vmem:[#allocation3 + $0x38] sm:$0xff]
          %v661 = vld [vmem:[#allocation3 + $0x40] sm:$0xff]
          %v662 = vld [vmem:[#allocation3 + $0x48] sm:$0xff]
          %v663 = vld [vmem:[#allocation3 + $0x50] sm:$0xff]
          %v664 = vld [vmem:[#allocation3 + $0x58] sm:$0xff]
          %v665 = vld [vmem:[#allocation3 + $0x60] sm:$0xff]
          %v666 = vld [vmem:[#allocation3 + $0x68] sm:$0xff]
          %v667 = vld [vmem:[#allocation3 + $0x70] sm:$0xff]
          %v668 = vld [vmem:[#allocation3 + $0x78] sm:$0xff]
          %v669 = vld [vmem:[#allocation3 + $0x80] sm:$0xff]
          %v670 = vld [vmem:[#allocation3 + $0x88] sm:$0xff]
          %v671 = vld [vmem:[#allocation3 + $0x90] sm:$0xff]
          %v672 = vld [vmem:[#allocation3 + $0x98] sm:$0xff]
          %v673 = vld [vmem:[#allocation3 + $0xa0] sm:$0xff]
          %v674 = vld [vmem:[#allocation3 + $0xa8] sm:$0xff]
          %v675 = vld [vmem:[#allocation3 + $0xb0] sm:$0xff]
          %v676 = vld [vmem:[#allocation3 + $0xb8] sm:$0xff]
          %v677 = vld [vmem:[#allocation3 + $0xc0] sm:$0xff]
          %v678 = vld [vmem:[#allocation3 + $0xc8] sm:$0xff]
          %v679 = vld [vmem:[#allocation3 + $0xd0] sm:$0xff]
          %v680 = vld [vmem:[#allocation3 + $0xd8] sm:$0xff]
          %v681 = vld [vmem:[#allocation3 + $0xe0] sm:$0xff]
          %v682 = vld [vmem:[#allocation3 + $0xe8] sm:$0xff]
          %v683 = vld [vmem:[#allocation3 + $0xf0] sm:$0xff]
          %v684 = vld [vmem:[#allocation3 + $0xf8] sm:$0xff]
          %685 = vmatprep.subr.mxu0 0.0
          %686 = vmatpush1.msra.mxu0 %v653
          %687 = vmatprep.subr.mxu0 0.0
          %688 = vmatpush1.msra.mxu0 %v654
          %689 = vmatprep.subr.mxu0 0.0
          %690 = vmatpush1.msra.mxu0 %v655
          %691 = vmatprep.subr.mxu0 0.0
          %692 = vmatpush1.msra.mxu0 %v656
          %693 = vmatprep.subr.mxu0 0.0
          %694 = vmatpush1.msra.mxu0 %v657
          %695 = vmatprep.subr.mxu0 0.0
          %696 = vmatpush1.msra.mxu0 %v658
          %697 = vmatprep.subr.mxu0 0.0
          %698 = vmatpush1.msra.mxu0 %v659
          %699 = vmatprep.subr.mxu0 0.0
          %700 = vmatpush1.msra.mxu0 %v660
          %701 = vmatprep.subr.mxu0 0.0
          %702 = vmatpush1.msra.mxu0 %v661
          %703 = vmatprep.subr.mxu0 0.0
          %704 = vmatpush1.msra.mxu0 %v662
          %705 = vmatprep.subr.mxu0 0.0
          %706 = vmatpush1.msra.mxu0 %v663
          %707 = vmatprep.subr.mxu0 0.0
          %708 = vmatpush1.msra.mxu0 %v664
          %709 = vmatprep.subr.mxu0 0.0
          %710 = vmatpush1.msra.mxu0 %v665
          %711 = vmatprep.subr.mxu0 0.0
          %712 = vmatpush1.msra.mxu0 %v666
          %713 = vmatprep.subr.mxu0 0.0
          %714 = vmatpush1.msra.mxu0 %v667
          %715 = vmatprep.subr.mxu0 0.0
          %716 = vmatpush1.msra.mxu0 %v668
          %717 = vmatprep.subr.mxu0 0.0
          %718 = vmatpush1.msra.mxu0 %v669
          %719 = vmatprep.subr.mxu0 0.0
          %720 = vmatpush1.msra.mxu0 %v670
          %721 = vmatprep.subr.mxu0 0.0
          %722 = vmatpush1.msra.mxu0 %v671
          %723 = vmatprep.subr.mxu0 0.0
          %724 = vmatpush1.msra.mxu0 %v672
          %725 = vmatprep.subr.mxu0 0.0
          %726 = vmatpush1.msra.mxu0 %v673
          %727 = vmatprep.subr.mxu0 0.0
          %728 = vmatpush1.msra.mxu0 %v674
          %729 = vmatprep.subr.mxu0 0.0
          %730 = vmatpush1.msra.mxu0 %v675
          %731 = vmatprep.subr.mxu0 0.0
          %732 = vmatpush1.msra.mxu0 %v676
          %733 = vmatprep.subr.mxu0 0.0
          %734 = vmatpush1.msra.mxu0 %v677
          %735 = vmatprep.subr.mxu0 0.0
          %736 = vmatpush1.msra.mxu0 %v678
          %737 = vmatprep.subr.mxu0 0.0
          %738 = vmatpush1.msra.mxu0 %v679
          %739 = vmatprep.subr.mxu0 0.0
          %740 = vmatpush1.msra.mxu0 %v680
          %741 = vmatprep.subr.mxu0 0.0
          %742 = vmatpush1.msra.mxu0 %v681
          %743 = vmatprep.subr.mxu0 0.0
          %744 = vmatpush1.msra.mxu0 %v682
          %745 = vmatprep.subr.mxu0 0.0
          %746 = vmatpush1.msra.mxu0 %v683
          %747 = vmatprep.subr.mxu0 0.0
          %748 = vmatpush1.msra.mxu0 %v684
          %749 = vmatprep.mubr.f32.mxu0 %v573
          %750 = vmatmul.mubr.f32.gmra.mrb[0].mxu0 %v572
          %v751 = vpop.f32.mrb[0].mxu0
          %v752 = vadd.f32 0.0, %v751
          %v753 = vpop.f32.mrb[0].mxu0
          %754 = vmatprep.mubr.f32.mxu0 %v575
          %755 = vmatmul.mubr.f32.gmra.mrb[0].mxu0 %v574
          %v756 = vpop.f32.mrb[0].mxu0
          %v757 = vadd.f32 0.0, %v756
          %v758 = vpop.f32.mrb[0].mxu0
          %759 = vmatprep.mubr.f32.mxu0 %v577
          %760 = vmatmul.mubr.f32.gmra.mrb[0].mxu0 %v576
          %v761 = vpop.f32.mrb[0].mxu0
          %v762 = vadd.f32 0.0, %v761
          %v763 = vpop.f32.mrb[0].mxu0
          %764 = vmatprep.mubr.f32.mxu0 %v579
          %765 = vmatmul.mubr.f32.gmra.mrb[0].mxu0 %v578
          %v766 = vpop.f32.mrb[0].mxu0
          %v767 = vadd.f32 0.0, %v766
          %v768 = vpop.f32.mrb[0].mxu0
          %769 = vmatprep.mubr.f32.mxu0 %v581
          %770 = vmatmul.mubr.f32.gmra.mrb[0].mxu0 %v580
          %v771 = vpop.f32.mrb[0].mxu0
          %v772 = vadd.f32 0.0, %v771
          %v773 = vpop.f32.mrb[0].mxu0
          %774 = vmatprep.mubr.f32.mxu0 %v583
          %775 = vmatmul.mubr.f32.gmra.mrb[0].mxu0 %v582
          %v776 = vpop.f32.mrb[0].mxu0
          %v777 = vadd.f32 0.0, %v776
          %v778 = vpop.f32.mrb[0].mxu0
          %779 = vmatprep.mubr.f32.mxu0 %v585
          %780 = vmatmul.mubr.f32.gmra.mrb[0].mxu0 %v584
          %v781 = vpop.f32.mrb[0].mxu0
          %v782 = vadd.f32 0.0, %v781
          %v783 = vpop.f32.mrb[0].mxu0
          %784 = vmatprep.mubr.f32.mxu0 %v587
          %785 = vmatmul.mubr.f32.gmra.mrb[0].mxu0 %v586
          %v786 = vpop.f32.mrb[0].mxu0
          %v787 = vadd.f32 0.0, %v786
          %v788 = vpop.f32.mrb[0].mxu0
          %789 = vmatprep.mubr.f32.mxu0 %v589
          %790 = vmatmul.mubr.f32.gmra.mrb[0].mxu0 %v588
          %v791 = vpop.f32.mrb[0].mxu0
          %v792 = vadd.f32 0.0, %v791
          %v793 = vpop.f32.mrb[0].mxu0
          %794 = vmatprep.mubr.f32.mxu0 %v591
          %795 = vmatmul.mubr.f32.gmra.mrb[0].mxu0 %v590
          %v796 = vpop.f32.mrb[0].mxu0
          %v797 = vadd.f32 0.0, %v796
          %v798 = vpop.f32.mrb[0].mxu0
          %799 = vmatprep.mubr.f32.mxu0 %v593
          %800 = vmatmul.mubr.f32.gmra.mrb[0].mxu0 %v592
          %v801 = vpop.f32.mrb[0].mxu0
          %v802 = vadd.f32 0.0, %v801
          %v803 = vpop.f32.mrb[0].mxu0
          %804 = vmatprep.mubr.f32.mxu0 %v595
          %805 = vmatmul.mubr.f32.gmra.mrb[0].mxu0 %v594
          %v806 = vpop.f32.mrb[0].mxu0
          %v807 = vadd.f32 0.0, %v806
          %v808 = vpop.f32.mrb[0].mxu0
          %809 = vmatprep.mubr.f32.mxu0 %v597
          %810 = vmatmul.mubr.f32.gmra.mrb[0].mxu0 %v596
          %v811 = vpop.f32.mrb[0].mxu0
          %v812 = vadd.f32 0.0, %v811
          %v813 = vpop.f32.mrb[0].mxu0
          %814 = vmatprep.mubr.f32.mxu0 %v599
          %815 = vmatmul.mubr.f32.gmra.mrb[0].mxu0 %v598
          %v816 = vpop.f32.mrb[0].mxu0
          %v817 = vadd.f32 0.0, %v816
          %v818 = vpop.f32.mrb[0].mxu0
          %819 = vmatprep.mubr.f32.mxu0 %v601
          %820 = vmatmul.mubr.f32.gmra.mrb[0].mxu0 %v600
          %v821 = vpop.f32.mrb[0].mxu0
          %v822 = vadd.f32 0.0, %v821
          %v823 = vpop.f32.mrb[0].mxu0
          %824 = vmatprep.mubr.f32.mxu0 %v603
          %825 = vmatmul.mubr.f32.gmra.mrb[0].mxu0 %v602
          %v826 = vpop.f32.mrb[0].mxu0
          %v827 = vadd.f32 0.0, %v826
          %v828 = vpop.f32.mrb[0].mxu0
          %829 = vmatprep.mubr.f32.mxu0 %v605
          %830 = vmatmul.mubr.f32.gmra.mrb[0].mxu0 %v604
          %v831 = vpop.f32.mrb[0].mxu0
          %v832 = vadd.f32 0.0, %v831
          %v833 = vpop.f32.mrb[0].mxu0
          %834 = vmatprep.mubr.f32.mxu0 %v607
          %835 = vmatmul.mubr.f32.gmra.mrb[0].mxu0 %v606
          %v836 = vpop.f32.mrb[0].mxu0
          %v837 = vadd.f32 0.0, %v836
          %v838 = vpop.f32.mrb[0].mxu0
          %839 = vmatprep.mubr.f32.mxu0 %v609
          %840 = vmatmul.mubr.f32.gmra.mrb[0].mxu0 %v608
          %v841 = vpop.f32.mrb[0].mxu0
          %v842 = vadd.f32 0.0, %v841
          %v843 = vpop.f32.mrb[0].mxu0
          %844 = vmatprep.mubr.f32.mxu0 %v611
          %845 = vmatmul.mubr.f32.gmra.mrb[0].mxu0 %v610
          %v846 = vpop.f32.mrb[0].mxu0
          %v847 = vadd.f32 0.0, %v846
          %v848 = vpop.f32.mrb[0].mxu0
          %849 = vmatprep.mubr.f32.mxu0 %v613
          %850 = vmatmul.mubr.f32.gmra.mrb[0].mxu0 %v612
          %v851 = vpop.f32.mrb[0].mxu0
          %v852 = vadd.f32 0.0, %v851
          %v853 = vpop.f32.mrb[0].mxu0
          %854 = vmatprep.mubr.f32.mxu0 %v615
          %855 = vmatmul.mubr.f32.gmra.mrb[0].mxu0 %v614
          %v856 = vpop.f32.mrb[0].mxu0
          %v857 = vadd.f32 0.0, %v856
          %v858 = vpop.f32.mrb[0].mxu0
          %859 = vmatprep.mubr.f32.mxu0 %v617
          %860 = vmatmul.mubr.f32.gmra.mrb[0].mxu0 %v616
          %v861 = vpop.f32.mrb[0].mxu0
          %v862 = vadd.f32 0.0, %v861
          %v863 = vpop.f32.mrb[0].mxu0
          %864 = vmatprep.mubr.f32.mxu0 %v619
          %865 = vmatmul.mubr.f32.gmra.mrb[0].mxu0 %v618
          %v866 = vpop.f32.mrb[0].mxu0
          %v867 = vadd.f32 0.0, %v866
          %v868 = vpop.f32.mrb[0].mxu0
          %869 = vmatprep.mubr.f32.mxu0 %v621
          %870 = vmatmul.mubr.f32.gmra.mrb[0].mxu0 %v620
          %v871 = vpop.f32.mrb[0].mxu0
          %v872 = vadd.f32 0.0, %v871
          %v873 = vpop.f32.mrb[0].mxu0
          %874 = vmatprep.mubr.f32.mxu0 %v623
          %875 = vmatmul.mubr.f32.gmra.mrb[0].mxu0 %v622
          %v876 = vpop.f32.mrb[0].mxu0
          %v877 = vadd.f32 0.0, %v876
          %v878 = vpop.f32.mrb[0].mxu0
          %879 = vmatprep.mubr.f32.mxu0 %v625
          %880 = vmatmul.mubr.f32.gmra.mrb[0].mxu0 %v624
          %v881 = vpop.f32.mrb[0].mxu0
          %v882 = vadd.f32 0.0, %v881
          %v883 = vpop.f32.mrb[0].mxu0
          %884 = vmatprep.mubr.f32.mxu0 %v627
          %885 = vmatmul.mubr.f32.gmra.mrb[0].mxu0 %v626
          %v886 = vpop.f32.mrb[0].mxu0
          %v887 = vadd.f32 0.0, %v886
          %v888 = vpop.f32.mrb[0].mxu0
          %889 = vmatprep.mubr.f32.mxu0 %v629
          %890 = vmatmul.mubr.f32.gmra.mrb[0].mxu0 %v628
          %v891 = vpop.f32.mrb[0].mxu0
          %v892 = vadd.f32 0.0, %v891
          %v893 = vpop.f32.mrb[0].mxu0
          %894 = vmatprep.mubr.f32.mxu0 %v631
          %895 = vmatmul.mubr.f32.gmra.mrb[0].mxu0 %v630
          %v896 = vpop.f32.mrb[0].mxu0
          %v897 = vadd.f32 0.0, %v896
          %v898 = vpop.f32.mrb[0].mxu0
          %899 = vmatprep.mubr.f32.mxu0 %v633
          %900 = vmatmul.mubr.f32.gmra.mrb[0].mxu0 %v632
          %v901 = vpop.f32.mrb[0].mxu0
          %v902 = vadd.f32 0.0, %v901
          %v903 = vpop.f32.mrb[0].mxu0
          %904 = vmatprep.mubr.f32.mxu0 %v635
          %905 = vmatmul.mubr.f32.gmra.mrb[0].mxu0 %v634
          %v906 = vpop.f32.mrb[0].mxu0
          %v907 = vadd.f32 0.0, %v906
          %v908 = vpop.f32.mrb[0].mxu0
          %909 = vdwg.mxu0
          %910 = vst [vmem:[#allocation3] sm:$0xff] %v752
          %911 = vst [vmem:[#allocation3 + $0x8] sm:$0xff] %v757
          %912 = vst [vmem:[#allocation3 + $0x10] sm:$0xff] %v762
          %913 = vst [vmem:[#allocation3 + $0x18] sm:$0xff] %v767
          %914 = vst [vmem:[#allocation3 + $0x20] sm:$0xff] %v772
          %915 = vst [vmem:[#allocation3 + $0x28] sm:$0xff] %v777
          %916 = vst [vmem:[#allocation3 + $0x30] sm:$0xff] %v782
          %917 = vst [vmem:[#allocation3 + $0x38] sm:$0xff] %v787
          %918 = vst [vmem:[#allocation3 + $0x40] sm:$0xff] %v792
          %919 = vst [vmem:[#allocation3 + $0x48] sm:$0xff] %v797
          %920 = vst [vmem:[#allocation3 + $0x50] sm:$0xff] %v802
          %921 = vst [vmem:[#allocation3 + $0x58] sm:$0xff] %v807
          %922 = vst [vmem:[#allocation3 + $0x60] sm:$0xff] %v812
          %923 = vst [vmem:[#allocation3 + $0x68] sm:$0xff] %v817
          %924 = vst [vmem:[#allocation3 + $0x70] sm:$0xff] %v822
          %925 = vst [vmem:[#allocation3 + $0x78] sm:$0xff] %v827
          %926 = vst [vmem:[#allocation3 + $0x80] sm:$0xff] %v832
          %927 = vst [vmem:[#allocation3 + $0x88] sm:$0xff] %v837
          %928 = vst [vmem:[#allocation3 + $0x90] sm:$0xff] %v842
          %929 = vst [vmem:[#allocation3 + $0x98] sm:$0xff] %v847
          %930 = vst [vmem:[#allocation3 + $0xa0] sm:$0xff] %v852
          %931 = vst [vmem:[#allocation3 + $0xa8] sm:$0xff] %v857
          %932 = vst [vmem:[#allocation3 + $0xb0] sm:$0xff] %v862
          %933 = vst [vmem:[#allocation3 + $0xb8] sm:$0xff] %v867
          %934 = vst [vmem:[#allocation3 + $0xc0] sm:$0xff] %v872
          %935 = vst [vmem:[#allocation3 + $0xc8] sm:$0xff] %v877
          %936 = vst [vmem:[#allocation3 + $0xd0] sm:$0xff] %v882
          %937 = vst [vmem:[#allocation3 + $0xd8] sm:$0xff] %v887
          %938 = vst [vmem:[#allocation3 + $0xe0] sm:$0xff] %v892
          %939 = vst [vmem:[#allocation3 + $0xe8] sm:$0xff] %v897
          %940 = vst [vmem:[#allocation3 + $0xf0] sm:$0xff] %v902
          %941 = vst [vmem:[#allocation3 + $0xf8] sm:$0xff] %v907
          %v942 = vld [vmem:[#allocation3] sm:$0xff]
          %v943 = vld [vmem:[#allocation3 + $0x8] sm:$0xff]
          %v944 = vld [vmem:[#allocation3 + $0x10] sm:$0xff]
          %v945 = vld [vmem:[#allocation3 + $0x18] sm:$0xff]
          %v946 = vld [vmem:[#allocation3 + $0x20] sm:$0xff]
          %v947 = vld [vmem:[#allocation3 + $0x28] sm:$0xff]
          %v948 = vld [vmem:[#allocation3 + $0x30] sm:$0xff]
          %v949 = vld [vmem:[#allocation3 + $0x38] sm:$0xff]
          %v950 = vld [vmem:[#allocation3 + $0x40] sm:$0xff]
          %v951 = vld [vmem:[#allocation3 + $0x48] sm:$0xff]
          %v952 = vld [vmem:[#allocation3 + $0x50] sm:$0xff]
          %v953 = vld [vmem:[#allocation3 + $0x58] sm:$0xff]
          %v954 = vld [vmem:[#allocation3 + $0x60] sm:$0xff]
          %v955 = vld [vmem:[#allocation3 + $0x68] sm:$0xff]
          %v956 = vld [vmem:[#allocation3 + $0x70] sm:$0xff]
          %v957 = vld [vmem:[#allocation3 + $0x78] sm:$0xff]
          %v958 = vld [vmem:[#allocation3 + $0x80] sm:$0xff]
          %v959 = vld [vmem:[#allocation3 + $0x88] sm:$0xff]
          %v960 = vld [vmem:[#allocation3 + $0x90] sm:$0xff]
          %v961 = vld [vmem:[#allocation3 + $0x98] sm:$0xff]
          %v962 = vld [vmem:[#allocation3 + $0xa0] sm:$0xff]
          %v963 = vld [vmem:[#allocation3 + $0xa8] sm:$0xff]
          %v964 = vld [vmem:[#allocation3 + $0xb0] sm:$0xff]
          %v965 = vld [vmem:[#allocation3 + $0xb8] sm:$0xff]
          %v966 = vld [vmem:[#allocation3 + $0xc0] sm:$0xff]
          %v967 = vld [vmem:[#allocation3 + $0xc8] sm:$0xff]
          %v968 = vld [vmem:[#allocation3 + $0xd0] sm:$0xff]
          %v969 = vld [vmem:[#allocation3 + $0xd8] sm:$0xff]
          %v970 = vld [vmem:[#allocation3 + $0xe0] sm:$0xff]
          %v971 = vld [vmem:[#allocation3 + $0xe8] sm:$0xff]
          %v972 = vld [vmem:[#allocation3 + $0xf0] sm:$0xff]
          %v973 = vld [vmem:[#allocation3 + $0xf8] sm:$0xff]
          %v975 = vlaneseq
          %v976 = vshrl.u32 %v975, 7
          %v977 = vsub.s32 0, %v976
          %v978 = vrot.slane %v652, %v977
          %980 = vmatprep.subr.mxu0 0.0
          %981 = vmatpush1.msra.mxu0 %v636
          %982 = vmatprep.subr.mxu0 0.0
          %983 = vmatpush1.msra.mxu0 %v637
          %984 = vmatprep.subr.mxu0 0.0
          %985 = vmatpush1.msra.mxu0 %v638
          %986 = vmatprep.subr.mxu0 0.0
          %987 = vmatpush1.msra.mxu0 %v639
          %988 = vmatprep.subr.mxu0 0.0
          %989 = vmatpush1.msra.mxu0 %v640
          %990 = vmatprep.subr.mxu0 0.0
          %991 = vmatpush1.msra.mxu0 %v641
          %992 = vmatprep.subr.mxu0 0.0
          %993 = vmatpush1.msra.mxu0 %v642
          %994 = vmatprep.subr.mxu0 0.0
          %995 = vmatpush1.msra.mxu0 %v643
          %996 = vmatprep.subr.mxu0 0.0
          %997 = vmatpush1.msra.mxu0 %v644
          %998 = vmatprep.subr.mxu0 0.0
          %999 = vmatpush1.msra.mxu0 %v645
          %1000 = vmatprep.subr.mxu0 0.0
          %1001 = vmatpush1.msra.mxu0 %v646
          %1002 = vmatprep.subr.mxu0 0.0
          %1003 = vmatpush1.msra.mxu0 %v647
          %1004 = vmatprep.subr.mxu0 0.0
          %1005 = vmatpush1.msra.mxu0 %v648
          %1006 = vmatprep.subr.mxu0 0.0
          %1007 = vmatpush1.msra.mxu0 %v649
          %1008 = vmatprep.subr.mxu0 0.0
          %1009 = vmatpush1.msra.mxu0 %v650
          %1010 = vmatprep.subr.mxu0 0.0
          %1011 = vmatpush1.msra.mxu0 %v651
          %1012 = vmatprep.subr.mxu0 0.0
          %1013 = vmatpush1.msra.mxu0 0.0
          %1014 = vmatprep.subr.mxu0 0.0
          %1015 = vmatpush1.msra.mxu0 0.0
          %1016 = vmatprep.subr.mxu0 0.0
          %1017 = vmatpush1.msra.mxu0 0.0
          %1018 = vmatprep.subr.mxu0 0.0
          %1019 = vmatpush1.msra.mxu0 0.0
          %1020 = vmatprep.subr.mxu0 0.0
          %1021 = vmatpush1.msra.mxu0 0.0
          %1022 = vmatprep.subr.mxu0 0.0
          %1023 = vmatpush1.msra.mxu0 0.0
          %1024 = vmatprep.subr.mxu0 0.0
          %1025 = vmatpush1.msra.mxu0 0.0
          %1026 = vmatprep.subr.mxu0 0.0
          %1027 = vmatpush1.msra.mxu0 0.0
          %1028 = vmatprep.subr.mxu0 0.0
          %1029 = vmatpush1.msra.mxu0 0.0
          %1030 = vmatprep.subr.mxu0 0.0
          %1031 = vmatpush1.msra.mxu0 0.0
          %1032 = vmatprep.subr.mxu0 0.0
          %1033 = vmatpush1.msra.mxu0 0.0
          %1034 = vmatprep.subr.mxu0 0.0
          %1035 = vmatpush1.msra.mxu0 0.0
          %1036 = vmatprep.subr.mxu0 0.0
          %1037 = vmatpush1.msra.mxu0 0.0
          %1038 = vmatprep.subr.mxu0 0.0
          %1039 = vmatpush1.msra.mxu0 0.0
          %1040 = vmatprep.subr.mxu0 0.0
          %1041 = vmatpush1.msra.mxu0 0.0
          %1042 = vmatprep.subr.mxu0 0.0
          %1043 = vmatpush1.msra.mxu0 0.0
          %1044 = vmatprep.mubr.f32.mxu0 0.0
          %1045 = vmatmul.mubr.f32.gmra.mrb[0].mxu0 %v942
          %v1046 = vpop.f32.mrb[0].mxu0
          %v1047 = vadd.f32 %v978, %v1046
          %v1048 = vpop.f32.mrb[0].mxu0
          %1049 = vmatprep.mubr.f32.mxu0 0.0
          %1050 = vmatmul.mubr.f32.gmra.mrb[0].mxu0 %v943
          %v1051 = vpop.f32.mrb[0].mxu0
          %v1052 = vadd.f32 %v978, %v1051
          %v1053 = vpop.f32.mrb[0].mxu0
          %1054 = vmatprep.mubr.f32.mxu0 0.0
          %1055 = vmatmul.mubr.f32.gmra.mrb[0].mxu0 %v944
          %v1056 = vpop.f32.mrb[0].mxu0
          %v1057 = vadd.f32 %v978, %v1056
          %v1058 = vpop.f32.mrb[0].mxu0
          %1059 = vmatprep.mubr.f32.mxu0 0.0
          %1060 = vmatmul.mubr.f32.gmra.mrb[0].mxu0 %v945
          %v1061 = vpop.f32.mrb[0].mxu0
          %v1062 = vadd.f32 %v978, %v1061
          %v1063 = vpop.f32.mrb[0].mxu0
          %1064 = vmatprep.mubr.f32.mxu0 0.0
          %1065 = vmatmul.mubr.f32.gmra.mrb[0].mxu0 %v946
          %v1066 = vpop.f32.mrb[0].mxu0
          %v1067 = vadd.f32 %v978, %v1066
          %v1068 = vpop.f32.mrb[0].mxu0
          %1069 = vmatprep.mubr.f32.mxu0 0.0
          %1070 = vmatmul.mubr.f32.gmra.mrb[0].mxu0 %v947
          %v1071 = vpop.f32.mrb[0].mxu0
          %v1072 = vadd.f32 %v978, %v1071
          %v1073 = vpop.f32.mrb[0].mxu0
          %1074 = vmatprep.mubr.f32.mxu0 0.0
          %1075 = vmatmul.mubr.f32.gmra.mrb[0].mxu0 %v948
          %v1076 = vpop.f32.mrb[0].mxu0
          %v1077 = vadd.f32 %v978, %v1076
          %v1078 = vpop.f32.mrb[0].mxu0
          %1079 = vmatprep.mubr.f32.mxu0 0.0
          %1080 = vmatmul.mubr.f32.gmra.mrb[0].mxu0 %v949
          %v1081 = vpop.f32.mrb[0].mxu0
          %v1082 = vadd.f32 %v978, %v1081
          %v1083 = vpop.f32.mrb[0].mxu0
          %1084 = vmatprep.mubr.f32.mxu0 0.0
          %1085 = vmatmul.mubr.f32.gmra.mrb[0].mxu0 %v950
          %v1086 = vpop.f32.mrb[0].mxu0
          %v1087 = vadd.f32 %v978, %v1086
          %v1088 = vpop.f32.mrb[0].mxu0
          %1089 = vmatprep.mubr.f32.mxu0 0.0
          %1090 = vmatmul.mubr.f32.gmra.mrb[0].mxu0 %v951
          %v1091 = vpop.f32.mrb[0].mxu0
          %v1092 = vadd.f32 %v978, %v1091
          %v1093 = vpop.f32.mrb[0].mxu0
          %1094 = vmatprep.mubr.f32.mxu0 0.0
          %1095 = vmatmul.mubr.f32.gmra.mrb[0].mxu0 %v952
          %v1096 = vpop.f32.mrb[0].mxu0
          %v1097 = vadd.f32 %v978, %v1096
          %v1098 = vpop.f32.mrb[0].mxu0
          %1099 = vmatprep.mubr.f32.mxu0 0.0
          %1100 = vmatmul.mubr.f32.gmra.mrb[0].mxu0 %v953
          %v1101 = vpop.f32.mrb[0].mxu0
          %v1102 = vadd.f32 %v978, %v1101
          %v1103 = vpop.f32.mrb[0].mxu0
          %1104 = vmatprep.mubr.f32.mxu0 0.0
          %1105 = vmatmul.mubr.f32.gmra.mrb[0].mxu0 %v954
          %v1106 = vpop.f32.mrb[0].mxu0
          %v1107 = vadd.f32 %v978, %v1106
          %v1108 = vpop.f32.mrb[0].mxu0
          %1109 = vmatprep.mubr.f32.mxu0 0.0
          %1110 = vmatmul.mubr.f32.gmra.mrb[0].mxu0 %v955
          %v1111 = vpop.f32.mrb[0].mxu0
          %v1112 = vadd.f32 %v978, %v1111
          %v1113 = vpop.f32.mrb[0].mxu0
          %1114 = vmatprep.mubr.f32.mxu0 0.0
          %1115 = vmatmul.mubr.f32.gmra.mrb[0].mxu0 %v956
          %v1116 = vpop.f32.mrb[0].mxu0
          %v1117 = vadd.f32 %v978, %v1116
          %v1118 = vpop.f32.mrb[0].mxu0
          %1119 = vmatprep.mubr.f32.mxu0 0.0
          %1120 = vmatmul.mubr.f32.gmra.mrb[0].mxu0 %v957
          %v1121 = vpop.f32.mrb[0].mxu0
          %v1122 = vadd.f32 %v978, %v1121
          %v1123 = vpop.f32.mrb[0].mxu0
          %1124 = vmatprep.mubr.f32.mxu0 0.0
          %1125 = vmatmul.mubr.f32.gmra.mrb[0].mxu0 %v958
          %v1126 = vpop.f32.mrb[0].mxu0
          %v1127 = vadd.f32 %v978, %v1126
          %v1128 = vpop.f32.mrb[0].mxu0
          %1129 = vmatprep.mubr.f32.mxu0 0.0
          %1130 = vmatmul.mubr.f32.gmra.mrb[0].mxu0 %v959
          %v1131 = vpop.f32.mrb[0].mxu0
          %v1132 = vadd.f32 %v978, %v1131
          %v1133 = vpop.f32.mrb[0].mxu0
          %1134 = vmatprep.mubr.f32.mxu0 0.0
          %1135 = vmatmul.mubr.f32.gmra.mrb[0].mxu0 %v960
          %v1136 = vpop.f32.mrb[0].mxu0
          %v1137 = vadd.f32 %v978, %v1136
          %v1138 = vpop.f32.mrb[0].mxu0
          %1139 = vmatprep.mubr.f32.mxu0 0.0
          %1140 = vmatmul.mubr.f32.gmra.mrb[0].mxu0 %v961
          %v1141 = vpop.f32.mrb[0].mxu0
          %v1142 = vadd.f32 %v978, %v1141
          %v1143 = vpop.f32.mrb[0].mxu0
          %1144 = vmatprep.mubr.f32.mxu0 0.0
          %1145 = vmatmul.mubr.f32.gmra.mrb[0].mxu0 %v962
          %v1146 = vpop.f32.mrb[0].mxu0
          %v1147 = vadd.f32 %v978, %v1146
          %v1148 = vpop.f32.mrb[0].mxu0
          %1149 = vmatprep.mubr.f32.mxu0 0.0
          %1150 = vmatmul.mubr.f32.gmra.mrb[0].mxu0 %v963
          %v1151 = vpop.f32.mrb[0].mxu0
          %v1152 = vadd.f32 %v978, %v1151
          %v1153 = vpop.f32.mrb[0].mxu0
          %1154 = vmatprep.mubr.f32.mxu0 0.0
          %1155 = vmatmul.mubr.f32.gmra.mrb[0].mxu0 %v964
          %v1156 = vpop.f32.mrb[0].mxu0
          %v1157 = vadd.f32 %v978, %v1156
          %v1158 = vpop.f32.mrb[0].mxu0
          %1159 = vmatprep.mubr.f32.mxu0 0.0
          %1160 = vmatmul.mubr.f32.gmra.mrb[0].mxu0 %v965
          %v1161 = vpop.f32.mrb[0].mxu0
          %v1162 = vadd.f32 %v978, %v1161
          %v1163 = vpop.f32.mrb[0].mxu0
          %1164 = vmatprep.mubr.f32.mxu0 0.0
          %1165 = vmatmul.mubr.f32.gmra.mrb[0].mxu0 %v966
          %v1166 = vpop.f32.mrb[0].mxu0
          %v1167 = vadd.f32 %v978, %v1166
          %v1168 = vpop.f32.mrb[0].mxu0
          %1169 = vmatprep.mubr.f32.mxu0 0.0
          %1170 = vmatmul.mubr.f32.gmra.mrb[0].mxu0 %v967
          %v1171 = vpop.f32.mrb[0].mxu0
          %v1172 = vadd.f32 %v978, %v1171
          %v1173 = vpop.f32.mrb[0].mxu0
          %1174 = vmatprep.mubr.f32.mxu0 0.0
          %1175 = vmatmul.mubr.f32.gmra.mrb[0].mxu0 %v968
          %v1176 = vpop.f32.mrb[0].mxu0
          %v1177 = vadd.f32 %v978, %v1176
          %v1178 = vpop.f32.mrb[0].mxu0
          %1179 = vmatprep.mubr.f32.mxu0 0.0
          %1180 = vmatmul.mubr.f32.gmra.mrb[0].mxu0 %v969
          %v1181 = vpop.f32.mrb[0].mxu0
          %v1182 = vadd.f32 %v978, %v1181
          %v1183 = vpop.f32.mrb[0].mxu0
          %1184 = vmatprep.mubr.f32.mxu0 0.0
          %1185 = vmatmul.mubr.f32.gmra.mrb[0].mxu0 %v970
          %v1186 = vpop.f32.mrb[0].mxu0
          %v1187 = vadd.f32 %v978, %v1186
          %v1188 = vpop.f32.mrb[0].mxu0
          %1189 = vmatprep.mubr.f32.mxu0 0.0
          %1190 = vmatmul.mubr.f32.gmra.mrb[0].mxu0 %v971
          %v1191 = vpop.f32.mrb[0].mxu0
          %v1192 = vadd.f32 %v978, %v1191
          %v1193 = vpop.f32.mrb[0].mxu0
          %1194 = vmatprep.mubr.f32.mxu0 0.0
          %1195 = vmatmul.mubr.f32.gmra.mrb[0].mxu0 %v972
          %v1196 = vpop.f32.mrb[0].mxu0
          %v1197 = vadd.f32 %v978, %v1196
          %v1198 = vpop.f32.mrb[0].mxu0
          %1199 = vmatprep.mubr.f32.mxu0 0.0
          %1200 = vmatmul.mubr.f32.gmra.mrb[0].mxu0 %v973
          %v1201 = vpop.f32.mrb[0].mxu0
          %v1202 = vadd.f32 %v978, %v1201
          %v1203 = vpop.f32.mrb[0].mxu0
          %1204 = vdwg.mxu0
          %v1205 = vtanh.pop %v1047
          %v1206 = vtanh.pop %v1052
          %v1207 = vtanh.pop %v1057
          %v1208 = vtanh.pop %v1062
          %v1209 = vtanh.pop %v1067
          %v1210 = vtanh.pop %v1072
          %v1211 = vtanh.pop %v1077
          %v1212 = vtanh.pop %v1082
          %v1213 = vtanh.pop %v1087
          %v1214 = vtanh.pop %v1092
          %v1215 = vtanh.pop %v1097
          %v1216 = vtanh.pop %v1102
          %v1217 = vtanh.pop %v1107
          %v1218 = vtanh.pop %v1112
          %v1219 = vtanh.pop %v1117
          %v1220 = vtanh.pop %v1122
          %v1221 = vtanh.pop %v1127
          %v1222 = vtanh.pop %v1132
          %v1223 = vtanh.pop %v1137
          %v1224 = vtanh.pop %v1142
          %v1225 = vtanh.pop %v1147
          %v1226 = vtanh.pop %v1152
          %v1227 = vtanh.pop %v1157
          %v1228 = vtanh.pop %v1162
          %v1229 = vtanh.pop %v1167
          %v1230 = vtanh.pop %v1172
          %v1231 = vtanh.pop %v1177
          %v1232 = vtanh.pop %v1182
          %v1233 = vtanh.pop %v1187
          %v1234 = vtanh.pop %v1192
          %v1235 = vtanh.pop %v1197
          %v1236 = vtanh.pop %v1202
          %1237 = vst [vmem:[#allocation3] sm:$0xff] %v1205
          %1238 = vst [vmem:[#allocation3 + $0x8] sm:$0xff] %v1206
          %1239 = vst [vmem:[#allocation3 + $0x10] sm:$0xff] %v1207
          %1240 = vst [vmem:[#allocation3 + $0x18] sm:$0xff] %v1208
          %1241 = vst [vmem:[#allocation3 + $0x20] sm:$0xff] %v1209
          %1242 = vst [vmem:[#allocation3 + $0x28] sm:$0xff] %v1210
          %1243 = vst [vmem:[#allocation3 + $0x30] sm:$0xff] %v1211
          %1244 = vst [vmem:[#allocation3 + $0x38] sm:$0xff] %v1212
          %1245 = vst [vmem:[#allocation3 + $0x40] sm:$0xff] %v1213
          %1246 = vst [vmem:[#allocation3 + $0x48] sm:$0xff] %v1214
          %1247 = vst [vmem:[#allocation3 + $0x50] sm:$0xff] %v1215
          %1248 = vst [vmem:[#allocation3 + $0x58] sm:$0xff] %v1216
          %1249 = vst [vmem:[#allocation3 + $0x60] sm:$0xff] %v1217
          %1250 = vst [vmem:[#allocation3 + $0x68] sm:$0xff] %v1218
          %1251 = vst [vmem:[#allocation3 + $0x70] sm:$0xff] %v1219
          %1252 = vst [vmem:[#allocation3 + $0x78] sm:$0xff] %v1220
          %1253 = vst [vmem:[#allocation3 + $0x80] sm:$0xff] %v1221
          %1254 = vst [vmem:[#allocation3 + $0x88] sm:$0xff] %v1222
          %1255 = vst [vmem:[#allocation3 + $0x90] sm:$0xff] %v1223
          %1256 = vst [vmem:[#allocation3 + $0x98] sm:$0xff] %v1224
          %1257 = vst [vmem:[#allocation3 + $0xa0] sm:$0xff] %v1225
          %1258 = vst [vmem:[#allocation3 + $0xa8] sm:$0xff] %v1226
          %1259 = vst [vmem:[#allocation3 + $0xb0] sm:$0xff] %v1227
          %1260 = vst [vmem:[#allocation3 + $0xb8] sm:$0xff] %v1228
          %1261 = vst [vmem:[#allocation3 + $0xc0] sm:$0xff] %v1229
          %1262 = vst [vmem:[#allocation3 + $0xc8] sm:$0xff] %v1230
          %1263 = vst [vmem:[#allocation3 + $0xd0] sm:$0xff] %v1231
          %1264 = vst [vmem:[#allocation3 + $0xd8] sm:$0xff] %v1232
          %1265 = vst [vmem:[#allocation3 + $0xe0] sm:$0xff] %v1233
          %1266 = vst [vmem:[#allocation3 + $0xe8] sm:$0xff] %v1234
          %1267 = vst [vmem:[#allocation3 + $0xf0] sm:$0xff] %v1235
          %1268 = vst [vmem:[#allocation3 + $0xf8] sm:$0xff] %v1236
          %v1269 = vld [vmem:[#allocation10] sm:$0xff]
          %v1270 = vld [vmem:[#allocation10 + $0x8] sm:$0xff]
          %v1271 = vld [vmem:[#allocation10 + $0x10] sm:$0xff]
          %v1272 = vld [vmem:[#allocation10 + $0x18] sm:$0xff]
          %v1273 = vld [vmem:[#allocation10 + $0x20] sm:$0xff]
          %v1274 = vld [vmem:[#allocation10 + $0x28] sm:$0xff]
          %v1275 = vld [vmem:[#allocation10 + $0x30] sm:$0xff]
          %v1276 = vld [vmem:[#allocation10 + $0x38] sm:$0xff]
          %v1277 = vld [vmem:[#allocation10 + $0x40] sm:$0xff]
          %v1278 = vld [vmem:[#allocation10 + $0x48] sm:$0xff]
          %v1279 = vld [vmem:[#allocation10 + $0x50] sm:$0xff]
          %v1280 = vld [vmem:[#allocation10 + $0x58] sm:$0xff]
          %v1281 = vld [vmem:[#allocation10 + $0x60] sm:$0xff]
          %v1282 = vld [vmem:[#allocation10 + $0x68] sm:$0xff]
          %v1283 = vld [vmem:[#allocation10 + $0x70] sm:$0xff]
          %v1284 = vld [vmem:[#allocation10 + $0x78] sm:$0xff]
          %v1285 = vld [vmem:[%s5] sm:$0x1]
          %v1286 = vld [vmem:[#allocation3] sm:$0xff]
          %v1287 = vld [vmem:[#allocation3 + $0x8] sm:$0xff]
          %v1288 = vld [vmem:[#allocation3 + $0x10] sm:$0xff]
          %v1289 = vld [vmem:[#allocation3 + $0x18] sm:$0xff]
          %v1290 = vld [vmem:[#allocation3 + $0x20] sm:$0xff]
          %v1291 = vld [vmem:[#allocation3 + $0x28] sm:$0xff]
          %v1292 = vld [vmem:[#allocation3 + $0x30] sm:$0xff]
          %v1293 = vld [vmem:[#allocation3 + $0x38] sm:$0xff]
          %v1294 = vld [vmem:[#allocation3 + $0x40] sm:$0xff]
          %v1295 = vld [vmem:[#allocation3 + $0x48] sm:$0xff]
          %v1296 = vld [vmem:[#allocation3 + $0x50] sm:$0xff]
          %v1297 = vld [vmem:[#allocation3 + $0x58] sm:$0xff]
          %v1298 = vld [vmem:[#allocation3 + $0x60] sm:$0xff]
          %v1299 = vld [vmem:[#allocation3 + $0x68] sm:$0xff]
          %v1300 = vld [vmem:[#allocation3 + $0x70] sm:$0xff]
          %v1301 = vld [vmem:[#allocation3 + $0x78] sm:$0xff]
          %v1302 = vld [vmem:[#allocation3 + $0x80] sm:$0xff]
          %v1303 = vld [vmem:[#allocation3 + $0x88] sm:$0xff]
          %v1304 = vld [vmem:[#allocation3 + $0x90] sm:$0xff]
          %v1305 = vld [vmem:[#allocation3 + $0x98] sm:$0xff]
          %v1306 = vld [vmem:[#allocation3 + $0xa0] sm:$0xff]
          %v1307 = vld [vmem:[#allocation3 + $0xa8] sm:$0xff]
          %v1308 = vld [vmem:[#allocation3 + $0xb0] sm:$0xff]
          %v1309 = vld [vmem:[#allocation3 + $0xb8] sm:$0xff]
          %v1310 = vld [vmem:[#allocation3 + $0xc0] sm:$0xff]
          %v1311 = vld [vmem:[#allocation3 + $0xc8] sm:$0xff]
          %v1312 = vld [vmem:[#allocation3 + $0xd0] sm:$0xff]
          %v1313 = vld [vmem:[#allocation3 + $0xd8] sm:$0xff]
          %v1314 = vld [vmem:[#allocation3 + $0xe0] sm:$0xff]
          %v1315 = vld [vmem:[#allocation3 + $0xe8] sm:$0xff]
          %v1316 = vld [vmem:[#allocation3 + $0xf0] sm:$0xff]
          %v1317 = vld [vmem:[#allocation3 + $0xf8] sm:$0xff]
          %1318 = vmatprep.subr.mxu0 0.0
          %1319 = vmatpush1.msra.mxu0 %v1286
          %1320 = vmatprep.subr.mxu0 0.0
          %1321 = vmatpush1.msra.mxu0 %v1287
          %1322 = vmatprep.subr.mxu0 0.0
          %1323 = vmatpush1.msra.mxu0 %v1288
          %1324 = vmatprep.subr.mxu0 0.0
          %1325 = vmatpush1.msra.mxu0 %v1289
          %1326 = vmatprep.subr.mxu0 0.0
          %1327 = vmatpush1.msra.mxu0 %v1290
          %1328 = vmatprep.subr.mxu0 0.0
          %1329 = vmatpush1.msra.mxu0 %v1291
          %1330 = vmatprep.subr.mxu0 0.0
          %1331 = vmatpush1.msra.mxu0 %v1292
          %1332 = vmatprep.subr.mxu0 0.0
          %1333 = vmatpush1.msra.mxu0 %v1293
          %1334 = vmatprep.subr.mxu0 0.0
          %1335 = vmatpush1.msra.mxu0 %v1294
          %1336 = vmatprep.subr.mxu0 0.0
          %1337 = vmatpush1.msra.mxu0 %v1295
          %1338 = vmatprep.subr.mxu0 0.0
          %1339 = vmatpush1.msra.mxu0 %v1296
          %1340 = vmatprep.subr.mxu0 0.0
          %1341 = vmatpush1.msra.mxu0 %v1297
          %1342 = vmatprep.subr.mxu0 0.0
          %1343 = vmatpush1.msra.mxu0 %v1298
          %1344 = vmatprep.subr.mxu0 0.0
          %1345 = vmatpush1.msra.mxu0 %v1299
          %1346 = vmatprep.subr.mxu0 0.0
          %1347 = vmatpush1.msra.mxu0 %v1300
          %1348 = vmatprep.subr.mxu0 0.0
          %1349 = vmatpush1.msra.mxu0 %v1301
          %1350 = vmatprep.subr.mxu0 0.0
          %1351 = vmatpush1.msra.mxu0 %v1302
          %1352 = vmatprep.subr.mxu0 0.0
          %1353 = vmatpush1.msra.mxu0 %v1303
          %1354 = vmatprep.subr.mxu0 0.0
          %1355 = vmatpush1.msra.mxu0 %v1304
          %1356 = vmatprep.subr.mxu0 0.0
          %1357 = vmatpush1.msra.mxu0 %v1305
          %1358 = vmatprep.subr.mxu0 0.0
          %1359 = vmatpush1.msra.mxu0 %v1306
          %1360 = vmatprep.subr.mxu0 0.0
          %1361 = vmatpush1.msra.mxu0 %v1307
          %1362 = vmatprep.subr.mxu0 0.0
          %1363 = vmatpush1.msra.mxu0 %v1308
          %1364 = vmatprep.subr.mxu0 0.0
          %1365 = vmatpush1.msra.mxu0 %v1309
          %1366 = vmatprep.subr.mxu0 0.0
          %1367 = vmatpush1.msra.mxu0 %v1310
          %1368 = vmatprep.subr.mxu0 0.0
          %1369 = vmatpush1.msra.mxu0 %v1311
          %1370 = vmatprep.subr.mxu0 0.0
          %1371 = vmatpush1.msra.mxu0 %v1312
          %1372 = vmatprep.subr.mxu0 0.0
          %1373 = vmatpush1.msra.mxu0 %v1313
          %1374 = vmatprep.subr.mxu0 0.0
          %1375 = vmatpush1.msra.mxu0 %v1314
          %1376 = vmatprep.subr.mxu0 0.0
          %1377 = vmatpush1.msra.mxu0 %v1315
          %1378 = vmatprep.subr.mxu0 0.0
          %1379 = vmatpush1.msra.mxu0 %v1316
          %1380 = vmatprep.subr.mxu0 0.0
          %1381 = vmatpush1.msra.mxu0 %v1317
          %1382 = vmatprep.mubr.f32.mxu0 %v573
          %1383 = vmatmul.mubr.f32.gmra.mrb[0].mxu0 %v572
          %v1384 = vpop.f32.mrb[0].mxu0
          %v1385 = vadd.f32 0.0, %v1384
          %v1386 = vpop.f32.mrb[0].mxu0
          %1387 = vmatprep.mubr.f32.mxu0 %v575
          %1388 = vmatmul.mubr.f32.gmra.mrb[0].mxu0 %v574
          %v1389 = vpop.f32.mrb[0].mxu0
          %v1390 = vadd.f32 0.0, %v1389
          %v1391 = vpop.f32.mrb[0].mxu0
          %1392 = vmatprep.mubr.f32.mxu0 %v577
          %1393 = vmatmul.mubr.f32.gmra.mrb[0].mxu0 %v576
          %v1394 = vpop.f32.mrb[0].mxu0
          %v1395 = vadd.f32 0.0, %v1394
          %v1396 = vpop.f32.mrb[0].mxu0
          %1397 = vmatprep.mubr.f32.mxu0 %v579
          %1398 = vmatmul.mubr.f32.gmra.mrb[0].mxu0 %v578
          %v1399 = vpop.f32.mrb[0].mxu0
          %v1400 = vadd.f32 0.0, %v1399
          %v1401 = vpop.f32.mrb[0].mxu0
          %1402 = vmatprep.mubr.f32.mxu0 %v581
          %1403 = vmatmul.mubr.f32.gmra.mrb[0].mxu0 %v580
          %v1404 = vpop.f32.mrb[0].mxu0
          %v1405 = vadd.f32 0.0, %v1404
          %v1406 = vpop.f32.mrb[0].mxu0
          %1407 = vmatprep.mubr.f32.mxu0 %v583
          %1408 = vmatmul.mubr.f32.gmra.mrb[0].mxu0 %v582
          %v1409 = vpop.f32.mrb[0].mxu0
          %v1410 = vadd.f32 0.0, %v1409
          %v1411 = vpop.f32.mrb[0].mxu0
          %1412 = vmatprep.mubr.f32.mxu0 %v585
          %1413 = vmatmul.mubr.f32.gmra.mrb[0].mxu0 %v584
          %v1414 = vpop.f32.mrb[0].mxu0
          %v1415 = vadd.f32 0.0, %v1414
          %v1416 = vpop.f32.mrb[0].mxu0
          %1417 = vmatprep.mubr.f32.mxu0 %v587
          %1418 = vmatmul.mubr.f32.gmra.mrb[0].mxu0 %v586
          %v1419 = vpop.f32.mrb[0].mxu0
          %v1420 = vadd.f32 0.0, %v1419
          %v1421 = vpop.f32.mrb[0].mxu0
          %1422 = vmatprep.mubr.f32.mxu0 %v589
          %1423 = vmatmul.mubr.f32.gmra.mrb[0].mxu0 %v588
          %v1424 = vpop.f32.mrb[0].mxu0
          %v1425 = vadd.f32 0.0, %v1424
          %v1426 = vpop.f32.mrb[0].mxu0
          %1427 = vmatprep.mubr.f32.mxu0 %v591
          %1428 = vmatmul.mubr.f32.gmra.mrb[0].mxu0 %v590
          %v1429 = vpop.f32.mrb[0].mxu0
          %v1430 = vadd.f32 0.0, %v1429
          %v1431 = vpop.f32.mrb[0].mxu0
          %1432 = vmatprep.mubr.f32.mxu0 %v593
          %1433 = vmatmul.mubr.f32.gmra.mrb[0].mxu0 %v592
          %v1434 = vpop.f32.mrb[0].mxu0
          %v1435 = vadd.f32 0.0, %v1434
          %v1436 = vpop.f32.mrb[0].mxu0
          %1437 = vmatprep.mubr.f32.mxu0 %v595
          %1438 = vmatmul.mubr.f32.gmra.mrb[0].mxu0 %v594
          %v1439 = vpop.f32.mrb[0].mxu0
          %v1440 = vadd.f32 0.0, %v1439
          %v1441 = vpop.f32.mrb[0].mxu0
          %1442 = vmatprep.mubr.f32.mxu0 %v597
          %1443 = vmatmul.mubr.f32.gmra.mrb[0].mxu0 %v596
          %v1444 = vpop.f32.mrb[0].mxu0
          %v1445 = vadd.f32 0.0, %v1444
          %v1446 = vpop.f32.mrb[0].mxu0
          %1447 = vmatprep.mubr.f32.mxu0 %v599
          %1448 = vmatmul.mubr.f32.gmra.mrb[0].mxu0 %v598
          %v1449 = vpop.f32.mrb[0].mxu0
          %v1450 = vadd.f32 0.0, %v1449
          %v1451 = vpop.f32.mrb[0].mxu0
          %1452 = vmatprep.mubr.f32.mxu0 %v601
          %1453 = vmatmul.mubr.f32.gmra.mrb[0].mxu0 %v600
          %v1454 = vpop.f32.mrb[0].mxu0
          %v1455 = vadd.f32 0.0, %v1454
          %v1456 = vpop.f32.mrb[0].mxu0
          %1457 = vmatprep.mubr.f32.mxu0 %v603
          %1458 = vmatmul.mubr.f32.gmra.mrb[0].mxu0 %v602
          %v1459 = vpop.f32.mrb[0].mxu0
          %v1460 = vadd.f32 0.0, %v1459
          %v1461 = vpop.f32.mrb[0].mxu0
          %1462 = vmatprep.mubr.f32.mxu0 %v605
          %1463 = vmatmul.mubr.f32.gmra.mrb[0].mxu0 %v604
          %v1464 = vpop.f32.mrb[0].mxu0
          %v1465 = vadd.f32 0.0, %v1464
          %v1466 = vpop.f32.mrb[0].mxu0
          %1467 = vmatprep.mubr.f32.mxu0 %v607
          %1468 = vmatmul.mubr.f32.gmra.mrb[0].mxu0 %v606
          %v1469 = vpop.f32.mrb[0].mxu0
          %v1470 = vadd.f32 0.0, %v1469
          %v1471 = vpop.f32.mrb[0].mxu0
          %1472 = vmatprep.mubr.f32.mxu0 %v609
          %1473 = vmatmul.mubr.f32.gmra.mrb[0].mxu0 %v608
          %v1474 = vpop.f32.mrb[0].mxu0
          %v1475 = vadd.f32 0.0, %v1474
          %v1476 = vpop.f32.mrb[0].mxu0
          %1477 = vmatprep.mubr.f32.mxu0 %v611
          %1478 = vmatmul.mubr.f32.gmra.mrb[0].mxu0 %v610
          %v1479 = vpop.f32.mrb[0].mxu0
          %v1480 = vadd.f32 0.0, %v1479
          %v1481 = vpop.f32.mrb[0].mxu0
          %1482 = vmatprep.mubr.f32.mxu0 %v613
          %1483 = vmatmul.mubr.f32.gmra.mrb[0].mxu0 %v612
          %v1484 = vpop.f32.mrb[0].mxu0
          %v1485 = vadd.f32 0.0, %v1484
          %v1486 = vpop.f32.mrb[0].mxu0
          %1487 = vmatprep.mubr.f32.mxu0 %v615
          %1488 = vmatmul.mubr.f32.gmra.mrb[0].mxu0 %v614
          %v1489 = vpop.f32.mrb[0].mxu0
          %v1490 = vadd.f32 0.0, %v1489
          %v1491 = vpop.f32.mrb[0].mxu0
          %1492 = vmatprep.mubr.f32.mxu0 %v617
          %1493 = vmatmul.mubr.f32.gmra.mrb[0].mxu0 %v616
          %v1494 = vpop.f32.mrb[0].mxu0
          %v1495 = vadd.f32 0.0, %v1494
          %v1496 = vpop.f32.mrb[0].mxu0
          %1497 = vmatprep.mubr.f32.mxu0 %v619
          %1498 = vmatmul.mubr.f32.gmra.mrb[0].mxu0 %v618
          %v1499 = vpop.f32.mrb[0].mxu0
          %v1500 = vadd.f32 0.0, %v1499
          %v1501 = vpop.f32.mrb[0].mxu0
          %1502 = vmatprep.mubr.f32.mxu0 %v621
          %1503 = vmatmul.mubr.f32.gmra.mrb[0].mxu0 %v620
          %v1504 = vpop.f32.mrb[0].mxu0
          %v1505 = vadd.f32 0.0, %v1504
          %v1506 = vpop.f32.mrb[0].mxu0
          %1507 = vmatprep.mubr.f32.mxu0 %v623
          %1508 = vmatmul.mubr.f32.gmra.mrb[0].mxu0 %v622
          %v1509 = vpop.f32.mrb[0].mxu0
          %v1510 = vadd.f32 0.0, %v1509
          %v1511 = vpop.f32.mrb[0].mxu0
          %1512 = vmatprep.mubr.f32.mxu0 %v625
          %1513 = vmatmul.mubr.f32.gmra.mrb[0].mxu0 %v624
          %v1514 = vpop.f32.mrb[0].mxu0
          %v1515 = vadd.f32 0.0, %v1514
          %v1516 = vpop.f32.mrb[0].mxu0
          %1517 = vmatprep.mubr.f32.mxu0 %v627
          %1518 = vmatmul.mubr.f32.gmra.mrb[0].mxu0 %v626
          %v1519 = vpop.f32.mrb[0].mxu0
          %v1520 = vadd.f32 0.0, %v1519
          %v1521 = vpop.f32.mrb[0].mxu0
          %1522 = vmatprep.mubr.f32.mxu0 %v629
          %1523 = vmatmul.mubr.f32.gmra.mrb[0].mxu0 %v628
          %v1524 = vpop.f32.mrb[0].mxu0
          %v1525 = vadd.f32 0.0, %v1524
          %v1526 = vpop.f32.mrb[0].mxu0
          %1527 = vmatprep.mubr.f32.mxu0 %v631
          %1528 = vmatmul.mubr.f32.gmra.mrb[0].mxu0 %v630
          %v1529 = vpop.f32.mrb[0].mxu0
          %v1530 = vadd.f32 0.0, %v1529
          %v1531 = vpop.f32.mrb[0].mxu0
          %1532 = vmatprep.mubr.f32.mxu0 %v633
          %1533 = vmatmul.mubr.f32.gmra.mrb[0].mxu0 %v632
          %v1534 = vpop.f32.mrb[0].mxu0
          %v1535 = vadd.f32 0.0, %v1534
          %v1536 = vpop.f32.mrb[0].mxu0
          %1537 = vmatprep.mubr.f32.mxu0 %v635
          %1538 = vmatmul.mubr.f32.gmra.mrb[0].mxu0 %v634
          %v1539 = vpop.f32.mrb[0].mxu0
          %v1540 = vadd.f32 0.0, %v1539
          %v1541 = vpop.f32.mrb[0].mxu0
          %1542 = vdwg.mxu0
          %1543 = vst [vmem:[#allocation3] sm:$0xff] %v1385
          %1544 = vst [vmem:[#allocation3 + $0x8] sm:$0xff] %v1390
          %1545 = vst [vmem:[#allocation3 + $0x10] sm:$0xff] %v1395
          %1546 = vst [vmem:[#allocation3 + $0x18] sm:$0xff] %v1400
          %1547 = vst [vmem:[#allocation3 + $0x20] sm:$0xff] %v1405
          %1548 = vst [vmem:[#allocation3 + $0x28] sm:$0xff] %v1410
          %1549 = vst [vmem:[#allocation3 + $0x30] sm:$0xff] %v1415
          %1550 = vst [vmem:[#allocation3 + $0x38] sm:$0xff] %v1420
          %1551 = vst [vmem:[#allocation3 + $0x40] sm:$0xff] %v1425
          %1552 = vst [vmem:[#allocation3 + $0x48] sm:$0xff] %v1430
          %1553 = vst [vmem:[#allocation3 + $0x50] sm:$0xff] %v1435
          %1554 = vst [vmem:[#allocation3 + $0x58] sm:$0xff] %v1440
          %1555 = vst [vmem:[#allocation3 + $0x60] sm:$0xff] %v1445
          %1556 = vst [vmem:[#allocation3 + $0x68] sm:$0xff] %v1450
          %1557 = vst [vmem:[#allocation3 + $0x70] sm:$0xff] %v1455
          %1558 = vst [vmem:[#allocation3 + $0x78] sm:$0xff] %v1460
          %1559 = vst [vmem:[#allocation3 + $0x80] sm:$0xff] %v1465
          %1560 = vst [vmem:[#allocation3 + $0x88] sm:$0xff] %v1470
          %1561 = vst [vmem:[#allocation3 + $0x90] sm:$0xff] %v1475
          %1562 = vst [vmem:[#allocation3 + $0x98] sm:$0xff] %v1480
          %1563 = vst [vmem:[#allocation3 + $0xa0] sm:$0xff] %v1485
          %1564 = vst [vmem:[#allocation3 + $0xa8] sm:$0xff] %v1490
          %1565 = vst [vmem:[#allocation3 + $0xb0] sm:$0xff] %v1495
          %1566 = vst [vmem:[#allocation3 + $0xb8] sm:$0xff] %v1500
          %1567 = vst [vmem:[#allocation3 + $0xc0] sm:$0xff] %v1505
          %1568 = vst [vmem:[#allocation3 + $0xc8] sm:$0xff] %v1510
          %1569 = vst [vmem:[#allocation3 + $0xd0] sm:$0xff] %v1515
          %1570 = vst [vmem:[#allocation3 + $0xd8] sm:$0xff] %v1520
          %1571 = vst [vmem:[#allocation3 + $0xe0] sm:$0xff] %v1525
          %1572 = vst [vmem:[#allocation3 + $0xe8] sm:$0xff] %v1530
          %1573 = vst [vmem:[#allocation3 + $0xf0] sm:$0xff] %v1535
          %1574 = vst [vmem:[#allocation3 + $0xf8] sm:$0xff] %v1540
          %v1575 = vld [vmem:[#allocation3] sm:$0xff]
          %v1576 = vld [vmem:[#allocation3 + $0x8] sm:$0xff]
          %v1577 = vld [vmem:[#allocation3 + $0x10] sm:$0xff]
          %v1578 = vld [vmem:[#allocation3 + $0x18] sm:$0xff]
          %v1579 = vld [vmem:[#allocation3 + $0x20] sm:$0xff]
          %v1580 = vld [vmem:[#allocation3 + $0x28] sm:$0xff]
          %v1581 = vld [vmem:[#allocation3 + $0x30] sm:$0xff]
          %v1582 = vld [vmem:[#allocation3 + $0x38] sm:$0xff]
          %v1583 = vld [vmem:[#allocation3 + $0x40] sm:$0xff]
          %v1584 = vld [vmem:[#allocation3 + $0x48] sm:$0xff]
          %v1585 = vld [vmem:[#allocation3 + $0x50] sm:$0xff]
          %v1586 = vld [vmem:[#allocation3 + $0x58] sm:$0xff]
          %v1587 = vld [vmem:[#allocation3 + $0x60] sm:$0xff]
          %v1588 = vld [vmem:[#allocation3 + $0x68] sm:$0xff]
          %v1589 = vld [vmem:[#allocation3 + $0x70] sm:$0xff]
          %v1590 = vld [vmem:[#allocation3 + $0x78] sm:$0xff]
          %v1591 = vld [vmem:[#allocation3 + $0x80] sm:$0xff]
          %v1592 = vld [vmem:[#allocation3 + $0x88] sm:$0xff]
          %v1593 = vld [vmem:[#allocation3 + $0x90] sm:$0xff]
          %v1594 = vld [vmem:[#allocation3 + $0x98] sm:$0xff]
          %v1595 = vld [vmem:[#allocation3 + $0xa0] sm:$0xff]
          %v1596 = vld [vmem:[#allocation3 + $0xa8] sm:$0xff]
          %v1597 = vld [vmem:[#allocation3 + $0xb0] sm:$0xff]
          %v1598 = vld [vmem:[#allocation3 + $0xb8] sm:$0xff]
          %v1599 = vld [vmem:[#allocation3 + $0xc0] sm:$0xff]
          %v1600 = vld [vmem:[#allocation3 + $0xc8] sm:$0xff]
          %v1601 = vld [vmem:[#allocation3 + $0xd0] sm:$0xff]
          %v1602 = vld [vmem:[#allocation3 + $0xd8] sm:$0xff]
          %v1603 = vld [vmem:[#allocation3 + $0xe0] sm:$0xff]
          %v1604 = vld [vmem:[#allocation3 + $0xe8] sm:$0xff]
          %v1605 = vld [vmem:[#allocation3 + $0xf0] sm:$0xff]
          %v1606 = vld [vmem:[#allocation3 + $0xf8] sm:$0xff]
          %1607 = vmatprep.subr.mxu0 0.0
          %1608 = vmatpush1.msra.mxu0 %v1575
          %1609 = vmatprep.subr.mxu0 0.0
          %1610 = vmatpush1.msra.mxu0 %v1576
          %1611 = vmatprep.subr.mxu0 0.0
          %1612 = vmatpush1.msra.mxu0 %v1577
          %1613 = vmatprep.subr.mxu0 0.0
          %1614 = vmatpush1.msra.mxu0 %v1578
          %1615 = vmatprep.subr.mxu0 0.0
          %1616 = vmatpush1.msra.mxu0 %v1579
          %1617 = vmatprep.subr.mxu0 0.0
          %1618 = vmatpush1.msra.mxu0 %v1580
          %1619 = vmatprep.subr.mxu0 0.0
          %1620 = vmatpush1.msra.mxu0 %v1581
          %1621 = vmatprep.subr.mxu0 0.0
          %1622 = vmatpush1.msra.mxu0 %v1582
          %1623 = vmatprep.subr.mxu0 0.0
          %1624 = vmatpush1.msra.mxu0 %v1583
          %1625 = vmatprep.subr.mxu0 0.0
          %1626 = vmatpush1.msra.mxu0 %v1584
          %1627 = vmatprep.subr.mxu0 0.0
          %1628 = vmatpush1.msra.mxu0 %v1585
          %1629 = vmatprep.subr.mxu0 0.0
          %1630 = vmatpush1.msra.mxu0 %v1586
          %1631 = vmatprep.subr.mxu0 0.0
          %1632 = vmatpush1.msra.mxu0 %v1587
          %1633 = vmatprep.subr.mxu0 0.0
          %1634 = vmatpush1.msra.mxu0 %v1588
          %1635 = vmatprep.subr.mxu0 0.0
          %1636 = vmatpush1.msra.mxu0 %v1589
          %1637 = vmatprep.subr.mxu0 0.0
          %1638 = vmatpush1.msra.mxu0 %v1590
          %1639 = vmatprep.subr.mxu0 0.0
          %1640 = vmatpush1.msra.mxu0 %v1591
          %1641 = vmatprep.subr.mxu0 0.0
          %1642 = vmatpush1.msra.mxu0 %v1592
          %1643 = vmatprep.subr.mxu0 0.0
          %1644 = vmatpush1.msra.mxu0 %v1593
          %1645 = vmatprep.subr.mxu0 0.0
          %1646 = vmatpush1.msra.mxu0 %v1594
          %1647 = vmatprep.subr.mxu0 0.0
          %1648 = vmatpush1.msra.mxu0 %v1595
          %1649 = vmatprep.subr.mxu0 0.0
          %1650 = vmatpush1.msra.mxu0 %v1596
          %1651 = vmatprep.subr.mxu0 0.0
          %1652 = vmatpush1.msra.mxu0 %v1597
          %1653 = vmatprep.subr.mxu0 0.0
          %1654 = vmatpush1.msra.mxu0 %v1598
          %1655 = vmatprep.subr.mxu0 0.0
          %1656 = vmatpush1.msra.mxu0 %v1599
          %1657 = vmatprep.subr.mxu0 0.0
          %1658 = vmatpush1.msra.mxu0 %v1600
          %1659 = vmatprep.subr.mxu0 0.0
          %1660 = vmatpush1.msra.mxu0 %v1601
          %1661 = vmatprep.subr.mxu0 0.0
          %1662 = vmatpush1.msra.mxu0 %v1602
          %1663 = vmatprep.subr.mxu0 0.0
          %1664 = vmatpush1.msra.mxu0 %v1603
          %1665 = vmatprep.subr.mxu0 0.0
          %1666 = vmatpush1.msra.mxu0 %v1604
          %1667 = vmatprep.subr.mxu0 0.0
          %1668 = vmatpush1.msra.mxu0 %v1605
          %1669 = vmatprep.subr.mxu0 0.0
          %1670 = vmatpush1.msra.mxu0 %v1606
          %1671 = vmatprep.mubr.f32.mxu0 %v573
          %1672 = vmatmul.mubr.f32.gmra.mrb[0].mxu0 %v572
          %v1673 = vpop.f32.mrb[0].mxu0
          %v1674 = vadd.f32 0.0, %v1673
          %v1675 = vpop.f32.mrb[0].mxu0
          %1676 = vmatprep.mubr.f32.mxu0 %v575
          %1677 = vmatmul.mubr.f32.gmra.mrb[0].mxu0 %v574
          %v1678 = vpop.f32.mrb[0].mxu0
          %v1679 = vadd.f32 0.0, %v1678
          %v1680 = vpop.f32.mrb[0].mxu0
          %1681 = vmatprep.mubr.f32.mxu0 %v577
          %1682 = vmatmul.mubr.f32.gmra.mrb[0].mxu0 %v576
          %v1683 = vpop.f32.mrb[0].mxu0
          %v1684 = vadd.f32 0.0, %v1683
          %v1685 = vpop.f32.mrb[0].mxu0
          %1686 = vmatprep.mubr.f32.mxu0 %v579
          %1687 = vmatmul.mubr.f32.gmra.mrb[0].mxu0 %v578
          %v1688 = vpop.f32.mrb[0].mxu0
          %v1689 = vadd.f32 0.0, %v1688
          %v1690 = vpop.f32.mrb[0].mxu0
          %1691 = vmatprep.mubr.f32.mxu0 %v581
          %1692 = vmatmul.mubr.f32.gmra.mrb[0].mxu0 %v580
          %v1693 = vpop.f32.mrb[0].mxu0
          %v1694 = vadd.f32 0.0, %v1693
          %v1695 = vpop.f32.mrb[0].mxu0
          %1696 = vmatprep.mubr.f32.mxu0 %v583
          %1697 = vmatmul.mubr.f32.gmra.mrb[0].mxu0 %v582
          %v1698 = vpop.f32.mrb[0].mxu0
          %v1699 = vadd.f32 0.0, %v1698
          %v1700 = vpop.f32.mrb[0].mxu0
          %1701 = vmatprep.mubr.f32.mxu0 %v585
          %1702 = vmatmul.mubr.f32.gmra.mrb[0].mxu0 %v584
          %v1703 = vpop.f32.mrb[0].mxu0
          %v1704 = vadd.f32 0.0, %v1703
          %v1705 = vpop.f32.mrb[0].mxu0
          %1706 = vmatprep.mubr.f32.mxu0 %v587
          %1707 = vmatmul.mubr.f32.gmra.mrb[0].mxu0 %v586
          %v1708 = vpop.f32.mrb[0].mxu0
          %v1709 = vadd.f32 0.0, %v1708
          %v1710 = vpop.f32.mrb[0].mxu0
          %1711 = vmatprep.mubr.f32.mxu0 %v589
          %1712 = vmatmul.mubr.f32.gmra.mrb[0].mxu0 %v588
          %v1713 = vpop.f32.mrb[0].mxu0
          %v1714 = vadd.f32 0.0, %v1713
          %v1715 = vpop.f32.mrb[0].mxu0
          %1716 = vmatprep.mubr.f32.mxu0 %v591
          %1717 = vmatmul.mubr.f32.gmra.mrb[0].mxu0 %v590
          %v1718 = vpop.f32.mrb[0].mxu0
          %v1719 = vadd.f32 0.0, %v1718
          %v1720 = vpop.f32.mrb[0].mxu0
          %1721 = vmatprep.mubr.f32.mxu0 %v593
          %1722 = vmatmul.mubr.f32.gmra.mrb[0].mxu0 %v592
          %v1723 = vpop.f32.mrb[0].mxu0
          %v1724 = vadd.f32 0.0, %v1723
          %v1725 = vpop.f32.mrb[0].mxu0
          %1726 = vmatprep.mubr.f32.mxu0 %v595
          %1727 = vmatmul.mubr.f32.gmra.mrb[0].mxu0 %v594
          %v1728 = vpop.f32.mrb[0].mxu0
          %v1729 = vadd.f32 0.0, %v1728
          %v1730 = vpop.f32.mrb[0].mxu0
          %1731 = vmatprep.mubr.f32.mxu0 %v597
          %1732 = vmatmul.mubr.f32.gmra.mrb[0].mxu0 %v596
          %v1733 = vpop.f32.mrb[0].mxu0
          %v1734 = vadd.f32 0.0, %v1733
          %v1735 = vpop.f32.mrb[0].mxu0
          %1736 = vmatprep.mubr.f32.mxu0 %v599
          %1737 = vmatmul.mubr.f32.gmra.mrb[0].mxu0 %v598
          %v1738 = vpop.f32.mrb[0].mxu0
          %v1739 = vadd.f32 0.0, %v1738
          %v1740 = vpop.f32.mrb[0].mxu0
          %1741 = vmatprep.mubr.f32.mxu0 %v601
          %1742 = vmatmul.mubr.f32.gmra.mrb[0].mxu0 %v600
          %v1743 = vpop.f32.mrb[0].mxu0
          %v1744 = vadd.f32 0.0, %v1743
          %v1745 = vpop.f32.mrb[0].mxu0
          %1746 = vmatprep.mubr.f32.mxu0 %v603
          %1747 = vmatmul.mubr.f32.gmra.mrb[0].mxu0 %v602
          %v1748 = vpop.f32.mrb[0].mxu0
          %v1749 = vadd.f32 0.0, %v1748
          %v1750 = vpop.f32.mrb[0].mxu0
          %1751 = vmatprep.mubr.f32.mxu0 %v605
          %1752 = vmatmul.mubr.f32.gmra.mrb[0].mxu0 %v604
          %v1753 = vpop.f32.mrb[0].mxu0
          %v1754 = vadd.f32 0.0, %v1753
          %v1755 = vpop.f32.mrb[0].mxu0
          %1756 = vmatprep.mubr.f32.mxu0 %v607
          %1757 = vmatmul.mubr.f32.gmra.mrb[0].mxu0 %v606
          %v1758 = vpop.f32.mrb[0].mxu0
          %v1759 = vadd.f32 0.0, %v1758
          %v1760 = vpop.f32.mrb[0].mxu0
          %1761 = vmatprep.mubr.f32.mxu0 %v609
          %1762 = vmatmul.mubr.f32.gmra.mrb[0].mxu0 %v608
          %v1763 = vpop.f32.mrb[0].mxu0
          %v1764 = vadd.f32 0.0, %v1763
          %v1765 = vpop.f32.mrb[0].mxu0
          %1766 = vmatprep.mubr.f32.mxu0 %v611
          %1767 = vmatmul.mubr.f32.gmra.mrb[0].mxu0 %v610
          %v1768 = vpop.f32.mrb[0].mxu0
          %v1769 = vadd.f32 0.0, %v1768
          %v1770 = vpop.f32.mrb[0].mxu0
          %1771 = vmatprep.mubr.f32.mxu0 %v613
          %1772 = vmatmul.mubr.f32.gmra.mrb[0].mxu0 %v612
          %v1773 = vpop.f32.mrb[0].mxu0
          %v1774 = vadd.f32 0.0, %v1773
          %v1775 = vpop.f32.mrb[0].mxu0
          %1776 = vmatprep.mubr.f32.mxu0 %v615
          %1777 = vmatmul.mubr.f32.gmra.mrb[0].mxu0 %v614
          %v1778 = vpop.f32.mrb[0].mxu0
          %v1779 = vadd.f32 0.0, %v1778
          %v1780 = vpop.f32.mrb[0].mxu0
          %1781 = vmatprep.mubr.f32.mxu0 %v617
          %1782 = vmatmul.mubr.f32.gmra.mrb[0].mxu0 %v616
          %v1783 = vpop.f32.mrb[0].mxu0
          %v1784 = vadd.f32 0.0, %v1783
          %v1785 = vpop.f32.mrb[0].mxu0
          %1786 = vmatprep.mubr.f32.mxu0 %v619
          %1787 = vmatmul.mubr.f32.gmra.mrb[0].mxu0 %v618
          %v1788 = vpop.f32.mrb[0].mxu0
          %v1789 = vadd.f32 0.0, %v1788
          %v1790 = vpop.f32.mrb[0].mxu0
          %1791 = vmatprep.mubr.f32.mxu0 %v621
          %1792 = vmatmul.mubr.f32.gmra.mrb[0].mxu0 %v620
          %v1793 = vpop.f32.mrb[0].mxu0
          %v1794 = vadd.f32 0.0, %v1793
          %v1795 = vpop.f32.mrb[0].mxu0
          %1796 = vmatprep.mubr.f32.mxu0 %v623
          %1797 = vmatmul.mubr.f32.gmra.mrb[0].mxu0 %v622
          %v1798 = vpop.f32.mrb[0].mxu0
          %v1799 = vadd.f32 0.0, %v1798
          %v1800 = vpop.f32.mrb[0].mxu0
          %1801 = vmatprep.mubr.f32.mxu0 %v625
          %1802 = vmatmul.mubr.f32.gmra.mrb[0].mxu0 %v624
          %v1803 = vpop.f32.mrb[0].mxu0
          %v1804 = vadd.f32 0.0, %v1803
          %v1805 = vpop.f32.mrb[0].mxu0
          %1806 = vmatprep.mubr.f32.mxu0 %v627
          %1807 = vmatmul.mubr.f32.gmra.mrb[0].mxu0 %v626
          %v1808 = vpop.f32.mrb[0].mxu0
          %v1809 = vadd.f32 0.0, %v1808
          %v1810 = vpop.f32.mrb[0].mxu0
          %1811 = vmatprep.mubr.f32.mxu0 %v629
          %1812 = vmatmul.mubr.f32.gmra.mrb[0].mxu0 %v628
          %v1813 = vpop.f32.mrb[0].mxu0
          %v1814 = vadd.f32 0.0, %v1813
          %v1815 = vpop.f32.mrb[0].mxu0
          %1816 = vmatprep.mubr.f32.mxu0 %v631
          %1817 = vmatmul.mubr.f32.gmra.mrb[0].mxu0 %v630
          %v1818 = vpop.f32.mrb[0].mxu0
          %v1819 = vadd.f32 0.0, %v1818
          %v1820 = vpop.f32.mrb[0].mxu0
          %1821 = vmatprep.mubr.f32.mxu0 %v633
          %1822 = vmatmul.mubr.f32.gmra.mrb[0].mxu0 %v632
          %v1823 = vpop.f32.mrb[0].mxu0
          %v1824 = vadd.f32 0.0, %v1823
          %v1825 = vpop.f32.mrb[0].mxu0
          %1826 = vmatprep.mubr.f32.mxu0 %v635
          %1827 = vmatmul.mubr.f32.gmra.mrb[0].mxu0 %v634
          %v1828 = vpop.f32.mrb[0].mxu0
          %v1829 = vadd.f32 0.0, %v1828
          %v1830 = vpop.f32.mrb[0].mxu0
          %1831 = vdwg.mxu0
          %1832 = vst [vmem:[#allocation3] sm:$0xff] %v1674
          %1833 = vst [vmem:[#allocation3 + $0x8] sm:$0xff] %v1679
          %1834 = vst [vmem:[#allocation3 + $0x10] sm:$0xff] %v1684
          %1835 = vst [vmem:[#allocation3 + $0x18] sm:$0xff] %v1689
          %1836 = vst [vmem:[#allocation3 + $0x20] sm:$0xff] %v1694
          %1837 = vst [vmem:[#allocation3 + $0x28] sm:$0xff] %v1699
          %1838 = vst [vmem:[#allocation3 + $0x30] sm:$0xff] %v1704
          %1839 = vst [vmem:[#allocation3 + $0x38] sm:$0xff] %v1709
          %1840 = vst [vmem:[#allocation3 + $0x40] sm:$0xff] %v1714
          %1841 = vst [vmem:[#allocation3 + $0x48] sm:$0xff] %v1719
          %1842 = vst [vmem:[#allocation3 + $0x50] sm:$0xff] %v1724
          %1843 = vst [vmem:[#allocation3 + $0x58] sm:$0xff] %v1729
          %1844 = vst [vmem:[#allocation3 + $0x60] sm:$0xff] %v1734
          %1845 = vst [vmem:[#allocation3 + $0x68] sm:$0xff] %v1739
          %1846 = vst [vmem:[#allocation3 + $0x70] sm:$0xff] %v1744
          %1847 = vst [vmem:[#allocation3 + $0x78] sm:$0xff] %v1749
          %1848 = vst [vmem:[#allocation3 + $0x80] sm:$0xff] %v1754
          %1849 = vst [vmem:[#allocation3 + $0x88] sm:$0xff] %v1759
          %1850 = vst [vmem:[#allocation3 + $0x90] sm:$0xff] %v1764
          %1851 = vst [vmem:[#allocation3 + $0x98] sm:$0xff] %v1769
          %1852 = vst [vmem:[#allocation3 + $0xa0] sm:$0xff] %v1774
          %1853 = vst [vmem:[#allocation3 + $0xa8] sm:$0xff] %v1779
          %1854 = vst [vmem:[#allocation3 + $0xb0] sm:$0xff] %v1784
          %1855 = vst [vmem:[#allocation3 + $0xb8] sm:$0xff] %v1789
          %1856 = vst [vmem:[#allocation3 + $0xc0] sm:$0xff] %v1794
          %1857 = vst [vmem:[#allocation3 + $0xc8] sm:$0xff] %v1799
          %1858 = vst [vmem:[#allocation3 + $0xd0] sm:$0xff] %v1804
          %1859 = vst [vmem:[#allocation3 + $0xd8] sm:$0xff] %v1809
          %1860 = vst [vmem:[#allocation3 + $0xe0] sm:$0xff] %v1814
          %1861 = vst [vmem:[#allocation3 + $0xe8] sm:$0xff] %v1819
          %1862 = vst [vmem:[#allocation3 + $0xf0] sm:$0xff] %v1824
          %1863 = vst [vmem:[#allocation3 + $0xf8] sm:$0xff] %v1829
          %v1864 = vld [vmem:[#allocation3] sm:$0xff]
          %v1865 = vld [vmem:[#allocation3 + $0x8] sm:$0xff]
          %v1866 = vld [vmem:[#allocation3 + $0x10] sm:$0xff]
          %v1867 = vld [vmem:[#allocation3 + $0x18] sm:$0xff]
          %v1868 = vld [vmem:[#allocation3 + $0x20] sm:$0xff]
          %v1869 = vld [vmem:[#allocation3 + $0x28] sm:$0xff]
          %v1870 = vld [vmem:[#allocation3 + $0x30] sm:$0xff]
          %v1871 = vld [vmem:[#allocation3 + $0x38] sm:$0xff]
          %v1872 = vld [vmem:[#allocation3 + $0x40] sm:$0xff]
          %v1873 = vld [vmem:[#allocation3 + $0x48] sm:$0xff]
          %v1874 = vld [vmem:[#allocation3 + $0x50] sm:$0xff]
          %v1875 = vld [vmem:[#allocation3 + $0x58] sm:$0xff]
          %v1876 = vld [vmem:[#allocation3 + $0x60] sm:$0xff]
          %v1877 = vld [vmem:[#allocation3 + $0x68] sm:$0xff]
          %v1878 = vld [vmem:[#allocation3 + $0x70] sm:$0xff]
          %v1879 = vld [vmem:[#allocation3 + $0x78] sm:$0xff]
          %v1880 = vld [vmem:[#allocation3 + $0x80] sm:$0xff]
          %v1881 = vld [vmem:[#allocation3 + $0x88] sm:$0xff]
          %v1882 = vld [vmem:[#allocation3 + $0x90] sm:$0xff]
          %v1883 = vld [vmem:[#allocation3 + $0x98] sm:$0xff]
          %v1884 = vld [vmem:[#allocation3 + $0xa0] sm:$0xff]
          %v1885 = vld [vmem:[#allocation3 + $0xa8] sm:$0xff]
          %v1886 = vld [vmem:[#allocation3 + $0xb0] sm:$0xff]
          %v1887 = vld [vmem:[#allocation3 + $0xb8] sm:$0xff]
          %v1888 = vld [vmem:[#allocation3 + $0xc0] sm:$0xff]
          %v1889 = vld [vmem:[#allocation3 + $0xc8] sm:$0xff]
          %v1890 = vld [vmem:[#allocation3 + $0xd0] sm:$0xff]
          %v1891 = vld [vmem:[#allocation3 + $0xd8] sm:$0xff]
          %v1892 = vld [vmem:[#allocation3 + $0xe0] sm:$0xff]
          %v1893 = vld [vmem:[#allocation3 + $0xe8] sm:$0xff]
          %v1894 = vld [vmem:[#allocation3 + $0xf0] sm:$0xff]
          %v1895 = vld [vmem:[#allocation3 + $0xf8] sm:$0xff]
          %v1897 = vlaneseq
          %v1898 = vshrl.u32 %v1897, 7
          %v1899 = vsub.s32 0, %v1898
          %v1900 = vrot.slane %v1285, %v1899
          %1902 = vmatprep.subr.mxu0 0.0
          %1903 = vmatpush1.msra.mxu0 %v1269
          %1904 = vmatprep.subr.mxu0 0.0
          %1905 = vmatpush1.msra.mxu0 %v1270
          %1906 = vmatprep.subr.mxu0 0.0
          %1907 = vmatpush1.msra.mxu0 %v1271
          %1908 = vmatprep.subr.mxu0 0.0
          %1909 = vmatpush1.msra.mxu0 %v1272
          %1910 = vmatprep.subr.mxu0 0.0
          %1911 = vmatpush1.msra.mxu0 %v1273
          %1912 = vmatprep.subr.mxu0 0.0
          %1913 = vmatpush1.msra.mxu0 %v1274
          %1914 = vmatprep.subr.mxu0 0.0
          %1915 = vmatpush1.msra.mxu0 %v1275
          %1916 = vmatprep.subr.mxu0 0.0
          %1917 = vmatpush1.msra.mxu0 %v1276
          %1918 = vmatprep.subr.mxu0 0.0
          %1919 = vmatpush1.msra.mxu0 %v1277
          %1920 = vmatprep.subr.mxu0 0.0
          %1921 = vmatpush1.msra.mxu0 %v1278
          %1922 = vmatprep.subr.mxu0 0.0
          %1923 = vmatpush1.msra.mxu0 %v1279
          %1924 = vmatprep.subr.mxu0 0.0
          %1925 = vmatpush1.msra.mxu0 %v1280
          %1926 = vmatprep.subr.mxu0 0.0
          %1927 = vmatpush1.msra.mxu0 %v1281
          %1928 = vmatprep.subr.mxu0 0.0
          %1929 = vmatpush1.msra.mxu0 %v1282
          %1930 = vmatprep.subr.mxu0 0.0
          %1931 = vmatpush1.msra.mxu0 %v1283
          %1932 = vmatprep.subr.mxu0 0.0
          %1933 = vmatpush1.msra.mxu0 %v1284
          %1934 = vmatprep.subr.mxu0 0.0
          %1935 = vmatpush1.msra.mxu0 0.0
          %1936 = vmatprep.subr.mxu0 0.0
          %1937 = vmatpush1.msra.mxu0 0.0
          %1938 = vmatprep.subr.mxu0 0.0
          %1939 = vmatpush1.msra.mxu0 0.0
          %1940 = vmatprep.subr.mxu0 0.0
          %1941 = vmatpush1.msra.mxu0 0.0
          %1942 = vmatprep.subr.mxu0 0.0
          %1943 = vmatpush1.msra.mxu0 0.0
          %1944 = vmatprep.subr.mxu0 0.0
          %1945 = vmatpush1.msra.mxu0 0.0
          %1946 = vmatprep.subr.mxu0 0.0
          %1947 = vmatpush1.msra.mxu0 0.0
          %1948 = vmatprep.subr.mxu0 0.0
          %1949 = vmatpush1.msra.mxu0 0.0
          %1950 = vmatprep.subr.mxu0 0.0
          %1951 = vmatpush1.msra.mxu0 0.0
          %1952 = vmatprep.subr.mxu0 0.0
          %1953 = vmatpush1.msra.mxu0 0.0
          %1954 = vmatprep.subr.mxu0 0.0
          %1955 = vmatpush1.msra.mxu0 0.0
          %1956 = vmatprep.subr.mxu0 0.0
          %1957 = vmatpush1.msra.mxu0 0.0
          %1958 = vmatprep.subr.mxu0 0.0
          %1959 = vmatpush1.msra.mxu0 0.0
          %1960 = vmatprep.subr.mxu0 0.0
          %1961 = vmatpush1.msra.mxu0 0.0
          %1962 = vmatprep.subr.mxu0 0.0
          %1963 = vmatpush1.msra.mxu0 0.0
          %1964 = vmatprep.subr.mxu0 0.0
          %1965 = vmatpush1.msra.mxu0 0.0
          %1966 = vmatprep.mubr.f32.mxu0 0.0
          %1967 = vmatmul.mubr.f32.gmra.mrb[0].mxu0 %v1864
          %v1968 = vpop.f32.mrb[0].mxu0
          %v1969 = vadd.f32 %v1900, %v1968
          %v1970 = vpop.f32.mrb[0].mxu0
          %1971 = vmatprep.mubr.f32.mxu0 0.0
          %1972 = vmatmul.mubr.f32.gmra.mrb[0].mxu0 %v1865
          %v1973 = vpop.f32.mrb[0].mxu0
          %v1974 = vadd.f32 %v1900, %v1973
          %v1975 = vpop.f32.mrb[0].mxu0
          %1976 = vmatprep.mubr.f32.mxu0 0.0
          %1977 = vmatmul.mubr.f32.gmra.mrb[0].mxu0 %v1866
          %v1978 = vpop.f32.mrb[0].mxu0
          %v1979 = vadd.f32 %v1900, %v1978
          %v1980 = vpop.f32.mrb[0].mxu0
          %1981 = vmatprep.mubr.f32.mxu0 0.0
          %1982 = vmatmul.mubr.f32.gmra.mrb[0].mxu0 %v1867
          %v1983 = vpop.f32.mrb[0].mxu0
          %v1984 = vadd.f32 %v1900, %v1983
          %v1985 = vpop.f32.mrb[0].mxu0
          %1986 = vmatprep.mubr.f32.mxu0 0.0
          %1987 = vmatmul.mubr.f32.gmra.mrb[0].mxu0 %v1868
          %v1988 = vpop.f32.mrb[0].mxu0
          %v1989 = vadd.f32 %v1900, %v1988
          %v1990 = vpop.f32.mrb[0].mxu0
          %1991 = vmatprep.mubr.f32.mxu0 0.0
          %1992 = vmatmul.mubr.f32.gmra.mrb[0].mxu0 %v1869
          %v1993 = vpop.f32.mrb[0].mxu0
          %v1994 = vadd.f32 %v1900, %v1993
          %v1995 = vpop.f32.mrb[0].mxu0
          %1996 = vmatprep.mubr.f32.mxu0 0.0
          %1997 = vmatmul.mubr.f32.gmra.mrb[0].mxu0 %v1870
          %v1998 = vpop.f32.mrb[0].mxu0
          %v1999 = vadd.f32 %v1900, %v1998
          %v2000 = vpop.f32.mrb[0].mxu0
          %2001 = vmatprep.mubr.f32.mxu0 0.0
          %2002 = vmatmul.mubr.f32.gmra.mrb[0].mxu0 %v1871
          %v2003 = vpop.f32.mrb[0].mxu0
          %v2004 = vadd.f32 %v1900, %v2003
          %v2005 = vpop.f32.mrb[0].mxu0
          %2006 = vmatprep.mubr.f32.mxu0 0.0
          %2007 = vmatmul.mubr.f32.gmra.mrb[0].mxu0 %v1872
          %v2008 = vpop.f32.mrb[0].mxu0
          %v2009 = vadd.f32 %v1900, %v2008
          %v2010 = vpop.f32.mrb[0].mxu0
          %2011 = vmatprep.mubr.f32.mxu0 0.0
          %2012 = vmatmul.mubr.f32.gmra.mrb[0].mxu0 %v1873
          %v2013 = vpop.f32.mrb[0].mxu0
          %v2014 = vadd.f32 %v1900, %v2013
          %v2015 = vpop.f32.mrb[0].mxu0
          %2016 = vmatprep.mubr.f32.mxu0 0.0
          %2017 = vmatmul.mubr.f32.gmra.mrb[0].mxu0 %v1874
          %v2018 = vpop.f32.mrb[0].mxu0
          %v2019 = vadd.f32 %v1900, %v2018
          %v2020 = vpop.f32.mrb[0].mxu0
          %2021 = vmatprep.mubr.f32.mxu0 0.0
          %2022 = vmatmul.mubr.f32.gmra.mrb[0].mxu0 %v1875
          %v2023 = vpop.f32.mrb[0].mxu0
          %v2024 = vadd.f32 %v1900, %v2023
          %v2025 = vpop.f32.mrb[0].mxu0
          %2026 = vmatprep.mubr.f32.mxu0 0.0
          %2027 = vmatmul.mubr.f32.gmra.mrb[0].mxu0 %v1876
          %v2028 = vpop.f32.mrb[0].mxu0
          %v2029 = vadd.f32 %v1900, %v2028
          %v2030 = vpop.f32.mrb[0].mxu0
          %2031 = vmatprep.mubr.f32.mxu0 0.0
          %2032 = vmatmul.mubr.f32.gmra.mrb[0].mxu0 %v1877
          %v2033 = vpop.f32.mrb[0].mxu0
          %v2034 = vadd.f32 %v1900, %v2033
          %v2035 = vpop.f32.mrb[0].mxu0
          %2036 = vmatprep.mubr.f32.mxu0 0.0
          %2037 = vmatmul.mubr.f32.gmra.mrb[0].mxu0 %v1878
          %v2038 = vpop.f32.mrb[0].mxu0
          %v2039 = vadd.f32 %v1900, %v2038
          %v2040 = vpop.f32.mrb[0].mxu0
          %2041 = vmatprep.mubr.f32.mxu0 0.0
          %2042 = vmatmul.mubr.f32.gmra.mrb[0].mxu0 %v1879
          %v2043 = vpop.f32.mrb[0].mxu0
          %v2044 = vadd.f32 %v1900, %v2043
          %v2045 = vpop.f32.mrb[0].mxu0
          %2046 = vmatprep.mubr.f32.mxu0 0.0
          %2047 = vmatmul.mubr.f32.gmra.mrb[0].mxu0 %v1880
          %v2048 = vpop.f32.mrb[0].mxu0
          %v2049 = vadd.f32 %v1900, %v2048
          %v2050 = vpop.f32.mrb[0].mxu0
          %2051 = vmatprep.mubr.f32.mxu0 0.0
          %2052 = vmatmul.mubr.f32.gmra.mrb[0].mxu0 %v1881
          %v2053 = vpop.f32.mrb[0].mxu0
          %v2054 = vadd.f32 %v1900, %v2053
          %v2055 = vpop.f32.mrb[0].mxu0
          %2056 = vmatprep.mubr.f32.mxu0 0.0
          %2057 = vmatmul.mubr.f32.gmra.mrb[0].mxu0 %v1882
          %v2058 = vpop.f32.mrb[0].mxu0
          %v2059 = vadd.f32 %v1900, %v2058
          %v2060 = vpop.f32.mrb[0].mxu0
          %2061 = vmatprep.mubr.f32.mxu0 0.0
          %2062 = vmatmul.mubr.f32.gmra.mrb[0].mxu0 %v1883
          %v2063 = vpop.f32.mrb[0].mxu0
          %v2064 = vadd.f32 %v1900, %v2063
          %v2065 = vpop.f32.mrb[0].mxu0
          %2066 = vmatprep.mubr.f32.mxu0 0.0
          %2067 = vmatmul.mubr.f32.gmra.mrb[0].mxu0 %v1884
          %v2068 = vpop.f32.mrb[0].mxu0
          %v2069 = vadd.f32 %v1900, %v2068
          %v2070 = vpop.f32.mrb[0].mxu0
          %2071 = vmatprep.mubr.f32.mxu0 0.0
          %2072 = vmatmul.mubr.f32.gmra.mrb[0].mxu0 %v1885
          %v2073 = vpop.f32.mrb[0].mxu0
          %v2074 = vadd.f32 %v1900, %v2073
          %v2075 = vpop.f32.mrb[0].mxu0
          %2076 = vmatprep.mubr.f32.mxu0 0.0
          %2077 = vmatmul.mubr.f32.gmra.mrb[0].mxu0 %v1886
          %v2078 = vpop.f32.mrb[0].mxu0
          %v2079 = vadd.f32 %v1900, %v2078
          %v2080 = vpop.f32.mrb[0].mxu0
          %2081 = vmatprep.mubr.f32.mxu0 0.0
          %2082 = vmatmul.mubr.f32.gmra.mrb[0].mxu0 %v1887
          %v2083 = vpop.f32.mrb[0].mxu0
          %v2084 = vadd.f32 %v1900, %v2083
          %v2085 = vpop.f32.mrb[0].mxu0
          %2086 = vmatprep.mubr.f32.mxu0 0.0
          %2087 = vmatmul.mubr.f32.gmra.mrb[0].mxu0 %v1888
          %v2088 = vpop.f32.mrb[0].mxu0
          %v2089 = vadd.f32 %v1900, %v2088
          %v2090 = vpop.f32.mrb[0].mxu0
          %2091 = vmatprep.mubr.f32.mxu0 0.0
          %2092 = vmatmul.mubr.f32.gmra.mrb[0].mxu0 %v1889
          %v2093 = vpop.f32.mrb[0].mxu0
          %v2094 = vadd.f32 %v1900, %v2093
          %v2095 = vpop.f32.mrb[0].mxu0
          %2096 = vmatprep.mubr.f32.mxu0 0.0
          %2097 = vmatmul.mubr.f32.gmra.mrb[0].mxu0 %v1890
          %v2098 = vpop.f32.mrb[0].mxu0
          %v2099 = vadd.f32 %v1900, %v2098
          %v2100 = vpop.f32.mrb[0].mxu0
          %2101 = vmatprep.mubr.f32.mxu0 0.0
          %2102 = vmatmul.mubr.f32.gmra.mrb[0].mxu0 %v1891
          %v2103 = vpop.f32.mrb[0].mxu0
          %v2104 = vadd.f32 %v1900, %v2103
          %v2105 = vpop.f32.mrb[0].mxu0
          %2106 = vmatprep.mubr.f32.mxu0 0.0
          %2107 = vmatmul.mubr.f32.gmra.mrb[0].mxu0 %v1892
          %v2108 = vpop.f32.mrb[0].mxu0
          %v2109 = vadd.f32 %v1900, %v2108
          %v2110 = vpop.f32.mrb[0].mxu0
          %2111 = vmatprep.mubr.f32.mxu0 0.0
          %2112 = vmatmul.mubr.f32.gmra.mrb[0].mxu0 %v1893
          %v2113 = vpop.f32.mrb[0].mxu0
          %v2114 = vadd.f32 %v1900, %v2113
          %v2115 = vpop.f32.mrb[0].mxu0
          %2116 = vmatprep.mubr.f32.mxu0 0.0
          %2117 = vmatmul.mubr.f32.gmra.mrb[0].mxu0 %v1894
          %v2118 = vpop.f32.mrb[0].mxu0
          %v2119 = vadd.f32 %v1900, %v2118
          %v2120 = vpop.f32.mrb[0].mxu0
          %2121 = vmatprep.mubr.f32.mxu0 0.0
          %2122 = vmatmul.mubr.f32.gmra.mrb[0].mxu0 %v1895
          %v2123 = vpop.f32.mrb[0].mxu0
          %v2124 = vadd.f32 %v1900, %v2123
          %v2125 = vpop.f32.mrb[0].mxu0
          %2126 = vdwg.mxu0
          %2127 = vst [vmem:[#allocation12] sm:$0xff] %v1969
          %2128 = vst [vmem:[#allocation12 + $0x8] sm:$0xff] %v1974
          %2129 = vst [vmem:[#allocation12 + $0x10] sm:$0xff] %v1979
          %2130 = vst [vmem:[#allocation12 + $0x18] sm:$0xff] %v1984
          %2131 = vst [vmem:[#allocation12 + $0x20] sm:$0xff] %v1989
          %2132 = vst [vmem:[#allocation12 + $0x28] sm:$0xff] %v1994
          %2133 = vst [vmem:[#allocation12 + $0x30] sm:$0xff] %v1999
          %2134 = vst [vmem:[#allocation12 + $0x38] sm:$0xff] %v2004
          %2135 = vst [vmem:[#allocation12 + $0x40] sm:$0xff] %v2009
          %2136 = vst [vmem:[#allocation12 + $0x48] sm:$0xff] %v2014
          %2137 = vst [vmem:[#allocation12 + $0x50] sm:$0xff] %v2019
          %2138 = vst [vmem:[#allocation12 + $0x58] sm:$0xff] %v2024
          %2139 = vst [vmem:[#allocation12 + $0x60] sm:$0xff] %v2029
          %2140 = vst [vmem:[#allocation12 + $0x68] sm:$0xff] %v2034
          %2141 = vst [vmem:[#allocation12 + $0x70] sm:$0xff] %v2039
          %2142 = vst [vmem:[#allocation12 + $0x78] sm:$0xff] %v2044
          %2143 = vst [vmem:[#allocation12 + $0x80] sm:$0xff] %v2049
          %2144 = vst [vmem:[#allocation12 + $0x88] sm:$0xff] %v2054
          %2145 = vst [vmem:[#allocation12 + $0x90] sm:$0xff] %v2059
          %2146 = vst [vmem:[#allocation12 + $0x98] sm:$0xff] %v2064
          %2147 = vst [vmem:[#allocation12 + $0xa0] sm:$0xff] %v2069
          %2148 = vst [vmem:[#allocation12 + $0xa8] sm:$0xff] %v2074
          %2149 = vst [vmem:[#allocation12 + $0xb0] sm:$0xff] %v2079
          %2150 = vst [vmem:[#allocation12 + $0xb8] sm:$0xff] %v2084
          %2151 = vst [vmem:[#allocation12 + $0xc0] sm:$0xff] %v2089
          %2152 = vst [vmem:[#allocation12 + $0xc8] sm:$0xff] %v2094
          %2153 = vst [vmem:[#allocation12 + $0xd0] sm:$0xff] %v2099
          %2154 = vst [vmem:[#allocation12 + $0xd8] sm:$0xff] %v2104
          %2155 = vst [vmem:[#allocation12 + $0xe0] sm:$0xff] %v2109
          %2156 = vst [vmem:[#allocation12 + $0xe8] sm:$0xff] %v2114
          %2157 = vst [vmem:[#allocation12 + $0xf0] sm:$0xff] %v2119
          %2158 = vst [vmem:[#allocation12 + $0xf8] sm:$0xff] %v2124
        $region64: #{tpu_custom_call.1} parent=43 // pred_fallthru
          _
        // Predicated region
        $region65: #{tpu_custom_call.1} parent=43 // pred_check
          %p2159 = pneg %p167
        $region66: #{tpu_custom_call.1} parent=43 // pred_check_branch
          %2161 = sbr.rel (%p2159) target = $region68
        $region67: #{tpu_custom_call.1} parent=43 // pred_region
          %s2163 = ssub.s32 4096, 4096
          %2164 = vsyncadd [#allocation6], %s2163
          %s2165 = sshll.u32 [#allocation12], 4
          %s2166 = int_to_ptr.vmem [resolvable:$true] %s2165
          %2171 = dma.vmem_to_hbm [thread:$0]  %s2166, 4096, %s6, [#allocation6], 128, 128, 8
        $region68: #{tpu_custom_call.1} parent=43 // pred_fallthru
          _
        // Predicated region
        $region69: #{tpu_custom_call.1} parent=43 // pred_check
          %p2172 = pneg %p167
        $region70: #{tpu_custom_call.1} parent=43 // pred_check_branch
          %2174 = sbr.rel (%p2172) target = $region72
        $region71: #{tpu_custom_call.1} parent=43 // pred_region
          %2175 = dma.done [#allocation6], 4096
        $region72: #{tpu_custom_call.1} parent=43 // pred_fallthru
          _
      $region44: #{tpu_custom_call.1} parent=5 // pred_fallthru
        _
      %p2176 = scmp.le.s32.totalorder 2, %s18
      // Predicated region
      $region73: #{tpu_custom_call.1} parent=5 // pred_check
        %p2177 = pneg %p2176
      $region74: #{tpu_custom_call.1} parent=5 // pred_check_branch
        %2179 = sbr.rel (%p2177) target = $region76
      $region75: #{tpu_custom_call.1} parent=5 // pred_region
        %s2180 = ssub.s32 %s18, 2
      $region76: #{tpu_custom_call.1} parent=5 // pred_fallthru
        _
    $region6: #{tpu_custom_call.1} parent=1 // loop_footer
      %s22 = sadd.s32 1, %s18
    $region7: #{tpu_custom_call.1} parent=1 // loop_footer_branch
      %17 = sbr.rel target = $region3
    $region8: #{tpu_custom_call.1} parent=1 // loop_exit
      _
    %2181 = vsyncpa [#allocation5], 1
    %s2182 = scalar_lea.sflag [#allocation5], 1
    %2183 = vsyncpa %s2182, 1
    %2184 = vsyncpa [#allocation8], 1
    %2185 = vsyncpa [#allocation11], 1
    %2186 = vsyncpa [#allocation6], 1
    %s2187 = scalar_lea.sflag [#allocation6], 1
    %2188 = vsyncpa %s2187, 1

// kernel: tpu_custom_call.1
$region0: #{tpu_custom_call.1}
  #allocation0 [shape = 'u32[]', space=smem, size = 0x4, offset = 0x4, fixed_abs, tag = 'smem constant byte address 0x4 - core index']
  #allocation1 [shape = 'u32[144,128]{1,0:T(1,128)}', space=vmem, size = 0x12000, scoped, tag = 'internal scratch']
  #allocation2 [shape = 'f32[256,256]{1,0:T(8,128)}', space=vmem, size = 0x40000, scoped, tag = 'scratch operand']
  #allocation3 [shape = 'f32[256,128]{1,0:T(8,128)}', space=vmem, size = 0x20000, scoped, tag = 'scratch operand']
  %s0 = inlined_call_operand.hbm [shape: f32[256,256], index: 0, kind: input, shape index: {}]
  %s1 = inlined_call_operand.hbm [shape: f32[256,128], index: 1, kind: input, shape index: {}]
  %s2 = inlined_call_operand.hbm [shape: f32[128,128], index: 2, kind: input, shape index: {}]
  %s3 = inlined_call_operand.vmem [shape: f32[1,128], index: 3, kind: input, shape index: {}]
  %s4 = inlined_call_operand.hbm [shape: f32[128,128], index: 4, kind: input, shape index: {}]
  %s5 = inlined_call_operand.vmem [shape: f32[1,128], index: 5, kind: input, shape index: {}]
  %s6 = inlined_call_operand.hbm [shape: f32[256,128], index: 6, kind: output, shape index: {}]
  %s7 = sld [smem:[#allocation0]]
  $region77: #{tpu_custom_call.1} parent=0
    _
  %s9 = ssub.s32 1, %s7
  %s10 = scalar_select 0, %s9, %s7
  $region1: #{tpu_custom_call.1} parent=0
    #allocation4 [shape = 'u8[262144]{0}', space=vmem, size = 0x40000, scoped, tag = 'input window, operand 0']
    #allocation5 [shape = 's32[2]{0}', space=sflag, size = 0x8, scoped, tag = 'scoped memory for tpu_custom_call.1']
    #allocation6 [shape = 's32[2]{0}', space=sflag, size = 0x8, scoped, tag = 'scoped memory for tpu_custom_call.1']
    #allocation7 [shape = 'u8[131072]{0}', space=vmem, size = 0x20000, scoped, tag = 'input window, operand 1, single buffered']
    #allocation8 [shape = 's32[1]{0}', space=sflag, size = 0x4, scoped, tag = 'scoped memory for tpu_custom_call.1']
    #allocation9 [shape = 'u8[65536]{0}', space=vmem, size = 0x10000, scoped, tag = 'input window, operand 2, single buffered']
    #allocation10 [shape = 'u8[65536]{0}', space=vmem, size = 0x10000, scoped, tag = 'input window, operand 4, single buffered']
    #allocation11 [shape = 's32[1]{0}', space=sflag, size = 0x4, scoped, tag = 'scoped memory for tpu_custom_call.1']
    #allocation12 [shape = 'u8[131072]{0}', space=vmem, size = 0x20000, scoped, tag = 'output window, operand 0, single buffered']
    %11 = vsyncpa [#allocation5], 0
    %s12 = scalar_lea.sflag [#allocation5], 1
    %13 = vsyncpa %s12, 0
    %14 = vsyncpa [#allocation8], 0
    %15 = vsyncpa [#allocation11], 0
    %16 = vsyncpa [#allocation6], 0
    loop: start=0, step=1, limit=4
    $region2: #{tpu_custom_call.1} parent=1 // loop_pre_header
      _
    $region3: #{tpu_custom_call.1} parent=1 // loop_header
      %s18 = sphi 0, %s22
      %p19 = scmp.ge.s32.totalorder %s18, 4
      %s28 = sphi 0, %s30
      %s31 = sphi 0, %s28
      %s32 = sphi 0, %s31
      %s48 = sphi 0, %s32
      %s52 = sphi 0, %s52
      %s54 = sphi 0, %s52
      %s55 = sphi 0, %s54
      %s69 = sphi 0, %s55
      %s73 = sphi 0, %s73
      %s75 = sphi 0, %s73
      %s76 = sphi 0, %s75
      %s90 = sphi 0, %s76
      %s94 = sphi 0, %s94
      %s96 = sphi 0, %s94
      %s97 = sphi 0, %s96
      %s111 = sphi 0, %s97
      %s115 = sphi 0, %s115
      %s117 = sphi 0, %s115
      %s118 = sphi 0, %s117
      %s132 = sphi 0, %s118
      %s136 = sphi 0, %s136
      %s138 = sphi 0, %s136
      %s139 = sphi 0, %s138
      %s153 = sphi 0, %s139
      %s157 = sphi 0, %s157
      %s159 = sphi 0, %s157
      %s160 = sphi 0, %s159
      %s174 = sphi 0, %s160
    $region4: #{tpu_custom_call.1} parent=1 // loop_header_branch
      %21 = sbr.rel (%p19) target = $region8
    $region5: #{tpu_custom_call.1} parent=1 // loop_body
      %s23 = ssub.s32 %s18, 1
      %s24 = ssub.s32 %s18, 2
      %s25 = sadd.s32 %s18, 1
      %s26 = ssub.s32 %s18, %s25
      %p27 = scmp.eq.s32.totalorder %s26, 0
      %s29 = sadd.s32 %s28, 1
      %s30 = scalar_select %p27, %s28, %s29
      %p33 = pneg %p27
      %p34 = scmp.eq.s32.totalorder %s18, 1
      %p35 = por %p33, %p34
      %p36 = scmp.ne.s32.totalorder %s28, %s31
      %p37 = scmp.eq.s32.totalorder %s18, 0
      %p38 = por %p36, %p37
      %p39 = scmp.ne.s32.totalorder %s28, %s31
      %p40 = scmp.eq.s32.totalorder %s23, 1
      %p41 = por %p39, %p40
      %p42 = scmp.ne.s32.totalorder %s31, %s32
      %p43 = scmp.eq.s32.totalorder %s23, 0
      %p44 = por %p42, %p43
      %p45 = scmp.ne.s32.totalorder %s31, %s32
      %p46 = scmp.eq.s32.totalorder %s24, 1
      %p47 = por %p45, %p46
      %p49 = scmp.ne.s32.totalorder %s32, %s48
      %p50 = scmp.eq.s32.totalorder %s24, 0
      %p51 = por %p49, %p50
      %s53 = sadd.s32 %s52, 1
      %p56 = scmp.eq.s32.totalorder %s18, 1
      %p57 = scmp.ne.s32.totalorder %s52, %s54
      %p58 = scmp.eq.s32.totalorder %s18, 0
      %p59 = por %p57, %p58
      %p60 = scmp.ne.s32.totalorder %s52, %s54
      %p61 = scmp.eq.s32.totalorder %s23, 1
      %p62 = por %p60, %p61
      %p63 = scmp.ne.s32.totalorder %s54, %s55
      %p64 = scmp.eq.s32.totalorder %s23, 0
      %p65 = por %p63, %p64
      %p66 = scmp.ne.s32.totalorder %s54, %s55
      %p67 = scmp.eq.s32.totalorder %s24, 1
      %p68 = por %p66, %p67
      %p70 = scmp.ne.s32.totalorder %s55, %s69
      %p71 = scmp.eq.s32.totalorder %s24, 0
      %p72 = por %p70, %p71
      %s74 = sadd.s32 %s73, 1
      %p77 = scmp.eq.s32.totalorder %s18, 1
      %p78 = scmp.ne.s32.totalorder %s73, %s75
      %p79 = scmp.eq.s32.totalorder %s18, 0
      %p80 = por %p78, %p79
      %p81 = scmp.ne.s32.totalorder %s73, %s75
      %p82 = scmp.eq.s32.totalorder %s23, 1
      %p83 = por %p81, %p82
      %p84 = scmp.ne.s32.totalorder %s75, %s76
      %p85 = scmp.eq.s32.totalorder %s23, 0
      %p86 = por %p84, %p85
      %p87 = scmp.ne.s32.totalorder %s75, %s76
      %p88 = scmp.eq.s32.totalorder %s24, 1
      %p89 = por %p87, %p88
      %p91 = scmp.ne.s32.totalorder %s76, %s90
      %p92 = scmp.eq.s32.totalorder %s24, 0
      %p93 = por %p91, %p92
      %s95 = sadd.s32 %s94, 1
      %p98 = scmp.eq.s32.totalorder %s18, 1
      %p99 = scmp.ne.s32.totalorder %s94, %s96
      %p100 = scmp.eq.s32.totalorder %s18, 0
      %p101 = por %p99, %p100
      %p102 = scmp.ne.s32.totalorder %s94, %s96
      %p103 = scmp.eq.s32.totalorder %s23, 1
      %p104 = por %p102, %p103
      %p105 = scmp.ne.s32.totalorder %s96, %s97
      %p106 = scmp.eq.s32.totalorder %s23, 0
      %p107 = por %p105, %p106
      %p108 = scmp.ne.s32.totalorder %s96, %s97
      %p109 = scmp.eq.s32.totalorder %s24, 1
      %p110 = por %p108, %p109
      %p112 = scmp.ne.s32.totalorder %s97, %s111
      %p113 = scmp.eq.s32.totalorder %s24, 0
      %p114 = por %p112, %p113
      %s116 = sadd.s32 %s115, 1
      %p119 = scmp.eq.s32.totalorder %s18, 1
      %p120 = scmp.ne.s32.totalorder %s115, %s117
      %p121 = scmp.eq.s32.totalorder %s18, 0
      %p122 = por %p120, %p121
      %p123 = scmp.ne.s32.totalorder %s115, %s117
      %p124 = scmp.eq.s32.totalorder %s23, 1
      %p125 = por %p123, %p124
      %p126 = scmp.ne.s32.totalorder %s117, %s118
      %p127 = scmp.eq.s32.totalorder %s23, 0
      %p128 = por %p126, %p127
      %p129 = scmp.ne.s32.totalorder %s117, %s118
      %p130 = scmp.eq.s32.totalorder %s24, 1
      %p131 = por %p129, %p130
      %p133 = scmp.ne.s32.totalorder %s118, %s132
      %p134 = scmp.eq.s32.totalorder %s24, 0
      %p135 = por %p133, %p134
      %s137 = sadd.s32 %s136, 1
      %p140 = scmp.eq.s32.totalorder %s18, 1
      %p141 = scmp.ne.s32.totalorder %s136, %s138
      %p142 = scmp.eq.s32.totalorder %s18, 0
      %p143 = por %p141, %p142
      %p144 = scmp.ne.s32.totalorder %s136, %s138
      %p145 = scmp.eq.s32.totalorder %s23, 1
      %p146 = por %p144, %p145
      %p147 = scmp.ne.s32.totalorder %s138, %s139
      %p148 = scmp.eq.s32.totalorder %s23, 0
      %p149 = por %p147, %p148
      %p150 = scmp.ne.s32.totalorder %s138, %s139
      %p151 = scmp.eq.s32.totalorder %s24, 1
      %p152 = por %p150, %p151
      %p154 = scmp.ne.s32.totalorder %s139, %s153
      %p155 = scmp.eq.s32.totalorder %s24, 0
      %p156 = por %p154, %p155
      %s158 = sadd.s32 %s157, 1
      %p161 = scmp.eq.s32.totalorder %s18, 1
      %p162 = scmp.ne.s32.totalorder %s157, %s159
      %p163 = scmp.eq.s32.totalorder %s18, 0
      %p164 = por %p162, %p163
      %p165 = scmp.ne.s32.totalorder %s157, %s159
      %p166 = scmp.eq.s32.totalorder %s23, 1
      %p167 = por %p165, %p166
      %p168 = scmp.ne.s32.totalorder %s159, %s160
      %p169 = scmp.eq.s32.totalorder %s23, 0
      %p170 = por %p168, %p169
      %p171 = scmp.ne.s32.totalorder %s159, %s160
      %p172 = scmp.eq.s32.totalorder %s24, 1
      %p173 = por %p171, %p172
      %p175 = scmp.ne.s32.totalorder %s160, %s174
      %p176 = scmp.eq.s32.totalorder %s24, 0
      %p177 = por %p175, %p176
      %p178 = scmp.le.s32.totalorder 1, %s18
      %p179 = scmp.lt.s32.totalorder %s18, 3
      %p180 = pnand %p178, %p179
      %p181 = pneg %p180
      // Predicated region
      $region9: #{tpu_custom_call.1} parent=5 // pred_check
        _
      $region10: #{tpu_custom_call.1} parent=5 // pred_check_branch
        %183 = sbr.rel (%p180) target = $region12
      $region11: #{tpu_custom_call.1} parent=5 // pred_region
        %s184 = ssub.s32 %s18, 1
        // Predicated region
        $region13: #{tpu_custom_call.1} parent=11 // pred_check
          %p185 = pneg %p65
        $region14: #{tpu_custom_call.1} parent=11 // pred_check_branch
          %187 = sbr.rel (%p185) target = $region16
        $region15: #{tpu_custom_call.1} parent=11 // pred_region
          %s189 = ssub.s32 4096, 4096
          %190 = vsyncadd [#allocation8], %s189
          %s191 = sshll.u32 [#allocation7], 4
          %s192 = int_to_ptr.vmem [resolvable:$true] %s191
          %197 = dma.hbm_to_vmem [thread:$0]  %s1, 4096, %s192, [#allocation8], 128, 128, 8
        $region16: #{tpu_custom_call.1} parent=11 // pred_fallthru
          _
        // Predicated region
        $region17: #{tpu_custom_call.1} parent=11 // pred_check
          %p198 = pneg %p86
        $region18: #{tpu_custom_call.1} parent=11 // pred_check_branch
          %200 = sbr.rel (%p198) target = $region20
        $region19: #{tpu_custom_call.1} parent=11 // pred_region
          %s202 = ssub.s32 2048, 2048
          %203 = vsyncadd [#allocation8], %s202
          %s204 = sshll.u32 [#allocation9], 4
          %s205 = int_to_ptr.vmem [resolvable:$true] %s204
          %210 = dma.hbm_to_vmem [thread:$0]  %s2, 2048, %s205, [#allocation8], 128, 128, 8
        $region20: #{tpu_custom_call.1} parent=11 // pred_fallthru
          _
        // Predicated region
        $region21: #{tpu_custom_call.1} parent=11 // pred_check
          %p211 = pneg %p107
        $region22: #{tpu_custom_call.1} parent=11 // pred_check_branch
          %213 = sbr.rel (%p211) target = $region24
        $region23: #{tpu_custom_call.1} parent=11 // pred_region
          _
        $region24: #{tpu_custom_call.1} parent=11 // pred_fallthru
          _
        // Predicated region
        $region25: #{tpu_custom_call.1} parent=11 // pred_check
          %p214 = pneg %p128
        $region26: #{tpu_custom_call.1} parent=11 // pred_check_branch
          %216 = sbr.rel (%p214) target = $region28
        $region27: #{tpu_custom_call.1} parent=11 // pred_region
          %s218 = ssub.s32 2048, 2048
          %219 = vsyncadd [#allocation11], %s218
          %s220 = sshll.u32 [#allocation10], 4
          %s221 = int_to_ptr.vmem [resolvable:$true] %s220
          %226 = dma.hbm_to_vmem [thread:$0]  %s4, 2048, %s221, [#allocation11], 128, 128, 8
        $region28: #{tpu_custom_call.1} parent=11 // pred_fallthru
          _
        // Predicated region
        $region29: #{tpu_custom_call.1} parent=11 // pred_check
          %p227 = pneg %p149
        $region30: #{tpu_custom_call.1} parent=11 // pred_check_branch
          %229 = sbr.rel (%p227) target = $region32
        $region31: #{tpu_custom_call.1} parent=11 // pred_region
          _
        $region32: #{tpu_custom_call.1} parent=11 // pred_fallthru
          _
      $region12: #{tpu_custom_call.1} parent=5 // pred_fallthru
        _
      %p230 = scmp.lt.s32.totalorder %s18, 2
      // Predicated region
      $region33: #{tpu_custom_call.1} parent=5 // pred_check
        %p231 = pneg %p230
      $region34: #{tpu_custom_call.1} parent=5 // pred_check_branch
        %233 = sbr.rel (%p231) target = $region36
      $region35: #{tpu_custom_call.1} parent=5 // pred_region
        // Predicated region
        $region37: #{tpu_custom_call.1} parent=35 // pred_check
          %p234 = pneg %p38
        $region38: #{tpu_custom_call.1} parent=35 // pred_check_branch
          %236 = sbr.rel (%p234) target = $region40
        $region39: #{tpu_custom_call.1} parent=35 // pred_region
          %s237 = sand.u32 %s28, 1
          %s238 = scalar_lea.sflag [#allocation5], %s237
          %s239 = sand.u32 %s28, 1
          %s240 = smul.addr %s239, 256
          %s241 = scalar_lea.vmem [#allocation4], %s240
          %s242 = smul.u32 16, %s18
          %s244 = ssub.s32 4096, 4096
          %245 = vsyncadd %s238, %s244
          %s246 = smul.addr %s242, 2
          %s247 = smul.addr %s246, 128
          %s248 = scalar_lea.hbm %s0, %s247
          %s249 = sshll.u32 %s241, 4
          %s250 = int_to_ptr.vmem [resolvable:$true] %s249
          %255 = dma.hbm_to_vmem [thread:$0]  %s248, 4096, %s250, %s238, 256, 256, 16
        $region40: #{tpu_custom_call.1} parent=35 // pred_fallthru
          _
      $region36: #{tpu_custom_call.1} parent=5 // pred_fallthru
        _
      %p256 = scmp.le.s32.totalorder 1, %s18
      %p257 = scmp.lt.s32.totalorder %s18, 3
      %p258 = pnand %p256, %p257
      %p259 = pneg %p258
      // Predicated region
      $region41: #{tpu_custom_call.1} parent=5 // pred_check
        _
      $region42: #{tpu_custom_call.1} parent=5 // pred_check_branch
        %261 = sbr.rel (%p258) target = $region44
      $region43: #{tpu_custom_call.1} parent=5 // pred_region
        %s262 = ssub.s32 %s18, 1
        %s263 = sand.u32 %s31, 1
        %s264 = scalar_lea.sflag [#allocation5], %s263
        %s265 = sand.u32 %s31, 1
        %s266 = smul.addr %s265, 256
        %s267 = scalar_lea.vmem [#allocation4], %s266
        // Predicated region
        $region45: #{tpu_custom_call.1} parent=43 // pred_check
          %p268 = pneg %p44
        $region46: #{tpu_custom_call.1} parent=43 // pred_check_branch
          %270 = sbr.rel (%p268) target = $region48
        $region47: #{tpu_custom_call.1} parent=43 // pred_region
          %271 = dma.done %s264, 4096
        $region48: #{tpu_custom_call.1} parent=43 // pred_fallthru
          _
        // Predicated region
        $region49: #{tpu_custom_call.1} parent=43 // pred_check
          %p272 = pneg %p65
        $region50: #{tpu_custom_call.1} parent=43 // pred_check_branch
          %274 = sbr.rel (%p272) target = $region52
        $region51: #{tpu_custom_call.1} parent=43 // pred_region
          %275 = dma.done [#allocation8], 4096
        $region52: #{tpu_custom_call.1} parent=43 // pred_fallthru
          _
        // Predicated region
        $region53: #{tpu_custom_call.1} parent=43 // pred_check
          %p276 = pneg %p86
        $region54: #{tpu_custom_call.1} parent=43 // pred_check_branch
          %278 = sbr.rel (%p276) target = $region56
        $region55: #{tpu_custom_call.1} parent=43 // pred_region
          %279 = dma.done [#allocation8], 2048
        $region56: #{tpu_custom_call.1} parent=43 // pred_fallthru
          _
        // Predicated region
        $region57: #{tpu_custom_call.1} parent=43 // pred_check
          %p280 = pneg %p128
        $region58: #{tpu_custom_call.1} parent=43 // pred_check_branch
          %282 = sbr.rel (%p280) target = $region60
        $region59: #{tpu_custom_call.1} parent=43 // pred_region
          %283 = dma.done [#allocation11], 2048
        $region60: #{tpu_custom_call.1} parent=43 // pred_fallthru
          _
        %s284 = sand.u32 %s31, 1
        %s285 = scalar_lea.sflag [#allocation5], %s284
        %s286 = sand.u32 %s31, 1
        %s287 = smul.addr %s286, 256
        %s288 = scalar_lea.vmem [#allocation4], %s287
        %p289 = pneg %p44
        %p290 = pneg %p41
        %p291 = pneg %p65
        %p292 = pneg %p62
        %p293 = pneg %p86
        %p294 = pneg %p83
        %p295 = pneg %p107
        %p296 = pneg %p104
        %p297 = pneg %p128
        %p298 = pneg %p125
        %p299 = pneg %p149
        %p300 = pneg %p146
        %p301 = pneg %p170
        %p302 = pneg %p167
        %s303 = smul.u32 16, %s23
        %s304 = smul.u32 %s23, 128
        %v305 = vld [vmem:[%s267] sm:$0xff]
        %v306 = vld [vmem:[%s267 + $0x8] sm:$0xff]
        %v307 = vld [vmem:[%s267 + $0x10] sm:$0xff]
        %v308 = vld [vmem:[%s267 + $0x18] sm:$0xff]
        %v309 = vld [vmem:[%s267 + $0x20] sm:$0xff]
        %v310 = vld [vmem:[%s267 + $0x28] sm:$0xff]
        %v311 = vld [vmem:[%s267 + $0x30] sm:$0xff]
        %v312 = vld [vmem:[%s267 + $0x38] sm:$0xff]
        %v313 = vld [vmem:[%s267 + $0x40] sm:$0xff]
        %v314 = vld [vmem:[%s267 + $0x48] sm:$0xff]
        %v315 = vld [vmem:[%s267 + $0x50] sm:$0xff]
        %v316 = vld [vmem:[%s267 + $0x58] sm:$0xff]
        %v317 = vld [vmem:[%s267 + $0x60] sm:$0xff]
        %v318 = vld [vmem:[%s267 + $0x68] sm:$0xff]
        %v319 = vld [vmem:[%s267 + $0x70] sm:$0xff]
        %v320 = vld [vmem:[%s267 + $0x78] sm:$0xff]
        %v321 = vld [vmem:[%s267 + $0x80] sm:$0xff]
        %v322 = vld [vmem:[%s267 + $0x88] sm:$0xff]
        %v323 = vld [vmem:[%s267 + $0x90] sm:$0xff]
        %v324 = vld [vmem:[%s267 + $0x98] sm:$0xff]
        %v325 = vld [vmem:[%s267 + $0xa0] sm:$0xff]
        %v326 = vld [vmem:[%s267 + $0xa8] sm:$0xff]
        %v327 = vld [vmem:[%s267 + $0xb0] sm:$0xff]
        %v328 = vld [vmem:[%s267 + $0xb8] sm:$0xff]
        %v329 = vld [vmem:[%s267 + $0xc0] sm:$0xff]
        %v330 = vld [vmem:[%s267 + $0xc8] sm:$0xff]
        %v331 = vld [vmem:[%s267 + $0xd0] sm:$0xff]
        %v332 = vld [vmem:[%s267 + $0xd8] sm:$0xff]
        %v333 = vld [vmem:[%s267 + $0xe0] sm:$0xff]
        %v334 = vld [vmem:[%s267 + $0xe8] sm:$0xff]
        %v335 = vld [vmem:[%s267 + $0xf0] sm:$0xff]
        %v336 = vld [vmem:[%s267 + $0xf8] sm:$0xff]
        %s337 = sshra.s32 %s304, 3
        %s338 = sand.u32 %s304, 7
        %s339 = smul.u32 %s337, 2
        %s340 = smul.addr %s339, 8
        %s341 = scalar_lea.vmem [#allocation2], %s340
        %342 = vst [vmem:[%s341] sm:$0xff] %v305
        %343 = vst [vmem:[%s341 + $0x8] sm:$0xff] %v306
        %344 = vst [vmem:[%s341 + $0x10] sm:$0xff] %v307
        %345 = vst [vmem:[%s341 + $0x18] sm:$0xff] %v308
        %346 = vst [vmem:[%s341 + $0x20] sm:$0xff] %v309
        %347 = vst [vmem:[%s341 + $0x28] sm:$0xff] %v310
        %348 = vst [vmem:[%s341 + $0x30] sm:$0xff] %v311
        %349 = vst [vmem:[%s341 + $0x38] sm:$0xff] %v312
        %350 = vst [vmem:[%s341 + $0x40] sm:$0xff] %v313
        %351 = vst [vmem:[%s341 + $0x48] sm:$0xff] %v314
        %352 = vst [vmem:[%s341 + $0x50] sm:$0xff] %v315
        %353 = vst [vmem:[%s341 + $0x58] sm:$0xff] %v316
        %354 = vst [vmem:[%s341 + $0x60] sm:$0xff] %v317
        %355 = vst [vmem:[%s341 + $0x68] sm:$0xff] %v318
        %356 = vst [vmem:[%s341 + $0x70] sm:$0xff] %v319
        %357 = vst [vmem:[%s341 + $0x78] sm:$0xff] %v320
        %358 = vst [vmem:[%s341 + $0x80] sm:$0xff] %v321
        %359 = vst [vmem:[%s341 + $0x88] sm:$0xff] %v322
        %360 = vst [vmem:[%s341 + $0x90] sm:$0xff] %v323
        %361 = vst [vmem:[%s341 + $0x98] sm:$0xff] %v324
        %362 = vst [vmem:[%s341 + $0xa0] sm:$0xff] %v325
        %363 = vst [vmem:[%s341 + $0xa8] sm:$0xff] %v326
        %364 = vst [vmem:[%s341 + $0xb0] sm:$0xff] %v327
        %365 = vst [vmem:[%s341 + $0xb8] sm:$0xff] %v328
        %366 = vst [vmem:[%s341 + $0xc0] sm:$0xff] %v329
        %367 = vst [vmem:[%s341 + $0xc8] sm:$0xff] %v330
        %368 = vst [vmem:[%s341 + $0xd0] sm:$0xff] %v331
        %369 = vst [vmem:[%s341 + $0xd8] sm:$0xff] %v332
        %370 = vst [vmem:[%s341 + $0xe0] sm:$0xff] %v333
        %371 = vst [vmem:[%s341 + $0xe8] sm:$0xff] %v334
        %372 = vst [vmem:[%s341 + $0xf0] sm:$0xff] %v335
        %373 = vst [vmem:[%s341 + $0xf8] sm:$0xff] %v336
        %v374 = vld [vmem:[#allocation7] sm:$0xff]
        %v375 = vld [vmem:[#allocation7 + $0x8] sm:$0xff]
        %v376 = vld [vmem:[#allocation7 + $0x10] sm:$0xff]
        %v377 = vld [vmem:[#allocation7 + $0x18] sm:$0xff]
        %v378 = vld [vmem:[#allocation7 + $0x20] sm:$0xff]
        %v379 = vld [vmem:[#allocation7 + $0x28] sm:$0xff]
        %v380 = vld [vmem:[#allocation7 + $0x30] sm:$0xff]
        %v381 = vld [vmem:[#allocation7 + $0x38] sm:$0xff]
        %v382 = vld [vmem:[#allocation7 + $0x40] sm:$0xff]
        %v383 = vld [vmem:[#allocation7 + $0x48] sm:$0xff]
        %v384 = vld [vmem:[#allocation7 + $0x50] sm:$0xff]
        %v385 = vld [vmem:[#allocation7 + $0x58] sm:$0xff]
        %v386 = vld [vmem:[#allocation7 + $0x60] sm:$0xff]
        %v387 = vld [vmem:[#allocation7 + $0x68] sm:$0xff]
        %v388 = vld [vmem:[#allocation7 + $0x70] sm:$0xff]
        %v389 = vld [vmem:[#allocation7 + $0x78] sm:$0xff]
        %v390 = vld [vmem:[#allocation7 + $0x80] sm:$0xff]
        %v391 = vld [vmem:[#allocation7 + $0x88] sm:$0xff]
        %v392 = vld [vmem:[#allocation7 + $0x90] sm:$0xff]
        %v393 = vld [vmem:[#allocation7 + $0x98] sm:$0xff]
        %v394 = vld [vmem:[#allocation7 + $0xa0] sm:$0xff]
        %v395 = vld [vmem:[#allocation7 + $0xa8] sm:$0xff]
        %v396 = vld [vmem:[#allocation7 + $0xb0] sm:$0xff]
        %v397 = vld [vmem:[#allocation7 + $0xb8] sm:$0xff]
        %v398 = vld [vmem:[#allocation7 + $0xc0] sm:$0xff]
        %v399 = vld [vmem:[#allocation7 + $0xc8] sm:$0xff]
        %v400 = vld [vmem:[#allocation7 + $0xd0] sm:$0xff]
        %v401 = vld [vmem:[#allocation7 + $0xd8] sm:$0xff]
        %v402 = vld [vmem:[#allocation7 + $0xe0] sm:$0xff]
        %v403 = vld [vmem:[#allocation7 + $0xe8] sm:$0xff]
        %v404 = vld [vmem:[#allocation7 + $0xf0] sm:$0xff]
        %v405 = vld [vmem:[#allocation7 + $0xf8] sm:$0xff]
        %406 = vmatprep.subr.mxu0 0.0
        %407 = vmatpush1.msra.mxu0 %v374
        %408 = vmatprep.subr.mxu0 0.0
        %409 = vmatpush1.msra.mxu0 %v375
        %410 = vmatprep.subr.mxu0 0.0
        %411 = vmatpush1.msra.mxu0 %v376
        %412 = vmatprep.subr.mxu0 0.0
        %413 = vmatpush1.msra.mxu0 %v377
        %414 = vmatprep.subr.mxu0 0.0
        %415 = vmatpush1.msra.mxu0 %v378
        %416 = vmatprep.subr.mxu0 0.0
        %417 = vmatpush1.msra.mxu0 %v379
        %418 = vmatprep.subr.mxu0 0.0
        %419 = vmatpush1.msra.mxu0 %v380
        %420 = vmatprep.subr.mxu0 0.0
        %421 = vmatpush1.msra.mxu0 %v381
        %422 = vmatprep.subr.mxu0 0.0
        %423 = vmatpush1.msra.mxu0 %v382
        %424 = vmatprep.subr.mxu0 0.0
        %425 = vmatpush1.msra.mxu0 %v383
        %426 = vmatprep.subr.mxu0 0.0
        %427 = vmatpush1.msra.mxu0 %v384
        %428 = vmatprep.subr.mxu0 0.0
        %429 = vmatpush1.msra.mxu0 %v385
        %430 = vmatprep.subr.mxu0 0.0
        %431 = vmatpush1.msra.mxu0 %v386
        %432 = vmatprep.subr.mxu0 0.0
        %433 = vmatpush1.msra.mxu0 %v387
        %434 = vmatprep.subr.mxu0 0.0
        %435 = vmatpush1.msra.mxu0 %v388
        %436 = vmatprep.subr.mxu0 0.0
        %437 = vmatpush1.msra.mxu0 %v389
        %438 = vmatprep.subr.mxu0 0.0
        %439 = vmatpush1.msra.mxu0 %v390
        %440 = vmatprep.subr.mxu0 0.0
        %441 = vmatpush1.msra.mxu0 %v391
        %442 = vmatprep.subr.mxu0 0.0
        %443 = vmatpush1.msra.mxu0 %v392
        %444 = vmatprep.subr.mxu0 0.0
        %445 = vmatpush1.msra.mxu0 %v393
        %446 = vmatprep.subr.mxu0 0.0
        %447 = vmatpush1.msra.mxu0 %v394
        %448 = vmatprep.subr.mxu0 0.0
        %449 = vmatpush1.msra.mxu0 %v395
        %450 = vmatprep.subr.mxu0 0.0
        %451 = vmatpush1.msra.mxu0 %v396
        %452 = vmatprep.subr.mxu0 0.0
        %453 = vmatpush1.msra.mxu0 %v397
        %454 = vmatprep.subr.mxu0 0.0
        %455 = vmatpush1.msra.mxu0 %v398
        %456 = vmatprep.subr.mxu0 0.0
        %457 = vmatpush1.msra.mxu0 %v399
        %458 = vmatprep.subr.mxu0 0.0
        %459 = vmatpush1.msra.mxu0 %v400
        %460 = vmatprep.subr.mxu0 0.0
        %461 = vmatpush1.msra.mxu0 %v401
        %462 = vmatprep.subr.mxu0 0.0
        %463 = vmatpush1.msra.mxu0 %v402
        %464 = vmatprep.subr.mxu0 0.0
        %465 = vmatpush1.msra.mxu0 %v403
        %466 = vmatprep.subr.mxu0 0.0
        %467 = vmatpush1.msra.mxu0 %v404
        %468 = vmatprep.subr.mxu0 0.0
        %469 = vmatpush1.msra.mxu0 %v405
        %470 = vmatprep.mubr.f32.mxu0 %v306
        %471 = vmatmul.mubr.f32.gmra.mrb[0].mxu0 %v305
        %v472 = vpop.f32.mrb[0].mxu0
        %v473 = vadd.f32 0.0, %v472
        %v474 = vpop.f32.mrb[0].mxu0
        %475 = vmatprep.mubr.f32.mxu0 %v308
        %476 = vmatmul.mubr.f32.gmra.mrb[0].mxu0 %v307
        %v477 = vpop.f32.mrb[0].mxu0
        %v478 = vadd.f32 0.0, %v477
        %v479 = vpop.f32.mrb[0].mxu0
        %480 = vmatprep.mubr.f32.mxu0 %v310
        %481 = vmatmul.mubr.f32.gmra.mrb[0].mxu0 %v309
        %v482 = vpop.f32.mrb[0].mxu0
        %v483 = vadd.f32 0.0, %v482
        %v484 = vpop.f32.mrb[0].mxu0
        %485 = vmatprep.mubr.f32.mxu0 %v312
        %486 = vmatmul.mubr.f32.gmra.mrb[0].mxu0 %v311
        %v487 = vpop.f32.mrb[0].mxu0
        %v488 = vadd.f32 0.0, %v487
        %v489 = vpop.f32.mrb[0].mxu0
        %490 = vmatprep.mubr.f32.mxu0 %v314
        %491 = vmatmul.mubr.f32.gmra.mrb[0].mxu0 %v313
        %v492 = vpop.f32.mrb[0].mxu0
        %v493 = vadd.f32 0.0, %v492
        %v494 = vpop.f32.mrb[0].mxu0
        %495 = vmatprep.mubr.f32.mxu0 %v316
        %496 = vmatmul.mubr.f32.gmra.mrb[0].mxu0 %v315
        %v497 = vpop.f32.mrb[0].mxu0
        %v498 = vadd.f32 0.0, %v497
        %v499 = vpop.f32.mrb[0].mxu0
        %500 = vmatprep.mubr.f32.mxu0 %v318
        %501 = vmatmul.mubr.f32.gmra.mrb[0].mxu0 %v317
        %v502 = vpop.f32.mrb[0].mxu0
        %v503 = vadd.f32 0.0, %v502
        %v504 = vpop.f32.mrb[0].mxu0
        %505 = vmatprep.mubr.f32.mxu0 %v320
        %506 = vmatmul.mubr.f32.gmra.mrb[0].mxu0 %v319
        %v507 = vpop.f32.mrb[0].mxu0
        %v508 = vadd.f32 0.0, %v507
        %v509 = vpop.f32.mrb[0].mxu0
        %510 = vmatprep.mubr.f32.mxu0 %v322
        %511 = vmatmul.mubr.f32.gmra.mrb[0].mxu0 %v321
        %v512 = vpop.f32.mrb[0].mxu0
        %v513 = vadd.f32 0.0, %v512
        %v514 = vpop.f32.mrb[0].mxu0
        %515 = vmatprep.mubr.f32.mxu0 %v324
        %516 = vmatmul.mubr.f32.gmra.mrb[0].mxu0 %v323
        %v517 = vpop.f32.mrb[0].mxu0
        %v518 = vadd.f32 0.0, %v517
        %v519 = vpop.f32.mrb[0].mxu0
        %520 = vmatprep.mubr.f32.mxu0 %v326
        %521 = vmatmul.mubr.f32.gmra.mrb[0].mxu0 %v325
        %v522 = vpop.f32.mrb[0].mxu0
        %v523 = vadd.f32 0.0, %v522
        %v524 = vpop.f32.mrb[0].mxu0
        %525 = vmatprep.mubr.f32.mxu0 %v328
        %526 = vmatmul.mubr.f32.gmra.mrb[0].mxu0 %v327
        %v527 = vpop.f32.mrb[0].mxu0
        %v528 = vadd.f32 0.0, %v527
        %v529 = vpop.f32.mrb[0].mxu0
        %530 = vmatprep.mubr.f32.mxu0 %v330
        %531 = vmatmul.mubr.f32.gmra.mrb[0].mxu0 %v329
        %v532 = vpop.f32.mrb[0].mxu0
        %v533 = vadd.f32 0.0, %v532
        %v534 = vpop.f32.mrb[0].mxu0
        %535 = vmatprep.mubr.f32.mxu0 %v332
        %536 = vmatmul.mubr.f32.gmra.mrb[0].mxu0 %v331
        %v537 = vpop.f32.mrb[0].mxu0
        %v538 = vadd.f32 0.0, %v537
        %v539 = vpop.f32.mrb[0].mxu0
        %540 = vmatprep.mubr.f32.mxu0 %v334
        %541 = vmatmul.mubr.f32.gmra.mrb[0].mxu0 %v333
        %v542 = vpop.f32.mrb[0].mxu0
        %v543 = vadd.f32 0.0, %v542
        %v544 = vpop.f32.mrb[0].mxu0
        %545 = vmatprep.mubr.f32.mxu0 %v336
        %546 = vmatmul.mubr.f32.gmra.mrb[0].mxu0 %v335
        %v547 = vpop.f32.mrb[0].mxu0
        %v548 = vadd.f32 0.0, %v547
        %v549 = vpop.f32.mrb[0].mxu0
        %550 = vdwg.mxu0
        %s551 = scalar_lea.vmem [#allocation3], %s304
        %552 = vst [vmem:[%s551] sm:$0xff] %v473
        %553 = vst [vmem:[%s551 + $0x8] sm:$0xff] %v478
        %554 = vst [vmem:[%s551 + $0x10] sm:$0xff] %v483
        %555 = vst [vmem:[%s551 + $0x18] sm:$0xff] %v488
        %556 = vst [vmem:[%s551 + $0x20] sm:$0xff] %v493
        %557 = vst [vmem:[%s551 + $0x28] sm:$0xff] %v498
        %558 = vst [vmem:[%s551 + $0x30] sm:$0xff] %v503
        %559 = vst [vmem:[%s551 + $0x38] sm:$0xff] %v508
        %560 = vst [vmem:[%s551 + $0x40] sm:$0xff] %v513
        %561 = vst [vmem:[%s551 + $0x48] sm:$0xff] %v518
        %562 = vst [vmem:[%s551 + $0x50] sm:$0xff] %v523
        %563 = vst [vmem:[%s551 + $0x58] sm:$0xff] %v528
        %564 = vst [vmem:[%s551 + $0x60] sm:$0xff] %v533
        %565 = vst [vmem:[%s551 + $0x68] sm:$0xff] %v538
        %566 = vst [vmem:[%s551 + $0x70] sm:$0xff] %v543
        %567 = vst [vmem:[%s551 + $0x78] sm:$0xff] %v548
        %p568 = scmp.eq.s32.totalorder %s23, 1
        // Predicated region
        $region61: #{tpu_custom_call.1} parent=43 // pred_check
          %p569 = pneg %p568
        $region62: #{tpu_custom_call.1} parent=43 // pred_check_branch
          %571 = sbr.rel (%p569) target = $region64
        $region63: #{tpu_custom_call.1} parent=43 // pred_region
          %v572 = vld [vmem:[#allocation2] sm:$0xff]
          %v573 = vld [vmem:[#allocation2 + $0x8] sm:$0xff]
          %v574 = vld [vmem:[#allocation2 + $0x10] sm:$0xff]
          %v575 = vld [vmem:[#allocation2 + $0x18] sm:$0xff]
          %v576 = vld [vmem:[#allocation2 + $0x20] sm:$0xff]
          %v577 = vld [vmem:[#allocation2 + $0x28] sm:$0xff]
          %v578 = vld [vmem:[#allocation2 + $0x30] sm:$0xff]
          %v579 = vld [vmem:[#allocation2 + $0x38] sm:$0xff]
          %v580 = vld [vmem:[#allocation2 + $0x40] sm:$0xff]
          %v581 = vld [vmem:[#allocation2 + $0x48] sm:$0xff]
          %v582 = vld [vmem:[#allocation2 + $0x50] sm:$0xff]
          %v583 = vld [vmem:[#allocation2 + $0x58] sm:$0xff]
          %v584 = vld [vmem:[#allocation2 + $0x60] sm:$0xff]
          %v585 = vld [vmem:[#allocation2 + $0x68] sm:$0xff]
          %v586 = vld [vmem:[#allocation2 + $0x70] sm:$0xff]
          %v587 = vld [vmem:[#allocation2 + $0x78] sm:$0xff]
          %v588 = vld [vmem:[#allocation2 + $0x80] sm:$0xff]
          %v589 = vld [vmem:[#allocation2 + $0x88] sm:$0xff]
          %v590 = vld [vmem:[#allocation2 + $0x90] sm:$0xff]
          %v591 = vld [vmem:[#allocation2 + $0x98] sm:$0xff]
          %v592 = vld [vmem:[#allocation2 + $0xa0] sm:$0xff]
          %v593 = vld [vmem:[#allocation2 + $0xa8] sm:$0xff]
          %v594 = vld [vmem:[#allocation2 + $0xb0] sm:$0xff]
          %v595 = vld [vmem:[#allocation2 + $0xb8] sm:$0xff]
          %v596 = vld [vmem:[#allocation2 + $0xc0] sm:$0xff]
          %v597 = vld [vmem:[#allocation2 + $0xc8] sm:$0xff]
          %v598 = vld [vmem:[#allocation2 + $0xd0] sm:$0xff]
          %v599 = vld [vmem:[#allocation2 + $0xd8] sm:$0xff]
          %v600 = vld [vmem:[#allocation2 + $0xe0] sm:$0xff]
          %v601 = vld [vmem:[#allocation2 + $0xe8] sm:$0xff]
          %v602 = vld [vmem:[#allocation2 + $0xf0] sm:$0xff]
          %v603 = vld [vmem:[#allocation2 + $0xf8] sm:$0xff]
          %v604 = vld [vmem:[#allocation2 + $0x100] sm:$0xff]
          %v605 = vld [vmem:[#allocation2 + $0x108] sm:$0xff]
          %v606 = vld [vmem:[#allocation2 + $0x110] sm:$0xff]
          %v607 = vld [vmem:[#allocation2 + $0x118] sm:$0xff]
          %v608 = vld [vmem:[#allocation2 + $0x120] sm:$0xff]
          %v609 = vld [vmem:[#allocation2 + $0x128] sm:$0xff]
          %v610 = vld [vmem:[#allocation2 + $0x130] sm:$0xff]
          %v611 = vld [vmem:[#allocation2 + $0x138] sm:$0xff]
          %v612 = vld [vmem:[#allocation2 + $0x140] sm:$0xff]
          %v613 = vld [vmem:[#allocation2 + $0x148] sm:$0xff]
          %v614 = vld [vmem:[#allocation2 + $0x150] sm:$0xff]
          %v615 = vld [vmem:[#allocation2 + $0x158] sm:$0xff]
          %v616 = vld [vmem:[#allocation2 + $0x160] sm:$0xff]
          %v617 = vld [vmem:[#allocation2 + $0x168] sm:$0xff]
          %v618 = vld [vmem:[#allocation2 + $0x170] sm:$0xff]
          %v619 = vld [vmem:[#allocation2 + $0x178] sm:$0xff]
          %v620 = vld [vmem:[#allocation2 + $0x180] sm:$0xff]
          %v621 = vld [vmem:[#allocation2 + $0x188] sm:$0xff]
          %v622 = vld [vmem:[#allocation2 + $0x190] sm:$0xff]
          %v623 = vld [vmem:[#allocation2 + $0x198] sm:$0xff]
          %v624 = vld [vmem:[#allocation2 + $0x1a0] sm:$0xff]
          %v625 = vld [vmem:[#allocation2 + $0x1a8] sm:$0xff]
          %v626 = vld [vmem:[#allocation2 + $0x1b0] sm:$0xff]
          %v627 = vld [vmem:[#allocation2 + $0x1b8] sm:$0xff]
          %v628 = vld [vmem:[#allocation2 + $0x1c0] sm:$0xff]
          %v629 = vld [vmem:[#allocation2 + $0x1c8] sm:$0xff]
          %v630 = vld [vmem:[#allocation2 + $0x1d0] sm:$0xff]
          %v631 = vld [vmem:[#allocation2 + $0x1d8] sm:$0xff]
          %v632 = vld [vmem:[#allocation2 + $0x1e0] sm:$0xff]
          %v633 = vld [vmem:[#allocation2 + $0x1e8] sm:$0xff]
          %v634 = vld [vmem:[#allocation2 + $0x1f0] sm:$0xff]
          %v635 = vld [vmem:[#allocation2 + $0x1f8] sm:$0xff]
          %v636 = vld [vmem:[#allocation9] sm:$0xff]
          %v637 = vld [vmem:[#allocation9 + $0x8] sm:$0xff]
          %v638 = vld [vmem:[#allocation9 + $0x10] sm:$0xff]
          %v639 = vld [vmem:[#allocation9 + $0x18] sm:$0xff]
          %v640 = vld [vmem:[#allocation9 + $0x20] sm:$0xff]
          %v641 = vld [vmem:[#allocation9 + $0x28] sm:$0xff]
          %v642 = vld [vmem:[#allocation9 + $0x30] sm:$0xff]
          %v643 = vld [vmem:[#allocation9 + $0x38] sm:$0xff]
          %v644 = vld [vmem:[#allocation9 + $0x40] sm:$0xff]
          %v645 = vld [vmem:[#allocation9 + $0x48] sm:$0xff]
          %v646 = vld [vmem:[#allocation9 + $0x50] sm:$0xff]
          %v647 = vld [vmem:[#allocation9 + $0x58] sm:$0xff]
          %v648 = vld [vmem:[#allocation9 + $0x60] sm:$0xff]
          %v649 = vld [vmem:[#allocation9 + $0x68] sm:$0xff]
          %v650 = vld [vmem:[#allocation9 + $0x70] sm:$0xff]
          %v651 = vld [vmem:[#allocation9 + $0x78] sm:$0xff]
          %v652 = vld [vmem:[%s3] sm:$0x1]
          %v653 = vld [vmem:[#allocation3] sm:$0xff]
          %v654 = vld [vmem:[#allocation3 + $0x8] sm:$0xff]
          %v655 = vld [vmem:[#allocation3 + $0x10] sm:$0xff]
          %v656 = vld [vmem:[#allocation3 + $0x18] sm:$0xff]
          %v657 = vld [vmem:[#allocation3 + $0x20] sm:$0xff]
          %v658 = vld [vmem:[#allocation3 + $0x28] sm:$0xff]
          %v659 = vld [vmem:[#allocation3 + $0x30] sm:$0xff]
          %v660 = vld [vmem:[#allocation3 + $0x38] sm:$0xff]
          %v661 = vld [vmem:[#allocation3 + $0x40] sm:$0xff]
          %v662 = vld [vmem:[#allocation3 + $0x48] sm:$0xff]
          %v663 = vld [vmem:[#allocation3 + $0x50] sm:$0xff]
          %v664 = vld [vmem:[#allocation3 + $0x58] sm:$0xff]
          %v665 = vld [vmem:[#allocation3 + $0x60] sm:$0xff]
          %v666 = vld [vmem:[#allocation3 + $0x68] sm:$0xff]
          %v667 = vld [vmem:[#allocation3 + $0x70] sm:$0xff]
          %v668 = vld [vmem:[#allocation3 + $0x78] sm:$0xff]
          %v669 = vld [vmem:[#allocation3 + $0x80] sm:$0xff]
          %v670 = vld [vmem:[#allocation3 + $0x88] sm:$0xff]
          %v671 = vld [vmem:[#allocation3 + $0x90] sm:$0xff]
          %v672 = vld [vmem:[#allocation3 + $0x98] sm:$0xff]
          %v673 = vld [vmem:[#allocation3 + $0xa0] sm:$0xff]
          %v674 = vld [vmem:[#allocation3 + $0xa8] sm:$0xff]
          %v675 = vld [vmem:[#allocation3 + $0xb0] sm:$0xff]
          %v676 = vld [vmem:[#allocation3 + $0xb8] sm:$0xff]
          %v677 = vld [vmem:[#allocation3 + $0xc0] sm:$0xff]
          %v678 = vld [vmem:[#allocation3 + $0xc8] sm:$0xff]
          %v679 = vld [vmem:[#allocation3 + $0xd0] sm:$0xff]
          %v680 = vld [vmem:[#allocation3 + $0xd8] sm:$0xff]
          %v681 = vld [vmem:[#allocation3 + $0xe0] sm:$0xff]
          %v682 = vld [vmem:[#allocation3 + $0xe8] sm:$0xff]
          %v683 = vld [vmem:[#allocation3 + $0xf0] sm:$0xff]
          %v684 = vld [vmem:[#allocation3 + $0xf8] sm:$0xff]
          %685 = vmatprep.subr.mxu0 0.0
          %686 = vmatpush1.msra.mxu0 %v653
          %687 = vmatprep.subr.mxu0 0.0
          %688 = vmatpush1.msra.mxu0 %v654
          %689 = vmatprep.subr.mxu0 0.0
          %690 = vmatpush1.msra.mxu0 %v655
          %691 = vmatprep.subr.mxu0 0.0
          %692 = vmatpush1.msra.mxu0 %v656
          %693 = vmatprep.subr.mxu0 0.0
          %694 = vmatpush1.msra.mxu0 %v657
          %695 = vmatprep.subr.mxu0 0.0
          %696 = vmatpush1.msra.mxu0 %v658
          %697 = vmatprep.subr.mxu0 0.0
          %698 = vmatpush1.msra.mxu0 %v659
          %699 = vmatprep.subr.mxu0 0.0
          %700 = vmatpush1.msra.mxu0 %v660
          %701 = vmatprep.subr.mxu0 0.0
          %702 = vmatpush1.msra.mxu0 %v661
          %703 = vmatprep.subr.mxu0 0.0
          %704 = vmatpush1.msra.mxu0 %v662
          %705 = vmatprep.subr.mxu0 0.0
          %706 = vmatpush1.msra.mxu0 %v663
          %707 = vmatprep.subr.mxu0 0.0
          %708 = vmatpush1.msra.mxu0 %v664
          %709 = vmatprep.subr.mxu0 0.0
          %710 = vmatpush1.msra.mxu0 %v665
          %711 = vmatprep.subr.mxu0 0.0
          %712 = vmatpush1.msra.mxu0 %v666
          %713 = vmatprep.subr.mxu0 0.0
          %714 = vmatpush1.msra.mxu0 %v667
          %715 = vmatprep.subr.mxu0 0.0
          %716 = vmatpush1.msra.mxu0 %v668
          %717 = vmatprep.subr.mxu0 0.0
          %718 = vmatpush1.msra.mxu0 %v669
          %719 = vmatprep.subr.mxu0 0.0
          %720 = vmatpush1.msra.mxu0 %v670
          %721 = vmatprep.subr.mxu0 0.0
          %722 = vmatpush1.msra.mxu0 %v671
          %723 = vmatprep.subr.mxu0 0.0
          %724 = vmatpush1.msra.mxu0 %v672
          %725 = vmatprep.subr.mxu0 0.0
          %726 = vmatpush1.msra.mxu0 %v673
          %727 = vmatprep.subr.mxu0 0.0
          %728 = vmatpush1.msra.mxu0 %v674
          %729 = vmatprep.subr.mxu0 0.0
          %730 = vmatpush1.msra.mxu0 %v675
          %731 = vmatprep.subr.mxu0 0.0
          %732 = vmatpush1.msra.mxu0 %v676
          %733 = vmatprep.subr.mxu0 0.0
          %734 = vmatpush1.msra.mxu0 %v677
          %735 = vmatprep.subr.mxu0 0.0
          %736 = vmatpush1.msra.mxu0 %v678
          %737 = vmatprep.subr.mxu0 0.0
          %738 = vmatpush1.msra.mxu0 %v679
          %739 = vmatprep.subr.mxu0 0.0
          %740 = vmatpush1.msra.mxu0 %v680
          %741 = vmatprep.subr.mxu0 0.0
          %742 = vmatpush1.msra.mxu0 %v681
          %743 = vmatprep.subr.mxu0 0.0
          %744 = vmatpush1.msra.mxu0 %v682
          %745 = vmatprep.subr.mxu0 0.0
          %746 = vmatpush1.msra.mxu0 %v683
          %747 = vmatprep.subr.mxu0 0.0
          %748 = vmatpush1.msra.mxu0 %v684
          %749 = vmatprep.mubr.f32.mxu0 %v573
          %750 = vmatmul.mubr.f32.gmra.mrb[0].mxu0 %v572
          %v751 = vpop.f32.mrb[0].mxu0
          %v752 = vadd.f32 0.0, %v751
          %v753 = vpop.f32.mrb[0].mxu0
          %754 = vmatprep.mubr.f32.mxu0 %v575
          %755 = vmatmul.mubr.f32.gmra.mrb[0].mxu0 %v574
          %v756 = vpop.f32.mrb[0].mxu0
          %v757 = vadd.f32 0.0, %v756
          %v758 = vpop.f32.mrb[0].mxu0
          %759 = vmatprep.mubr.f32.mxu0 %v577
          %760 = vmatmul.mubr.f32.gmra.mrb[0].mxu0 %v576
          %v761 = vpop.f32.mrb[0].mxu0
          %v762 = vadd.f32 0.0, %v761
          %v763 = vpop.f32.mrb[0].mxu0
          %764 = vmatprep.mubr.f32.mxu0 %v579
          %765 = vmatmul.mubr.f32.gmra.mrb[0].mxu0 %v578
          %v766 = vpop.f32.mrb[0].mxu0
          %v767 = vadd.f32 0.0, %v766
          %v768 = vpop.f32.mrb[0].mxu0
          %769 = vmatprep.mubr.f32.mxu0 %v581
          %770 = vmatmul.mubr.f32.gmra.mrb[0].mxu0 %v580
          %v771 = vpop.f32.mrb[0].mxu0
          %v772 = vadd.f32 0.0, %v771
          %v773 = vpop.f32.mrb[0].mxu0
          %774 = vmatprep.mubr.f32.mxu0 %v583
          %775 = vmatmul.mubr.f32.gmra.mrb[0].mxu0 %v582
          %v776 = vpop.f32.mrb[0].mxu0
          %v777 = vadd.f32 0.0, %v776
          %v778 = vpop.f32.mrb[0].mxu0
          %779 = vmatprep.mubr.f32.mxu0 %v585
          %780 = vmatmul.mubr.f32.gmra.mrb[0].mxu0 %v584
          %v781 = vpop.f32.mrb[0].mxu0
          %v782 = vadd.f32 0.0, %v781
          %v783 = vpop.f32.mrb[0].mxu0
          %784 = vmatprep.mubr.f32.mxu0 %v587
          %785 = vmatmul.mubr.f32.gmra.mrb[0].mxu0 %v586
          %v786 = vpop.f32.mrb[0].mxu0
          %v787 = vadd.f32 0.0, %v786
          %v788 = vpop.f32.mrb[0].mxu0
          %789 = vmatprep.mubr.f32.mxu0 %v589
          %790 = vmatmul.mubr.f32.gmra.mrb[0].mxu0 %v588
          %v791 = vpop.f32.mrb[0].mxu0
          %v792 = vadd.f32 0.0, %v791
          %v793 = vpop.f32.mrb[0].mxu0
          %794 = vmatprep.mubr.f32.mxu0 %v591
          %795 = vmatmul.mubr.f32.gmra.mrb[0].mxu0 %v590
          %v796 = vpop.f32.mrb[0].mxu0
          %v797 = vadd.f32 0.0, %v796
          %v798 = vpop.f32.mrb[0].mxu0
          %799 = vmatprep.mubr.f32.mxu0 %v593
          %800 = vmatmul.mubr.f32.gmra.mrb[0].mxu0 %v592
          %v801 = vpop.f32.mrb[0].mxu0
          %v802 = vadd.f32 0.0, %v801
          %v803 = vpop.f32.mrb[0].mxu0
          %804 = vmatprep.mubr.f32.mxu0 %v595
          %805 = vmatmul.mubr.f32.gmra.mrb[0].mxu0 %v594
          %v806 = vpop.f32.mrb[0].mxu0
          %v807 = vadd.f32 0.0, %v806
          %v808 = vpop.f32.mrb[0].mxu0
          %809 = vmatprep.mubr.f32.mxu0 %v597
          %810 = vmatmul.mubr.f32.gmra.mrb[0].mxu0 %v596
          %v811 = vpop.f32.mrb[0].mxu0
          %v812 = vadd.f32 0.0, %v811
          %v813 = vpop.f32.mrb[0].mxu0
          %814 = vmatprep.mubr.f32.mxu0 %v599
          %815 = vmatmul.mubr.f32.gmra.mrb[0].mxu0 %v598
          %v816 = vpop.f32.mrb[0].mxu0
          %v817 = vadd.f32 0.0, %v816
          %v818 = vpop.f32.mrb[0].mxu0
          %819 = vmatprep.mubr.f32.mxu0 %v601
          %820 = vmatmul.mubr.f32.gmra.mrb[0].mxu0 %v600
          %v821 = vpop.f32.mrb[0].mxu0
          %v822 = vadd.f32 0.0, %v821
          %v823 = vpop.f32.mrb[0].mxu0
          %824 = vmatprep.mubr.f32.mxu0 %v603
          %825 = vmatmul.mubr.f32.gmra.mrb[0].mxu0 %v602
          %v826 = vpop.f32.mrb[0].mxu0
          %v827 = vadd.f32 0.0, %v826
          %v828 = vpop.f32.mrb[0].mxu0
          %829 = vmatprep.mubr.f32.mxu0 %v605
          %830 = vmatmul.mubr.f32.gmra.mrb[0].mxu0 %v604
          %v831 = vpop.f32.mrb[0].mxu0
          %v832 = vadd.f32 0.0, %v831
          %v833 = vpop.f32.mrb[0].mxu0
          %834 = vmatprep.mubr.f32.mxu0 %v607
          %835 = vmatmul.mubr.f32.gmra.mrb[0].mxu0 %v606
          %v836 = vpop.f32.mrb[0].mxu0
          %v837 = vadd.f32 0.0, %v836
          %v838 = vpop.f32.mrb[0].mxu0
          %839 = vmatprep.mubr.f32.mxu0 %v609
          %840 = vmatmul.mubr.f32.gmra.mrb[0].mxu0 %v608
          %v841 = vpop.f32.mrb[0].mxu0
          %v842 = vadd.f32 0.0, %v841
          %v843 = vpop.f32.mrb[0].mxu0
          %844 = vmatprep.mubr.f32.mxu0 %v611
          %845 = vmatmul.mubr.f32.gmra.mrb[0].mxu0 %v610
          %v846 = vpop.f32.mrb[0].mxu0
          %v847 = vadd.f32 0.0, %v846
          %v848 = vpop.f32.mrb[0].mxu0
          %849 = vmatprep.mubr.f32.mxu0 %v613
          %850 = vmatmul.mubr.f32.gmra.mrb[0].mxu0 %v612
          %v851 = vpop.f32.mrb[0].mxu0
          %v852 = vadd.f32 0.0, %v851
          %v853 = vpop.f32.mrb[0].mxu0
          %854 = vmatprep.mubr.f32.mxu0 %v615
          %855 = vmatmul.mubr.f32.gmra.mrb[0].mxu0 %v614
          %v856 = vpop.f32.mrb[0].mxu0
          %v857 = vadd.f32 0.0, %v856
          %v858 = vpop.f32.mrb[0].mxu0
          %859 = vmatprep.mubr.f32.mxu0 %v617
          %860 = vmatmul.mubr.f32.gmra.mrb[0].mxu0 %v616
          %v861 = vpop.f32.mrb[0].mxu0
          %v862 = vadd.f32 0.0, %v861
          %v863 = vpop.f32.mrb[0].mxu0
          %864 = vmatprep.mubr.f32.mxu0 %v619
          %865 = vmatmul.mubr.f32.gmra.mrb[0].mxu0 %v618
          %v866 = vpop.f32.mrb[0].mxu0
          %v867 = vadd.f32 0.0, %v866
          %v868 = vpop.f32.mrb[0].mxu0
          %869 = vmatprep.mubr.f32.mxu0 %v621
          %870 = vmatmul.mubr.f32.gmra.mrb[0].mxu0 %v620
          %v871 = vpop.f32.mrb[0].mxu0
          %v872 = vadd.f32 0.0, %v871
          %v873 = vpop.f32.mrb[0].mxu0
          %874 = vmatprep.mubr.f32.mxu0 %v623
          %875 = vmatmul.mubr.f32.gmra.mrb[0].mxu0 %v622
          %v876 = vpop.f32.mrb[0].mxu0
          %v877 = vadd.f32 0.0, %v876
          %v878 = vpop.f32.mrb[0].mxu0
          %879 = vmatprep.mubr.f32.mxu0 %v625
          %880 = vmatmul.mubr.f32.gmra.mrb[0].mxu0 %v624
          %v881 = vpop.f32.mrb[0].mxu0
          %v882 = vadd.f32 0.0, %v881
          %v883 = vpop.f32.mrb[0].mxu0
          %884 = vmatprep.mubr.f32.mxu0 %v627
          %885 = vmatmul.mubr.f32.gmra.mrb[0].mxu0 %v626
          %v886 = vpop.f32.mrb[0].mxu0
          %v887 = vadd.f32 0.0, %v886
          %v888 = vpop.f32.mrb[0].mxu0
          %889 = vmatprep.mubr.f32.mxu0 %v629
          %890 = vmatmul.mubr.f32.gmra.mrb[0].mxu0 %v628
          %v891 = vpop.f32.mrb[0].mxu0
          %v892 = vadd.f32 0.0, %v891
          %v893 = vpop.f32.mrb[0].mxu0
          %894 = vmatprep.mubr.f32.mxu0 %v631
          %895 = vmatmul.mubr.f32.gmra.mrb[0].mxu0 %v630
          %v896 = vpop.f32.mrb[0].mxu0
          %v897 = vadd.f32 0.0, %v896
          %v898 = vpop.f32.mrb[0].mxu0
          %899 = vmatprep.mubr.f32.mxu0 %v633
          %900 = vmatmul.mubr.f32.gmra.mrb[0].mxu0 %v632
          %v901 = vpop.f32.mrb[0].mxu0
          %v902 = vadd.f32 0.0, %v901
          %v903 = vpop.f32.mrb[0].mxu0
          %904 = vmatprep.mubr.f32.mxu0 %v635
          %905 = vmatmul.mubr.f32.gmra.mrb[0].mxu0 %v634
          %v906 = vpop.f32.mrb[0].mxu0
          %v907 = vadd.f32 0.0, %v906
          %v908 = vpop.f32.mrb[0].mxu0
          %909 = vdwg.mxu0
          %910 = vst [vmem:[#allocation3] sm:$0xff] %v752
          %911 = vst [vmem:[#allocation3 + $0x8] sm:$0xff] %v757
          %912 = vst [vmem:[#allocation3 + $0x10] sm:$0xff] %v762
          %913 = vst [vmem:[#allocation3 + $0x18] sm:$0xff] %v767
          %914 = vst [vmem:[#allocation3 + $0x20] sm:$0xff] %v772
          %915 = vst [vmem:[#allocation3 + $0x28] sm:$0xff] %v777
          %916 = vst [vmem:[#allocation3 + $0x30] sm:$0xff] %v782
          %917 = vst [vmem:[#allocation3 + $0x38] sm:$0xff] %v787
          %918 = vst [vmem:[#allocation3 + $0x40] sm:$0xff] %v792
          %919 = vst [vmem:[#allocation3 + $0x48] sm:$0xff] %v797
          %920 = vst [vmem:[#allocation3 + $0x50] sm:$0xff] %v802
          %921 = vst [vmem:[#allocation3 + $0x58] sm:$0xff] %v807
          %922 = vst [vmem:[#allocation3 + $0x60] sm:$0xff] %v812
          %923 = vst [vmem:[#allocation3 + $0x68] sm:$0xff] %v817
          %924 = vst [vmem:[#allocation3 + $0x70] sm:$0xff] %v822
          %925 = vst [vmem:[#allocation3 + $0x78] sm:$0xff] %v827
          %926 = vst [vmem:[#allocation3 + $0x80] sm:$0xff] %v832
          %927 = vst [vmem:[#allocation3 + $0x88] sm:$0xff] %v837
          %928 = vst [vmem:[#allocation3 + $0x90] sm:$0xff] %v842
          %929 = vst [vmem:[#allocation3 + $0x98] sm:$0xff] %v847
          %930 = vst [vmem:[#allocation3 + $0xa0] sm:$0xff] %v852
          %931 = vst [vmem:[#allocation3 + $0xa8] sm:$0xff] %v857
          %932 = vst [vmem:[#allocation3 + $0xb0] sm:$0xff] %v862
          %933 = vst [vmem:[#allocation3 + $0xb8] sm:$0xff] %v867
          %934 = vst [vmem:[#allocation3 + $0xc0] sm:$0xff] %v872
          %935 = vst [vmem:[#allocation3 + $0xc8] sm:$0xff] %v877
          %936 = vst [vmem:[#allocation3 + $0xd0] sm:$0xff] %v882
          %937 = vst [vmem:[#allocation3 + $0xd8] sm:$0xff] %v887
          %938 = vst [vmem:[#allocation3 + $0xe0] sm:$0xff] %v892
          %939 = vst [vmem:[#allocation3 + $0xe8] sm:$0xff] %v897
          %940 = vst [vmem:[#allocation3 + $0xf0] sm:$0xff] %v902
          %941 = vst [vmem:[#allocation3 + $0xf8] sm:$0xff] %v907
          %v942 = vld [vmem:[#allocation3] sm:$0xff]
          %v943 = vld [vmem:[#allocation3 + $0x8] sm:$0xff]
          %v944 = vld [vmem:[#allocation3 + $0x10] sm:$0xff]
          %v945 = vld [vmem:[#allocation3 + $0x18] sm:$0xff]
          %v946 = vld [vmem:[#allocation3 + $0x20] sm:$0xff]
          %v947 = vld [vmem:[#allocation3 + $0x28] sm:$0xff]
          %v948 = vld [vmem:[#allocation3 + $0x30] sm:$0xff]
          %v949 = vld [vmem:[#allocation3 + $0x38] sm:$0xff]
          %v950 = vld [vmem:[#allocation3 + $0x40] sm:$0xff]
          %v951 = vld [vmem:[#allocation3 + $0x48] sm:$0xff]
          %v952 = vld [vmem:[#allocation3 + $0x50] sm:$0xff]
          %v953 = vld [vmem:[#allocation3 + $0x58] sm:$0xff]
          %v954 = vld [vmem:[#allocation3 + $0x60] sm:$0xff]
          %v955 = vld [vmem:[#allocation3 + $0x68] sm:$0xff]
          %v956 = vld [vmem:[#allocation3 + $0x70] sm:$0xff]
          %v957 = vld [vmem:[#allocation3 + $0x78] sm:$0xff]
          %v958 = vld [vmem:[#allocation3 + $0x80] sm:$0xff]
          %v959 = vld [vmem:[#allocation3 + $0x88] sm:$0xff]
          %v960 = vld [vmem:[#allocation3 + $0x90] sm:$0xff]
          %v961 = vld [vmem:[#allocation3 + $0x98] sm:$0xff]
          %v962 = vld [vmem:[#allocation3 + $0xa0] sm:$0xff]
          %v963 = vld [vmem:[#allocation3 + $0xa8] sm:$0xff]
          %v964 = vld [vmem:[#allocation3 + $0xb0] sm:$0xff]
          %v965 = vld [vmem:[#allocation3 + $0xb8] sm:$0xff]
          %v966 = vld [vmem:[#allocation3 + $0xc0] sm:$0xff]
          %v967 = vld [vmem:[#allocation3 + $0xc8] sm:$0xff]
          %v968 = vld [vmem:[#allocation3 + $0xd0] sm:$0xff]
          %v969 = vld [vmem:[#allocation3 + $0xd8] sm:$0xff]
          %v970 = vld [vmem:[#allocation3 + $0xe0] sm:$0xff]
          %v971 = vld [vmem:[#allocation3 + $0xe8] sm:$0xff]
          %v972 = vld [vmem:[#allocation3 + $0xf0] sm:$0xff]
          %v973 = vld [vmem:[#allocation3 + $0xf8] sm:$0xff]
          %v975 = vlaneseq
          %v976 = vshrl.u32 %v975, 7
          %v977 = vsub.s32 0, %v976
          %v978 = vrot.slane %v652, %v977
          %980 = vmatprep.subr.mxu0 0.0
          %981 = vmatpush1.msra.mxu0 %v636
          %982 = vmatprep.subr.mxu0 0.0
          %983 = vmatpush1.msra.mxu0 %v637
          %984 = vmatprep.subr.mxu0 0.0
          %985 = vmatpush1.msra.mxu0 %v638
          %986 = vmatprep.subr.mxu0 0.0
          %987 = vmatpush1.msra.mxu0 %v639
          %988 = vmatprep.subr.mxu0 0.0
          %989 = vmatpush1.msra.mxu0 %v640
          %990 = vmatprep.subr.mxu0 0.0
          %991 = vmatpush1.msra.mxu0 %v641
          %992 = vmatprep.subr.mxu0 0.0
          %993 = vmatpush1.msra.mxu0 %v642
          %994 = vmatprep.subr.mxu0 0.0
          %995 = vmatpush1.msra.mxu0 %v643
          %996 = vmatprep.subr.mxu0 0.0
          %997 = vmatpush1.msra.mxu0 %v644
          %998 = vmatprep.subr.mxu0 0.0
          %999 = vmatpush1.msra.mxu0 %v645
          %1000 = vmatprep.subr.mxu0 0.0
          %1001 = vmatpush1.msra.mxu0 %v646
          %1002 = vmatprep.subr.mxu0 0.0
          %1003 = vmatpush1.msra.mxu0 %v647
          %1004 = vmatprep.subr.mxu0 0.0
          %1005 = vmatpush1.msra.mxu0 %v648
          %1006 = vmatprep.subr.mxu0 0.0
          %1007 = vmatpush1.msra.mxu0 %v649
          %1008 = vmatprep.subr.mxu0 0.0
          %1009 = vmatpush1.msra.mxu0 %v650
          %1010 = vmatprep.subr.mxu0 0.0
          %1011 = vmatpush1.msra.mxu0 %v651
          %1012 = vmatprep.subr.mxu0 0.0
          %1013 = vmatpush1.msra.mxu0 0.0
          %1014 = vmatprep.subr.mxu0 0.0
          %1015 = vmatpush1.msra.mxu0 0.0
          %1016 = vmatprep.subr.mxu0 0.0
          %1017 = vmatpush1.msra.mxu0 0.0
          %1018 = vmatprep.subr.mxu0 0.0
          %1019 = vmatpush1.msra.mxu0 0.0
          %1020 = vmatprep.subr.mxu0 0.0
          %1021 = vmatpush1.msra.mxu0 0.0
          %1022 = vmatprep.subr.mxu0 0.0
          %1023 = vmatpush1.msra.mxu0 0.0
          %1024 = vmatprep.subr.mxu0 0.0
          %1025 = vmatpush1.msra.mxu0 0.0
          %1026 = vmatprep.subr.mxu0 0.0
          %1027 = vmatpush1.msra.mxu0 0.0
          %1028 = vmatprep.subr.mxu0 0.0
          %1029 = vmatpush1.msra.mxu0 0.0
          %1030 = vmatprep.subr.mxu0 0.0
          %1031 = vmatpush1.msra.mxu0 0.0
          %1032 = vmatprep.subr.mxu0 0.0
          %1033 = vmatpush1.msra.mxu0 0.0
          %1034 = vmatprep.subr.mxu0 0.0
          %1035 = vmatpush1.msra.mxu0 0.0
          %1036 = vmatprep.subr.mxu0 0.0
          %1037 = vmatpush1.msra.mxu0 0.0
          %1038 = vmatprep.subr.mxu0 0.0
          %1039 = vmatpush1.msra.mxu0 0.0
          %1040 = vmatprep.subr.mxu0 0.0
          %1041 = vmatpush1.msra.mxu0 0.0
          %1042 = vmatprep.subr.mxu0 0.0
          %1043 = vmatpush1.msra.mxu0 0.0
          %1044 = vmatprep.mubr.f32.mxu0 0.0
          %1045 = vmatmul.mubr.f32.gmra.mrb[0].mxu0 %v942
          %v1046 = vpop.f32.mrb[0].mxu0
          %v1047 = vadd.f32 %v978, %v1046
          %v1048 = vpop.f32.mrb[0].mxu0
          %1049 = vmatprep.mubr.f32.mxu0 0.0
          %1050 = vmatmul.mubr.f32.gmra.mrb[0].mxu0 %v943
          %v1051 = vpop.f32.mrb[0].mxu0
          %v1052 = vadd.f32 %v978, %v1051
          %v1053 = vpop.f32.mrb[0].mxu0
          %1054 = vmatprep.mubr.f32.mxu0 0.0
          %1055 = vmatmul.mubr.f32.gmra.mrb[0].mxu0 %v944
          %v1056 = vpop.f32.mrb[0].mxu0
          %v1057 = vadd.f32 %v978, %v1056
          %v1058 = vpop.f32.mrb[0].mxu0
          %1059 = vmatprep.mubr.f32.mxu0 0.0
          %1060 = vmatmul.mubr.f32.gmra.mrb[0].mxu0 %v945
          %v1061 = vpop.f32.mrb[0].mxu0
          %v1062 = vadd.f32 %v978, %v1061
          %v1063 = vpop.f32.mrb[0].mxu0
          %1064 = vmatprep.mubr.f32.mxu0 0.0
          %1065 = vmatmul.mubr.f32.gmra.mrb[0].mxu0 %v946
          %v1066 = vpop.f32.mrb[0].mxu0
          %v1067 = vadd.f32 %v978, %v1066
          %v1068 = vpop.f32.mrb[0].mxu0
          %1069 = vmatprep.mubr.f32.mxu0 0.0
          %1070 = vmatmul.mubr.f32.gmra.mrb[0].mxu0 %v947
          %v1071 = vpop.f32.mrb[0].mxu0
          %v1072 = vadd.f32 %v978, %v1071
          %v1073 = vpop.f32.mrb[0].mxu0
          %1074 = vmatprep.mubr.f32.mxu0 0.0
          %1075 = vmatmul.mubr.f32.gmra.mrb[0].mxu0 %v948
          %v1076 = vpop.f32.mrb[0].mxu0
          %v1077 = vadd.f32 %v978, %v1076
          %v1078 = vpop.f32.mrb[0].mxu0
          %1079 = vmatprep.mubr.f32.mxu0 0.0
          %1080 = vmatmul.mubr.f32.gmra.mrb[0].mxu0 %v949
          %v1081 = vpop.f32.mrb[0].mxu0
          %v1082 = vadd.f32 %v978, %v1081
          %v1083 = vpop.f32.mrb[0].mxu0
          %1084 = vmatprep.mubr.f32.mxu0 0.0
          %1085 = vmatmul.mubr.f32.gmra.mrb[0].mxu0 %v950
          %v1086 = vpop.f32.mrb[0].mxu0
          %v1087 = vadd.f32 %v978, %v1086
          %v1088 = vpop.f32.mrb[0].mxu0
          %1089 = vmatprep.mubr.f32.mxu0 0.0
          %1090 = vmatmul.mubr.f32.gmra.mrb[0].mxu0 %v951
          %v1091 = vpop.f32.mrb[0].mxu0
          %v1092 = vadd.f32 %v978, %v1091
          %v1093 = vpop.f32.mrb[0].mxu0
          %1094 = vmatprep.mubr.f32.mxu0 0.0
          %1095 = vmatmul.mubr.f32.gmra.mrb[0].mxu0 %v952
          %v1096 = vpop.f32.mrb[0].mxu0
          %v1097 = vadd.f32 %v978, %v1096
          %v1098 = vpop.f32.mrb[0].mxu0
          %1099 = vmatprep.mubr.f32.mxu0 0.0
          %1100 = vmatmul.mubr.f32.gmra.mrb[0].mxu0 %v953
          %v1101 = vpop.f32.mrb[0].mxu0
          %v1102 = vadd.f32 %v978, %v1101
          %v1103 = vpop.f32.mrb[0].mxu0
          %1104 = vmatprep.mubr.f32.mxu0 0.0
          %1105 = vmatmul.mubr.f32.gmra.mrb[0].mxu0 %v954
          %v1106 = vpop.f32.mrb[0].mxu0
          %v1107 = vadd.f32 %v978, %v1106
          %v1108 = vpop.f32.mrb[0].mxu0
          %1109 = vmatprep.mubr.f32.mxu0 0.0
          %1110 = vmatmul.mubr.f32.gmra.mrb[0].mxu0 %v955
          %v1111 = vpop.f32.mrb[0].mxu0
          %v1112 = vadd.f32 %v978, %v1111
          %v1113 = vpop.f32.mrb[0].mxu0
          %1114 = vmatprep.mubr.f32.mxu0 0.0
          %1115 = vmatmul.mubr.f32.gmra.mrb[0].mxu0 %v956
          %v1116 = vpop.f32.mrb[0].mxu0
          %v1117 = vadd.f32 %v978, %v1116
          %v1118 = vpop.f32.mrb[0].mxu0
          %1119 = vmatprep.mubr.f32.mxu0 0.0
          %1120 = vmatmul.mubr.f32.gmra.mrb[0].mxu0 %v957
          %v1121 = vpop.f32.mrb[0].mxu0
          %v1122 = vadd.f32 %v978, %v1121
          %v1123 = vpop.f32.mrb[0].mxu0
          %1124 = vmatprep.mubr.f32.mxu0 0.0
          %1125 = vmatmul.mubr.f32.gmra.mrb[0].mxu0 %v958
          %v1126 = vpop.f32.mrb[0].mxu0
          %v1127 = vadd.f32 %v978, %v1126
          %v1128 = vpop.f32.mrb[0].mxu0
          %1129 = vmatprep.mubr.f32.mxu0 0.0
          %1130 = vmatmul.mubr.f32.gmra.mrb[0].mxu0 %v959
          %v1131 = vpop.f32.mrb[0].mxu0
          %v1132 = vadd.f32 %v978, %v1131
          %v1133 = vpop.f32.mrb[0].mxu0
          %1134 = vmatprep.mubr.f32.mxu0 0.0
          %1135 = vmatmul.mubr.f32.gmra.mrb[0].mxu0 %v960
          %v1136 = vpop.f32.mrb[0].mxu0
          %v1137 = vadd.f32 %v978, %v1136
          %v1138 = vpop.f32.mrb[0].mxu0
          %1139 = vmatprep.mubr.f32.mxu0 0.0
          %1140 = vmatmul.mubr.f32.gmra.mrb[0].mxu0 %v961
          %v1141 = vpop.f32.mrb[0].mxu0
          %v1142 = vadd.f32 %v978, %v1141
          %v1143 = vpop.f32.mrb[0].mxu0
          %1144 = vmatprep.mubr.f32.mxu0 0.0
          %1145 = vmatmul.mubr.f32.gmra.mrb[0].mxu0 %v962
          %v1146 = vpop.f32.mrb[0].mxu0
          %v1147 = vadd.f32 %v978, %v1146
          %v1148 = vpop.f32.mrb[0].mxu0
          %1149 = vmatprep.mubr.f32.mxu0 0.0
          %1150 = vmatmul.mubr.f32.gmra.mrb[0].mxu0 %v963
          %v1151 = vpop.f32.mrb[0].mxu0
          %v1152 = vadd.f32 %v978, %v1151
          %v1153 = vpop.f32.mrb[0].mxu0
          %1154 = vmatprep.mubr.f32.mxu0 0.0
          %1155 = vmatmul.mubr.f32.gmra.mrb[0].mxu0 %v964
          %v1156 = vpop.f32.mrb[0].mxu0
          %v1157 = vadd.f32 %v978, %v1156
          %v1158 = vpop.f32.mrb[0].mxu0
          %1159 = vmatprep.mubr.f32.mxu0 0.0
          %1160 = vmatmul.mubr.f32.gmra.mrb[0].mxu0 %v965
          %v1161 = vpop.f32.mrb[0].mxu0
          %v1162 = vadd.f32 %v978, %v1161
          %v1163 = vpop.f32.mrb[0].mxu0
          %1164 = vmatprep.mubr.f32.mxu0 0.0
          %1165 = vmatmul.mubr.f32.gmra.mrb[0].mxu0 %v966
          %v1166 = vpop.f32.mrb[0].mxu0
          %v1167 = vadd.f32 %v978, %v1166
          %v1168 = vpop.f32.mrb[0].mxu0
          %1169 = vmatprep.mubr.f32.mxu0 0.0
          %1170 = vmatmul.mubr.f32.gmra.mrb[0].mxu0 %v967
          %v1171 = vpop.f32.mrb[0].mxu0
          %v1172 = vadd.f32 %v978, %v1171
          %v1173 = vpop.f32.mrb[0].mxu0
          %1174 = vmatprep.mubr.f32.mxu0 0.0
          %1175 = vmatmul.mubr.f32.gmra.mrb[0].mxu0 %v968
          %v1176 = vpop.f32.mrb[0].mxu0
          %v1177 = vadd.f32 %v978, %v1176
          %v1178 = vpop.f32.mrb[0].mxu0
          %1179 = vmatprep.mubr.f32.mxu0 0.0
          %1180 = vmatmul.mubr.f32.gmra.mrb[0].mxu0 %v969
          %v1181 = vpop.f32.mrb[0].mxu0
          %v1182 = vadd.f32 %v978, %v1181
          %v1183 = vpop.f32.mrb[0].mxu0
          %1184 = vmatprep.mubr.f32.mxu0 0.0
          %1185 = vmatmul.mubr.f32.gmra.mrb[0].mxu0 %v970
          %v1186 = vpop.f32.mrb[0].mxu0
          %v1187 = vadd.f32 %v978, %v1186
          %v1188 = vpop.f32.mrb[0].mxu0
          %1189 = vmatprep.mubr.f32.mxu0 0.0
          %1190 = vmatmul.mubr.f32.gmra.mrb[0].mxu0 %v971
          %v1191 = vpop.f32.mrb[0].mxu0
          %v1192 = vadd.f32 %v978, %v1191
          %v1193 = vpop.f32.mrb[0].mxu0
          %1194 = vmatprep.mubr.f32.mxu0 0.0
          %1195 = vmatmul.mubr.f32.gmra.mrb[0].mxu0 %v972
          %v1196 = vpop.f32.mrb[0].mxu0
          %v1197 = vadd.f32 %v978, %v1196
          %v1198 = vpop.f32.mrb[0].mxu0
          %1199 = vmatprep.mubr.f32.mxu0 0.0
          %1200 = vmatmul.mubr.f32.gmra.mrb[0].mxu0 %v973
          %v1201 = vpop.f32.mrb[0].mxu0
          %v1202 = vadd.f32 %v978, %v1201
          %v1203 = vpop.f32.mrb[0].mxu0
          %1204 = vdwg.mxu0
          %v1205 = vtanh.pop %v1047
          %v1206 = vtanh.pop %v1052
          %v1207 = vtanh.pop %v1057
          %v1208 = vtanh.pop %v1062
          %v1209 = vtanh.pop %v1067
          %v1210 = vtanh.pop %v1072
          %v1211 = vtanh.pop %v1077
          %v1212 = vtanh.pop %v1082
          %v1213 = vtanh.pop %v1087
          %v1214 = vtanh.pop %v1092
          %v1215 = vtanh.pop %v1097
          %v1216 = vtanh.pop %v1102
          %v1217 = vtanh.pop %v1107
          %v1218 = vtanh.pop %v1112
          %v1219 = vtanh.pop %v1117
          %v1220 = vtanh.pop %v1122
          %v1221 = vtanh.pop %v1127
          %v1222 = vtanh.pop %v1132
          %v1223 = vtanh.pop %v1137
          %v1224 = vtanh.pop %v1142
          %v1225 = vtanh.pop %v1147
          %v1226 = vtanh.pop %v1152
          %v1227 = vtanh.pop %v1157
          %v1228 = vtanh.pop %v1162
          %v1229 = vtanh.pop %v1167
          %v1230 = vtanh.pop %v1172
          %v1231 = vtanh.pop %v1177
          %v1232 = vtanh.pop %v1182
          %v1233 = vtanh.pop %v1187
          %v1234 = vtanh.pop %v1192
          %v1235 = vtanh.pop %v1197
          %v1236 = vtanh.pop %v1202
          %1237 = vst [vmem:[#allocation3] sm:$0xff] %v1205
          %1238 = vst [vmem:[#allocation3 + $0x8] sm:$0xff] %v1206
          %1239 = vst [vmem:[#allocation3 + $0x10] sm:$0xff] %v1207
          %1240 = vst [vmem:[#allocation3 + $0x18] sm:$0xff] %v1208
          %1241 = vst [vmem:[#allocation3 + $0x20] sm:$0xff] %v1209
          %1242 = vst [vmem:[#allocation3 + $0x28] sm:$0xff] %v1210
          %1243 = vst [vmem:[#allocation3 + $0x30] sm:$0xff] %v1211
          %1244 = vst [vmem:[#allocation3 + $0x38] sm:$0xff] %v1212
          %1245 = vst [vmem:[#allocation3 + $0x40] sm:$0xff] %v1213
          %1246 = vst [vmem:[#allocation3 + $0x48] sm:$0xff] %v1214
          %1247 = vst [vmem:[#allocation3 + $0x50] sm:$0xff] %v1215
          %1248 = vst [vmem:[#allocation3 + $0x58] sm:$0xff] %v1216
          %1249 = vst [vmem:[#allocation3 + $0x60] sm:$0xff] %v1217
          %1250 = vst [vmem:[#allocation3 + $0x68] sm:$0xff] %v1218
          %1251 = vst [vmem:[#allocation3 + $0x70] sm:$0xff] %v1219
          %1252 = vst [vmem:[#allocation3 + $0x78] sm:$0xff] %v1220
          %1253 = vst [vmem:[#allocation3 + $0x80] sm:$0xff] %v1221
          %1254 = vst [vmem:[#allocation3 + $0x88] sm:$0xff] %v1222
          %1255 = vst [vmem:[#allocation3 + $0x90] sm:$0xff] %v1223
          %1256 = vst [vmem:[#allocation3 + $0x98] sm:$0xff] %v1224
          %1257 = vst [vmem:[#allocation3 + $0xa0] sm:$0xff] %v1225
          %1258 = vst [vmem:[#allocation3 + $0xa8] sm:$0xff] %v1226
          %1259 = vst [vmem:[#allocation3 + $0xb0] sm:$0xff] %v1227
          %1260 = vst [vmem:[#allocation3 + $0xb8] sm:$0xff] %v1228
          %1261 = vst [vmem:[#allocation3 + $0xc0] sm:$0xff] %v1229
          %1262 = vst [vmem:[#allocation3 + $0xc8] sm:$0xff] %v1230
          %1263 = vst [vmem:[#allocation3 + $0xd0] sm:$0xff] %v1231
          %1264 = vst [vmem:[#allocation3 + $0xd8] sm:$0xff] %v1232
          %1265 = vst [vmem:[#allocation3 + $0xe0] sm:$0xff] %v1233
          %1266 = vst [vmem:[#allocation3 + $0xe8] sm:$0xff] %v1234
          %1267 = vst [vmem:[#allocation3 + $0xf0] sm:$0xff] %v1235
          %1268 = vst [vmem:[#allocation3 + $0xf8] sm:$0xff] %v1236
          %v1269 = vld [vmem:[#allocation10] sm:$0xff]
          %v1270 = vld [vmem:[#allocation10 + $0x8] sm:$0xff]
          %v1271 = vld [vmem:[#allocation10 + $0x10] sm:$0xff]
          %v1272 = vld [vmem:[#allocation10 + $0x18] sm:$0xff]
          %v1273 = vld [vmem:[#allocation10 + $0x20] sm:$0xff]
          %v1274 = vld [vmem:[#allocation10 + $0x28] sm:$0xff]
          %v1275 = vld [vmem:[#allocation10 + $0x30] sm:$0xff]
          %v1276 = vld [vmem:[#allocation10 + $0x38] sm:$0xff]
          %v1277 = vld [vmem:[#allocation10 + $0x40] sm:$0xff]
          %v1278 = vld [vmem:[#allocation10 + $0x48] sm:$0xff]
          %v1279 = vld [vmem:[#allocation10 + $0x50] sm:$0xff]
          %v1280 = vld [vmem:[#allocation10 + $0x58] sm:$0xff]
          %v1281 = vld [vmem:[#allocation10 + $0x60] sm:$0xff]
          %v1282 = vld [vmem:[#allocation10 + $0x68] sm:$0xff]
          %v1283 = vld [vmem:[#allocation10 + $0x70] sm:$0xff]
          %v1284 = vld [vmem:[#allocation10 + $0x78] sm:$0xff]
          %v1285 = vld [vmem:[%s5] sm:$0x1]
          %v1286 = vld [vmem:[#allocation3] sm:$0xff]
          %v1287 = vld [vmem:[#allocation3 + $0x8] sm:$0xff]
          %v1288 = vld [vmem:[#allocation3 + $0x10] sm:$0xff]
          %v1289 = vld [vmem:[#allocation3 + $0x18] sm:$0xff]
          %v1290 = vld [vmem:[#allocation3 + $0x20] sm:$0xff]
          %v1291 = vld [vmem:[#allocation3 + $0x28] sm:$0xff]
          %v1292 = vld [vmem:[#allocation3 + $0x30] sm:$0xff]
          %v1293 = vld [vmem:[#allocation3 + $0x38] sm:$0xff]
          %v1294 = vld [vmem:[#allocation3 + $0x40] sm:$0xff]
          %v1295 = vld [vmem:[#allocation3 + $0x48] sm:$0xff]
          %v1296 = vld [vmem:[#allocation3 + $0x50] sm:$0xff]
          %v1297 = vld [vmem:[#allocation3 + $0x58] sm:$0xff]
          %v1298 = vld [vmem:[#allocation3 + $0x60] sm:$0xff]
          %v1299 = vld [vmem:[#allocation3 + $0x68] sm:$0xff]
          %v1300 = vld [vmem:[#allocation3 + $0x70] sm:$0xff]
          %v1301 = vld [vmem:[#allocation3 + $0x78] sm:$0xff]
          %v1302 = vld [vmem:[#allocation3 + $0x80] sm:$0xff]
          %v1303 = vld [vmem:[#allocation3 + $0x88] sm:$0xff]
          %v1304 = vld [vmem:[#allocation3 + $0x90] sm:$0xff]
          %v1305 = vld [vmem:[#allocation3 + $0x98] sm:$0xff]
          %v1306 = vld [vmem:[#allocation3 + $0xa0] sm:$0xff]
          %v1307 = vld [vmem:[#allocation3 + $0xa8] sm:$0xff]
          %v1308 = vld [vmem:[#allocation3 + $0xb0] sm:$0xff]
          %v1309 = vld [vmem:[#allocation3 + $0xb8] sm:$0xff]
          %v1310 = vld [vmem:[#allocation3 + $0xc0] sm:$0xff]
          %v1311 = vld [vmem:[#allocation3 + $0xc8] sm:$0xff]
          %v1312 = vld [vmem:[#allocation3 + $0xd0] sm:$0xff]
          %v1313 = vld [vmem:[#allocation3 + $0xd8] sm:$0xff]
          %v1314 = vld [vmem:[#allocation3 + $0xe0] sm:$0xff]
          %v1315 = vld [vmem:[#allocation3 + $0xe8] sm:$0xff]
          %v1316 = vld [vmem:[#allocation3 + $0xf0] sm:$0xff]
          %v1317 = vld [vmem:[#allocation3 + $0xf8] sm:$0xff]
          %1318 = vmatprep.subr.mxu0 0.0
          %1319 = vmatpush1.msra.mxu0 %v1286
          %1320 = vmatprep.subr.mxu0 0.0
          %1321 = vmatpush1.msra.mxu0 %v1287
          %1322 = vmatprep.subr.mxu0 0.0
          %1323 = vmatpush1.msra.mxu0 %v1288
          %1324 = vmatprep.subr.mxu0 0.0
          %1325 = vmatpush1.msra.mxu0 %v1289
          %1326 = vmatprep.subr.mxu0 0.0
          %1327 = vmatpush1.msra.mxu0 %v1290
          %1328 = vmatprep.subr.mxu0 0.0
          %1329 = vmatpush1.msra.mxu0 %v1291
          %1330 = vmatprep.subr.mxu0 0.0
          %1331 = vmatpush1.msra.mxu0 %v1292
          %1332 = vmatprep.subr.mxu0 0.0
          %1333 = vmatpush1.msra.mxu0 %v1293
          %1334 = vmatprep.subr.mxu0 0.0
          %1335 = vmatpush1.msra.mxu0 %v1294
          %1336 = vmatprep.subr.mxu0 0.0
          %1337 = vmatpush1.msra.mxu0 %v1295
          %1338 = vmatprep.subr.mxu0 0.0
          %1339 = vmatpush1.msra.mxu0 %v1296
          %1340 = vmatprep.subr.mxu0 0.0
          %1341 = vmatpush1.msra.mxu0 %v1297
          %1342 = vmatprep.subr.mxu0 0.0
          %1343 = vmatpush1.msra.mxu0 %v1298
          %1344 = vmatprep.subr.mxu0 0.0
          %1345 = vmatpush1.msra.mxu0 %v1299
          %1346 = vmatprep.subr.mxu0 0.0
          %1347 = vmatpush1.msra.mxu0 %v1300
          %1348 = vmatprep.subr.mxu0 0.0
          %1349 = vmatpush1.msra.mxu0 %v1301
          %1350 = vmatprep.subr.mxu0 0.0
          %1351 = vmatpush1.msra.mxu0 %v1302
          %1352 = vmatprep.subr.mxu0 0.0
          %1353 = vmatpush1.msra.mxu0 %v1303
          %1354 = vmatprep.subr.mxu0 0.0
          %1355 = vmatpush1.msra.mxu0 %v1304
          %1356 = vmatprep.subr.mxu0 0.0
          %1357 = vmatpush1.msra.mxu0 %v1305
          %1358 = vmatprep.subr.mxu0 0.0
          %1359 = vmatpush1.msra.mxu0 %v1306
          %1360 = vmatprep.subr.mxu0 0.0
          %1361 = vmatpush1.msra.mxu0 %v1307
          %1362 = vmatprep.subr.mxu0 0.0
          %1363 = vmatpush1.msra.mxu0 %v1308
          %1364 = vmatprep.subr.mxu0 0.0
          %1365 = vmatpush1.msra.mxu0 %v1309
          %1366 = vmatprep.subr.mxu0 0.0
          %1367 = vmatpush1.msra.mxu0 %v1310
          %1368 = vmatprep.subr.mxu0 0.0
          %1369 = vmatpush1.msra.mxu0 %v1311
          %1370 = vmatprep.subr.mxu0 0.0
          %1371 = vmatpush1.msra.mxu0 %v1312
          %1372 = vmatprep.subr.mxu0 0.0
          %1373 = vmatpush1.msra.mxu0 %v1313
          %1374 = vmatprep.subr.mxu0 0.0
          %1375 = vmatpush1.msra.mxu0 %v1314
          %1376 = vmatprep.subr.mxu0 0.0
          %1377 = vmatpush1.msra.mxu0 %v1315
          %1378 = vmatprep.subr.mxu0 0.0
          %1379 = vmatpush1.msra.mxu0 %v1316
          %1380 = vmatprep.subr.mxu0 0.0
          %1381 = vmatpush1.msra.mxu0 %v1317
          %1382 = vmatprep.mubr.f32.mxu0 %v573
          %1383 = vmatmul.mubr.f32.gmra.mrb[0].mxu0 %v572
          %v1384 = vpop.f32.mrb[0].mxu0
          %v1385 = vadd.f32 0.0, %v1384
          %v1386 = vpop.f32.mrb[0].mxu0
          %1387 = vmatprep.mubr.f32.mxu0 %v575
          %1388 = vmatmul.mubr.f32.gmra.mrb[0].mxu0 %v574
          %v1389 = vpop.f32.mrb[0].mxu0
          %v1390 = vadd.f32 0.0, %v1389
          %v1391 = vpop.f32.mrb[0].mxu0
          %1392 = vmatprep.mubr.f32.mxu0 %v577
          %1393 = vmatmul.mubr.f32.gmra.mrb[0].mxu0 %v576
          %v1394 = vpop.f32.mrb[0].mxu0
          %v1395 = vadd.f32 0.0, %v1394
          %v1396 = vpop.f32.mrb[0].mxu0
          %1397 = vmatprep.mubr.f32.mxu0 %v579
          %1398 = vmatmul.mubr.f32.gmra.mrb[0].mxu0 %v578
          %v1399 = vpop.f32.mrb[0].mxu0
          %v1400 = vadd.f32 0.0, %v1399
          %v1401 = vpop.f32.mrb[0].mxu0
          %1402 = vmatprep.mubr.f32.mxu0 %v581
          %1403 = vmatmul.mubr.f32.gmra.mrb[0].mxu0 %v580
          %v1404 = vpop.f32.mrb[0].mxu0
          %v1405 = vadd.f32 0.0, %v1404
          %v1406 = vpop.f32.mrb[0].mxu0
          %1407 = vmatprep.mubr.f32.mxu0 %v583
          %1408 = vmatmul.mubr.f32.gmra.mrb[0].mxu0 %v582
          %v1409 = vpop.f32.mrb[0].mxu0
          %v1410 = vadd.f32 0.0, %v1409
          %v1411 = vpop.f32.mrb[0].mxu0
          %1412 = vmatprep.mubr.f32.mxu0 %v585
          %1413 = vmatmul.mubr.f32.gmra.mrb[0].mxu0 %v584
          %v1414 = vpop.f32.mrb[0].mxu0
          %v1415 = vadd.f32 0.0, %v1414
          %v1416 = vpop.f32.mrb[0].mxu0
          %1417 = vmatprep.mubr.f32.mxu0 %v587
          %1418 = vmatmul.mubr.f32.gmra.mrb[0].mxu0 %v586
          %v1419 = vpop.f32.mrb[0].mxu0
          %v1420 = vadd.f32 0.0, %v1419
          %v1421 = vpop.f32.mrb[0].mxu0
          %1422 = vmatprep.mubr.f32.mxu0 %v589
          %1423 = vmatmul.mubr.f32.gmra.mrb[0].mxu0 %v588
          %v1424 = vpop.f32.mrb[0].mxu0
          %v1425 = vadd.f32 0.0, %v1424
          %v1426 = vpop.f32.mrb[0].mxu0
          %1427 = vmatprep.mubr.f32.mxu0 %v591
          %1428 = vmatmul.mubr.f32.gmra.mrb[0].mxu0 %v590
          %v1429 = vpop.f32.mrb[0].mxu0
          %v1430 = vadd.f32 0.0, %v1429
          %v1431 = vpop.f32.mrb[0].mxu0
          %1432 = vmatprep.mubr.f32.mxu0 %v593
          %1433 = vmatmul.mubr.f32.gmra.mrb[0].mxu0 %v592
          %v1434 = vpop.f32.mrb[0].mxu0
          %v1435 = vadd.f32 0.0, %v1434
          %v1436 = vpop.f32.mrb[0].mxu0
          %1437 = vmatprep.mubr.f32.mxu0 %v595
          %1438 = vmatmul.mubr.f32.gmra.mrb[0].mxu0 %v594
          %v1439 = vpop.f32.mrb[0].mxu0
          %v1440 = vadd.f32 0.0, %v1439
          %v1441 = vpop.f32.mrb[0].mxu0
          %1442 = vmatprep.mubr.f32.mxu0 %v597
          %1443 = vmatmul.mubr.f32.gmra.mrb[0].mxu0 %v596
          %v1444 = vpop.f32.mrb[0].mxu0
          %v1445 = vadd.f32 0.0, %v1444
          %v1446 = vpop.f32.mrb[0].mxu0
          %1447 = vmatprep.mubr.f32.mxu0 %v599
          %1448 = vmatmul.mubr.f32.gmra.mrb[0].mxu0 %v598
          %v1449 = vpop.f32.mrb[0].mxu0
          %v1450 = vadd.f32 0.0, %v1449
          %v1451 = vpop.f32.mrb[0].mxu0
          %1452 = vmatprep.mubr.f32.mxu0 %v601
          %1453 = vmatmul.mubr.f32.gmra.mrb[0].mxu0 %v600
          %v1454 = vpop.f32.mrb[0].mxu0
          %v1455 = vadd.f32 0.0, %v1454
          %v1456 = vpop.f32.mrb[0].mxu0
          %1457 = vmatprep.mubr.f32.mxu0 %v603
          %1458 = vmatmul.mubr.f32.gmra.mrb[0].mxu0 %v602
          %v1459 = vpop.f32.mrb[0].mxu0
          %v1460 = vadd.f32 0.0, %v1459
          %v1461 = vpop.f32.mrb[0].mxu0
          %1462 = vmatprep.mubr.f32.mxu0 %v605
          %1463 = vmatmul.mubr.f32.gmra.mrb[0].mxu0 %v604
          %v1464 = vpop.f32.mrb[0].mxu0
          %v1465 = vadd.f32 0.0, %v1464
          %v1466 = vpop.f32.mrb[0].mxu0
          %1467 = vmatprep.mubr.f32.mxu0 %v607
          %1468 = vmatmul.mubr.f32.gmra.mrb[0].mxu0 %v606
          %v1469 = vpop.f32.mrb[0].mxu0
          %v1470 = vadd.f32 0.0, %v1469
          %v1471 = vpop.f32.mrb[0].mxu0
          %1472 = vmatprep.mubr.f32.mxu0 %v609
          %1473 = vmatmul.mubr.f32.gmra.mrb[0].mxu0 %v608
          %v1474 = vpop.f32.mrb[0].mxu0
          %v1475 = vadd.f32 0.0, %v1474
          %v1476 = vpop.f32.mrb[0].mxu0
          %1477 = vmatprep.mubr.f32.mxu0 %v611
          %1478 = vmatmul.mubr.f32.gmra.mrb[0].mxu0 %v610
          %v1479 = vpop.f32.mrb[0].mxu0
          %v1480 = vadd.f32 0.0, %v1479
          %v1481 = vpop.f32.mrb[0].mxu0
          %1482 = vmatprep.mubr.f32.mxu0 %v613
          %1483 = vmatmul.mubr.f32.gmra.mrb[0].mxu0 %v612
          %v1484 = vpop.f32.mrb[0].mxu0
          %v1485 = vadd.f32 0.0, %v1484
          %v1486 = vpop.f32.mrb[0].mxu0
          %1487 = vmatprep.mubr.f32.mxu0 %v615
          %1488 = vmatmul.mubr.f32.gmra.mrb[0].mxu0 %v614
          %v1489 = vpop.f32.mrb[0].mxu0
          %v1490 = vadd.f32 0.0, %v1489
          %v1491 = vpop.f32.mrb[0].mxu0
          %1492 = vmatprep.mubr.f32.mxu0 %v617
          %1493 = vmatmul.mubr.f32.gmra.mrb[0].mxu0 %v616
          %v1494 = vpop.f32.mrb[0].mxu0
          %v1495 = vadd.f32 0.0, %v1494
          %v1496 = vpop.f32.mrb[0].mxu0
          %1497 = vmatprep.mubr.f32.mxu0 %v619
          %1498 = vmatmul.mubr.f32.gmra.mrb[0].mxu0 %v618
          %v1499 = vpop.f32.mrb[0].mxu0
          %v1500 = vadd.f32 0.0, %v1499
          %v1501 = vpop.f32.mrb[0].mxu0
          %1502 = vmatprep.mubr.f32.mxu0 %v621
          %1503 = vmatmul.mubr.f32.gmra.mrb[0].mxu0 %v620
          %v1504 = vpop.f32.mrb[0].mxu0
          %v1505 = vadd.f32 0.0, %v1504
          %v1506 = vpop.f32.mrb[0].mxu0
          %1507 = vmatprep.mubr.f32.mxu0 %v623
          %1508 = vmatmul.mubr.f32.gmra.mrb[0].mxu0 %v622
          %v1509 = vpop.f32.mrb[0].mxu0
          %v1510 = vadd.f32 0.0, %v1509
          %v1511 = vpop.f32.mrb[0].mxu0
          %1512 = vmatprep.mubr.f32.mxu0 %v625
          %1513 = vmatmul.mubr.f32.gmra.mrb[0].mxu0 %v624
          %v1514 = vpop.f32.mrb[0].mxu0
          %v1515 = vadd.f32 0.0, %v1514
          %v1516 = vpop.f32.mrb[0].mxu0
          %1517 = vmatprep.mubr.f32.mxu0 %v627
          %1518 = vmatmul.mubr.f32.gmra.mrb[0].mxu0 %v626
          %v1519 = vpop.f32.mrb[0].mxu0
          %v1520 = vadd.f32 0.0, %v1519
          %v1521 = vpop.f32.mrb[0].mxu0
          %1522 = vmatprep.mubr.f32.mxu0 %v629
          %1523 = vmatmul.mubr.f32.gmra.mrb[0].mxu0 %v628
          %v1524 = vpop.f32.mrb[0].mxu0
          %v1525 = vadd.f32 0.0, %v1524
          %v1526 = vpop.f32.mrb[0].mxu0
          %1527 = vmatprep.mubr.f32.mxu0 %v631
          %1528 = vmatmul.mubr.f32.gmra.mrb[0].mxu0 %v630
          %v1529 = vpop.f32.mrb[0].mxu0
          %v1530 = vadd.f32 0.0, %v1529
          %v1531 = vpop.f32.mrb[0].mxu0
          %1532 = vmatprep.mubr.f32.mxu0 %v633
          %1533 = vmatmul.mubr.f32.gmra.mrb[0].mxu0 %v632
          %v1534 = vpop.f32.mrb[0].mxu0
          %v1535 = vadd.f32 0.0, %v1534
          %v1536 = vpop.f32.mrb[0].mxu0
          %1537 = vmatprep.mubr.f32.mxu0 %v635
          %1538 = vmatmul.mubr.f32.gmra.mrb[0].mxu0 %v634
          %v1539 = vpop.f32.mrb[0].mxu0
          %v1540 = vadd.f32 0.0, %v1539
          %v1541 = vpop.f32.mrb[0].mxu0
          %1542 = vdwg.mxu0
          %1543 = vst [vmem:[#allocation3] sm:$0xff] %v1385
          %1544 = vst [vmem:[#allocation3 + $0x8] sm:$0xff] %v1390
          %1545 = vst [vmem:[#allocation3 + $0x10] sm:$0xff] %v1395
          %1546 = vst [vmem:[#allocation3 + $0x18] sm:$0xff] %v1400
          %1547 = vst [vmem:[#allocation3 + $0x20] sm:$0xff] %v1405
          %1548 = vst [vmem:[#allocation3 + $0x28] sm:$0xff] %v1410
          %1549 = vst [vmem:[#allocation3 + $0x30] sm:$0xff] %v1415
          %1550 = vst [vmem:[#allocation3 + $0x38] sm:$0xff] %v1420
          %1551 = vst [vmem:[#allocation3 + $0x40] sm:$0xff] %v1425
          %1552 = vst [vmem:[#allocation3 + $0x48] sm:$0xff] %v1430
          %1553 = vst [vmem:[#allocation3 + $0x50] sm:$0xff] %v1435
          %1554 = vst [vmem:[#allocation3 + $0x58] sm:$0xff] %v1440
          %1555 = vst [vmem:[#allocation3 + $0x60] sm:$0xff] %v1445
          %1556 = vst [vmem:[#allocation3 + $0x68] sm:$0xff] %v1450
          %1557 = vst [vmem:[#allocation3 + $0x70] sm:$0xff] %v1455
          %1558 = vst [vmem:[#allocation3 + $0x78] sm:$0xff] %v1460
          %1559 = vst [vmem:[#allocation3 + $0x80] sm:$0xff] %v1465
          %1560 = vst [vmem:[#allocation3 + $0x88] sm:$0xff] %v1470
          %1561 = vst [vmem:[#allocation3 + $0x90] sm:$0xff] %v1475
          %1562 = vst [vmem:[#allocation3 + $0x98] sm:$0xff] %v1480
          %1563 = vst [vmem:[#allocation3 + $0xa0] sm:$0xff] %v1485
          %1564 = vst [vmem:[#allocation3 + $0xa8] sm:$0xff] %v1490
          %1565 = vst [vmem:[#allocation3 + $0xb0] sm:$0xff] %v1495
          %1566 = vst [vmem:[#allocation3 + $0xb8] sm:$0xff] %v1500
          %1567 = vst [vmem:[#allocation3 + $0xc0] sm:$0xff] %v1505
          %1568 = vst [vmem:[#allocation3 + $0xc8] sm:$0xff] %v1510
          %1569 = vst [vmem:[#allocation3 + $0xd0] sm:$0xff] %v1515
          %1570 = vst [vmem:[#allocation3 + $0xd8] sm:$0xff] %v1520
          %1571 = vst [vmem:[#allocation3 + $0xe0] sm:$0xff] %v1525
          %1572 = vst [vmem:[#allocation3 + $0xe8] sm:$0xff] %v1530
          %1573 = vst [vmem:[#allocation3 + $0xf0] sm:$0xff] %v1535
          %1574 = vst [vmem:[#allocation3 + $0xf8] sm:$0xff] %v1540
          %v1575 = vld [vmem:[#allocation3] sm:$0xff]
          %v1576 = vld [vmem:[#allocation3 + $0x8] sm:$0xff]
          %v1577 = vld [vmem:[#allocation3 + $0x10] sm:$0xff]
          %v1578 = vld [vmem:[#allocation3 + $0x18] sm:$0xff]
          %v1579 = vld [vmem:[#allocation3 + $0x20] sm:$0xff]
          %v1580 = vld [vmem:[#allocation3 + $0x28] sm:$0xff]
          %v1581 = vld [vmem:[#allocation3 + $0x30] sm:$0xff]
          %v1582 = vld [vmem:[#allocation3 + $0x38] sm:$0xff]
          %v1583 = vld [vmem:[#allocation3 + $0x40] sm:$0xff]
          %v1584 = vld [vmem:[#allocation3 + $0x48] sm:$0xff]
          %v1585 = vld [vmem:[#allocation3 + $0x50] sm:$0xff]
          %v1586 = vld [vmem:[#allocation3 + $0x58] sm:$0xff]
          %v1587 = vld [vmem:[#allocation3 + $0x60] sm:$0xff]
          %v1588 = vld [vmem:[#allocation3 + $0x68] sm:$0xff]
          %v1589 = vld [vmem:[#allocation3 + $0x70] sm:$0xff]
          %v1590 = vld [vmem:[#allocation3 + $0x78] sm:$0xff]
          %v1591 = vld [vmem:[#allocation3 + $0x80] sm:$0xff]
          %v1592 = vld [vmem:[#allocation3 + $0x88] sm:$0xff]
          %v1593 = vld [vmem:[#allocation3 + $0x90] sm:$0xff]
          %v1594 = vld [vmem:[#allocation3 + $0x98] sm:$0xff]
          %v1595 = vld [vmem:[#allocation3 + $0xa0] sm:$0xff]
          %v1596 = vld [vmem:[#allocation3 + $0xa8] sm:$0xff]
          %v1597 = vld [vmem:[#allocation3 + $0xb0] sm:$0xff]
          %v1598 = vld [vmem:[#allocation3 + $0xb8] sm:$0xff]
          %v1599 = vld [vmem:[#allocation3 + $0xc0] sm:$0xff]
          %v1600 = vld [vmem:[#allocation3 + $0xc8] sm:$0xff]
          %v1601 = vld [vmem:[#allocation3 + $0xd0] sm:$0xff]
          %v1602 = vld [vmem:[#allocation3 + $0xd8] sm:$0xff]
          %v1603 = vld [vmem:[#allocation3 + $0xe0] sm:$0xff]
          %v1604 = vld [vmem:[#allocation3 + $0xe8] sm:$0xff]
          %v1605 = vld [vmem:[#allocation3 + $0xf0] sm:$0xff]
          %v1606 = vld [vmem:[#allocation3 + $0xf8] sm:$0xff]
          %1607 = vmatprep.subr.mxu0 0.0
          %1608 = vmatpush1.msra.mxu0 %v1575
          %1609 = vmatprep.subr.mxu0 0.0
          %1610 = vmatpush1.msra.mxu0 %v1576
          %1611 = vmatprep.subr.mxu0 0.0
          %1612 = vmatpush1.msra.mxu0 %v1577
          %1613 = vmatprep.subr.mxu0 0.0
          %1614 = vmatpush1.msra.mxu0 %v1578
          %1615 = vmatprep.subr.mxu0 0.0
          %1616 = vmatpush1.msra.mxu0 %v1579
          %1617 = vmatprep.subr.mxu0 0.0
          %1618 = vmatpush1.msra.mxu0 %v1580
          %1619 = vmatprep.subr.mxu0 0.0
          %1620 = vmatpush1.msra.mxu0 %v1581
          %1621 = vmatprep.subr.mxu0 0.0
          %1622 = vmatpush1.msra.mxu0 %v1582
          %1623 = vmatprep.subr.mxu0 0.0
          %1624 = vmatpush1.msra.mxu0 %v1583
          %1625 = vmatprep.subr.mxu0 0.0
          %1626 = vmatpush1.msra.mxu0 %v1584
          %1627 = vmatprep.subr.mxu0 0.0
          %1628 = vmatpush1.msra.mxu0 %v1585
          %1629 = vmatprep.subr.mxu0 0.0
          %1630 = vmatpush1.msra.mxu0 %v1586
          %1631 = vmatprep.subr.mxu0 0.0
          %1632 = vmatpush1.msra.mxu0 %v1587
          %1633 = vmatprep.subr.mxu0 0.0
          %1634 = vmatpush1.msra.mxu0 %v1588
          %1635 = vmatprep.subr.mxu0 0.0
          %1636 = vmatpush1.msra.mxu0 %v1589
          %1637 = vmatprep.subr.mxu0 0.0
          %1638 = vmatpush1.msra.mxu0 %v1590
          %1639 = vmatprep.subr.mxu0 0.0
          %1640 = vmatpush1.msra.mxu0 %v1591
          %1641 = vmatprep.subr.mxu0 0.0
          %1642 = vmatpush1.msra.mxu0 %v1592
          %1643 = vmatprep.subr.mxu0 0.0
          %1644 = vmatpush1.msra.mxu0 %v1593
          %1645 = vmatprep.subr.mxu0 0.0
          %1646 = vmatpush1.msra.mxu0 %v1594
          %1647 = vmatprep.subr.mxu0 0.0
          %1648 = vmatpush1.msra.mxu0 %v1595
          %1649 = vmatprep.subr.mxu0 0.0
          %1650 = vmatpush1.msra.mxu0 %v1596
          %1651 = vmatprep.subr.mxu0 0.0
          %1652 = vmatpush1.msra.mxu0 %v1597
          %1653 = vmatprep.subr.mxu0 0.0
          %1654 = vmatpush1.msra.mxu0 %v1598
          %1655 = vmatprep.subr.mxu0 0.0
          %1656 = vmatpush1.msra.mxu0 %v1599
          %1657 = vmatprep.subr.mxu0 0.0
          %1658 = vmatpush1.msra.mxu0 %v1600
          %1659 = vmatprep.subr.mxu0 0.0
          %1660 = vmatpush1.msra.mxu0 %v1601
          %1661 = vmatprep.subr.mxu0 0.0
          %1662 = vmatpush1.msra.mxu0 %v1602
          %1663 = vmatprep.subr.mxu0 0.0
          %1664 = vmatpush1.msra.mxu0 %v1603
          %1665 = vmatprep.subr.mxu0 0.0
          %1666 = vmatpush1.msra.mxu0 %v1604
          %1667 = vmatprep.subr.mxu0 0.0
          %1668 = vmatpush1.msra.mxu0 %v1605
          %1669 = vmatprep.subr.mxu0 0.0
          %1670 = vmatpush1.msra.mxu0 %v1606
          %1671 = vmatprep.mubr.f32.mxu0 %v573
          %1672 = vmatmul.mubr.f32.gmra.mrb[0].mxu0 %v572
          %v1673 = vpop.f32.mrb[0].mxu0
          %v1674 = vadd.f32 0.0, %v1673
          %v1675 = vpop.f32.mrb[0].mxu0
          %1676 = vmatprep.mubr.f32.mxu0 %v575
          %1677 = vmatmul.mubr.f32.gmra.mrb[0].mxu0 %v574
          %v1678 = vpop.f32.mrb[0].mxu0
          %v1679 = vadd.f32 0.0, %v1678
          %v1680 = vpop.f32.mrb[0].mxu0
          %1681 = vmatprep.mubr.f32.mxu0 %v577
          %1682 = vmatmul.mubr.f32.gmra.mrb[0].mxu0 %v576
          %v1683 = vpop.f32.mrb[0].mxu0
          %v1684 = vadd.f32 0.0, %v1683
          %v1685 = vpop.f32.mrb[0].mxu0
          %1686 = vmatprep.mubr.f32.mxu0 %v579
          %1687 = vmatmul.mubr.f32.gmra.mrb[0].mxu0 %v578
          %v1688 = vpop.f32.mrb[0].mxu0
          %v1689 = vadd.f32 0.0, %v1688
          %v1690 = vpop.f32.mrb[0].mxu0
          %1691 = vmatprep.mubr.f32.mxu0 %v581
          %1692 = vmatmul.mubr.f32.gmra.mrb[0].mxu0 %v580
          %v1693 = vpop.f32.mrb[0].mxu0
          %v1694 = vadd.f32 0.0, %v1693
          %v1695 = vpop.f32.mrb[0].mxu0
          %1696 = vmatprep.mubr.f32.mxu0 %v583
          %1697 = vmatmul.mubr.f32.gmra.mrb[0].mxu0 %v582
          %v1698 = vpop.f32.mrb[0].mxu0
          %v1699 = vadd.f32 0.0, %v1698
          %v1700 = vpop.f32.mrb[0].mxu0
          %1701 = vmatprep.mubr.f32.mxu0 %v585
          %1702 = vmatmul.mubr.f32.gmra.mrb[0].mxu0 %v584
          %v1703 = vpop.f32.mrb[0].mxu0
          %v1704 = vadd.f32 0.0, %v1703
          %v1705 = vpop.f32.mrb[0].mxu0
          %1706 = vmatprep.mubr.f32.mxu0 %v587
          %1707 = vmatmul.mubr.f32.gmra.mrb[0].mxu0 %v586
          %v1708 = vpop.f32.mrb[0].mxu0
          %v1709 = vadd.f32 0.0, %v1708
          %v1710 = vpop.f32.mrb[0].mxu0
          %1711 = vmatprep.mubr.f32.mxu0 %v589
          %1712 = vmatmul.mubr.f32.gmra.mrb[0].mxu0 %v588
          %v1713 = vpop.f32.mrb[0].mxu0
          %v1714 = vadd.f32 0.0, %v1713
          %v1715 = vpop.f32.mrb[0].mxu0
          %1716 = vmatprep.mubr.f32.mxu0 %v591
          %1717 = vmatmul.mubr.f32.gmra.mrb[0].mxu0 %v590
          %v1718 = vpop.f32.mrb[0].mxu0
          %v1719 = vadd.f32 0.0, %v1718
          %v1720 = vpop.f32.mrb[0].mxu0
          %1721 = vmatprep.mubr.f32.mxu0 %v593
          %1722 = vmatmul.mubr.f32.gmra.mrb[0].mxu0 %v592
          %v1723 = vpop.f32.mrb[0].mxu0
          %v1724 = vadd.f32 0.0, %v1723
          %v1725 = vpop.f32.mrb[0].mxu0
          %1726 = vmatprep.mubr.f32.mxu0 %v595
          %1727 = vmatmul.mubr.f32.gmra.mrb[0].mxu0 %v594
          %v1728 = vpop.f32.mrb[0].mxu0
          %v1729 = vadd.f32 0.0, %v1728
          %v1730 = vpop.f32.mrb[0].mxu0
          %1731 = vmatprep.mubr.f32.mxu0 %v597
          %1732 = vmatmul.mubr.f32.gmra.mrb[0].mxu0 %v596
          %v1733 = vpop.f32.mrb[0].mxu0
          %v1734 = vadd.f32 0.0, %v1733
          %v1735 = vpop.f32.mrb[0].mxu0
          %1736 = vmatprep.mubr.f32.mxu0 %v599
          %1737 = vmatmul.mubr.f32.gmra.mrb[0].mxu0 %v598
          %v1738 = vpop.f32.mrb[0].mxu0
          %v1739 = vadd.f32 0.0, %v1738
          %v1740 = vpop.f32.mrb[0].mxu0
          %1741 = vmatprep.mubr.f32.mxu0 %v601
          %1742 = vmatmul.mubr.f32.gmra.mrb[0].mxu0 %v600
          %v1743 = vpop.f32.mrb[0].mxu0
          %v1744 = vadd.f32 0.0, %v1743
          %v1745 = vpop.f32.mrb[0].mxu0
          %1746 = vmatprep.mubr.f32.mxu0 %v603
          %1747 = vmatmul.mubr.f32.gmra.mrb[0].mxu0 %v602
          %v1748 = vpop.f32.mrb[0].mxu0
          %v1749 = vadd.f32 0.0, %v1748
          %v1750 = vpop.f32.mrb[0].mxu0
          %1751 = vmatprep.mubr.f32.mxu0 %v605
          %1752 = vmatmul.mubr.f32.gmra.mrb[0].mxu0 %v604
          %v1753 = vpop.f32.mrb[0].mxu0
          %v1754 = vadd.f32 0.0, %v1753
          %v1755 = vpop.f32.mrb[0].mxu0
          %1756 = vmatprep.mubr.f32.mxu0 %v607
          %1757 = vmatmul.mubr.f32.gmra.mrb[0].mxu0 %v606
          %v1758 = vpop.f32.mrb[0].mxu0
          %v1759 = vadd.f32 0.0, %v1758
          %v1760 = vpop.f32.mrb[0].mxu0
          %1761 = vmatprep.mubr.f32.mxu0 %v609
          %1762 = vmatmul.mubr.f32.gmra.mrb[0].mxu0 %v608
          %v1763 = vpop.f32.mrb[0].mxu0
          %v1764 = vadd.f32 0.0, %v1763
          %v1765 = vpop.f32.mrb[0].mxu0
          %1766 = vmatprep.mubr.f32.mxu0 %v611
          %1767 = vmatmul.mubr.f32.gmra.mrb[0].mxu0 %v610
          %v1768 = vpop.f32.mrb[0].mxu0
          %v1769 = vadd.f32 0.0, %v1768
          %v1770 = vpop.f32.mrb[0].mxu0
          %1771 = vmatprep.mubr.f32.mxu0 %v613
          %1772 = vmatmul.mubr.f32.gmra.mrb[0].mxu0 %v612
          %v1773 = vpop.f32.mrb[0].mxu0
          %v1774 = vadd.f32 0.0, %v1773
          %v1775 = vpop.f32.mrb[0].mxu0
          %1776 = vmatprep.mubr.f32.mxu0 %v615
          %1777 = vmatmul.mubr.f32.gmra.mrb[0].mxu0 %v614
          %v1778 = vpop.f32.mrb[0].mxu0
          %v1779 = vadd.f32 0.0, %v1778
          %v1780 = vpop.f32.mrb[0].mxu0
          %1781 = vmatprep.mubr.f32.mxu0 %v617
          %1782 = vmatmul.mubr.f32.gmra.mrb[0].mxu0 %v616
          %v1783 = vpop.f32.mrb[0].mxu0
          %v1784 = vadd.f32 0.0, %v1783
          %v1785 = vpop.f32.mrb[0].mxu0
          %1786 = vmatprep.mubr.f32.mxu0 %v619
          %1787 = vmatmul.mubr.f32.gmra.mrb[0].mxu0 %v618
          %v1788 = vpop.f32.mrb[0].mxu0
          %v1789 = vadd.f32 0.0, %v1788
          %v1790 = vpop.f32.mrb[0].mxu0
          %1791 = vmatprep.mubr.f32.mxu0 %v621
          %1792 = vmatmul.mubr.f32.gmra.mrb[0].mxu0 %v620
          %v1793 = vpop.f32.mrb[0].mxu0
          %v1794 = vadd.f32 0.0, %v1793
          %v1795 = vpop.f32.mrb[0].mxu0
          %1796 = vmatprep.mubr.f32.mxu0 %v623
          %1797 = vmatmul.mubr.f32.gmra.mrb[0].mxu0 %v622
          %v1798 = vpop.f32.mrb[0].mxu0
          %v1799 = vadd.f32 0.0, %v1798
          %v1800 = vpop.f32.mrb[0].mxu0
          %1801 = vmatprep.mubr.f32.mxu0 %v625
          %1802 = vmatmul.mubr.f32.gmra.mrb[0].mxu0 %v624
          %v1803 = vpop.f32.mrb[0].mxu0
          %v1804 = vadd.f32 0.0, %v1803
          %v1805 = vpop.f32.mrb[0].mxu0
          %1806 = vmatprep.mubr.f32.mxu0 %v627
          %1807 = vmatmul.mubr.f32.gmra.mrb[0].mxu0 %v626
          %v1808 = vpop.f32.mrb[0].mxu0
          %v1809 = vadd.f32 0.0, %v1808
          %v1810 = vpop.f32.mrb[0].mxu0
          %1811 = vmatprep.mubr.f32.mxu0 %v629
          %1812 = vmatmul.mubr.f32.gmra.mrb[0].mxu0 %v628
          %v1813 = vpop.f32.mrb[0].mxu0
          %v1814 = vadd.f32 0.0, %v1813
          %v1815 = vpop.f32.mrb[0].mxu0
          %1816 = vmatprep.mubr.f32.mxu0 %v631
          %1817 = vmatmul.mubr.f32.gmra.mrb[0].mxu0 %v630
          %v1818 = vpop.f32.mrb[0].mxu0
          %v1819 = vadd.f32 0.0, %v1818
          %v1820 = vpop.f32.mrb[0].mxu0
          %1821 = vmatprep.mubr.f32.mxu0 %v633
          %1822 = vmatmul.mubr.f32.gmra.mrb[0].mxu0 %v632
          %v1823 = vpop.f32.mrb[0].mxu0
          %v1824 = vadd.f32 0.0, %v1823
          %v1825 = vpop.f32.mrb[0].mxu0
          %1826 = vmatprep.mubr.f32.mxu0 %v635
          %1827 = vmatmul.mubr.f32.gmra.mrb[0].mxu0 %v634
          %v1828 = vpop.f32.mrb[0].mxu0
          %v1829 = vadd.f32 0.0, %v1828
          %v1830 = vpop.f32.mrb[0].mxu0
          %1831 = vdwg.mxu0
          %1832 = vst [vmem:[#allocation3] sm:$0xff] %v1674
          %1833 = vst [vmem:[#allocation3 + $0x8] sm:$0xff] %v1679
          %1834 = vst [vmem:[#allocation3 + $0x10] sm:$0xff] %v1684
          %1835 = vst [vmem:[#allocation3 + $0x18] sm:$0xff] %v1689
          %1836 = vst [vmem:[#allocation3 + $0x20] sm:$0xff] %v1694
          %1837 = vst [vmem:[#allocation3 + $0x28] sm:$0xff] %v1699
          %1838 = vst [vmem:[#allocation3 + $0x30] sm:$0xff] %v1704
          %1839 = vst [vmem:[#allocation3 + $0x38] sm:$0xff] %v1709
          %1840 = vst [vmem:[#allocation3 + $0x40] sm:$0xff] %v1714
          %1841 = vst [vmem:[#allocation3 + $0x48] sm:$0xff] %v1719
          %1842 = vst [vmem:[#allocation3 + $0x50] sm:$0xff] %v1724
          %1843 = vst [vmem:[#allocation3 + $0x58] sm:$0xff] %v1729
          %1844 = vst [vmem:[#allocation3 + $0x60] sm:$0xff] %v1734
          %1845 = vst [vmem:[#allocation3 + $0x68] sm:$0xff] %v1739
          %1846 = vst [vmem:[#allocation3 + $0x70] sm:$0xff] %v1744
          %1847 = vst [vmem:[#allocation3 + $0x78] sm:$0xff] %v1749
          %1848 = vst [vmem:[#allocation3 + $0x80] sm:$0xff] %v1754
          %1849 = vst [vmem:[#allocation3 + $0x88] sm:$0xff] %v1759
          %1850 = vst [vmem:[#allocation3 + $0x90] sm:$0xff] %v1764
          %1851 = vst [vmem:[#allocation3 + $0x98] sm:$0xff] %v1769
          %1852 = vst [vmem:[#allocation3 + $0xa0] sm:$0xff] %v1774
          %1853 = vst [vmem:[#allocation3 + $0xa8] sm:$0xff] %v1779
          %1854 = vst [vmem:[#allocation3 + $0xb0] sm:$0xff] %v1784
          %1855 = vst [vmem:[#allocation3 + $0xb8] sm:$0xff] %v1789
          %1856 = vst [vmem:[#allocation3 + $0xc0] sm:$0xff] %v1794
          %1857 = vst [vmem:[#allocation3 + $0xc8] sm:$0xff] %v1799
          %1858 = vst [vmem:[#allocation3 + $0xd0] sm:$0xff] %v1804
          %1859 = vst [vmem:[#allocation3 + $0xd8] sm:$0xff] %v1809
          %1860 = vst [vmem:[#allocation3 + $0xe0] sm:$0xff] %v1814
          %1861 = vst [vmem:[#allocation3 + $0xe8] sm:$0xff] %v1819
          %1862 = vst [vmem:[#allocation3 + $0xf0] sm:$0xff] %v1824
          %1863 = vst [vmem:[#allocation3 + $0xf8] sm:$0xff] %v1829
          %v1864 = vld [vmem:[#allocation3] sm:$0xff]
          %v1865 = vld [vmem:[#allocation3 + $0x8] sm:$0xff]
          %v1866 = vld [vmem:[#allocation3 + $0x10] sm:$0xff]
          %v1867 = vld [vmem:[#allocation3 + $0x18] sm:$0xff]
          %v1868 = vld [vmem:[#allocation3 + $0x20] sm:$0xff]
          %v1869 = vld [vmem:[#allocation3 + $0x28] sm:$0xff]
          %v1870 = vld [vmem:[#allocation3 + $0x30] sm:$0xff]
          %v1871 = vld [vmem:[#allocation3 + $0x38] sm:$0xff]
          %v1872 = vld [vmem:[#allocation3 + $0x40] sm:$0xff]
          %v1873 = vld [vmem:[#allocation3 + $0x48] sm:$0xff]
          %v1874 = vld [vmem:[#allocation3 + $0x50] sm:$0xff]
          %v1875 = vld [vmem:[#allocation3 + $0x58] sm:$0xff]
          %v1876 = vld [vmem:[#allocation3 + $0x60] sm:$0xff]
          %v1877 = vld [vmem:[#allocation3 + $0x68] sm:$0xff]
          %v1878 = vld [vmem:[#allocation3 + $0x70] sm:$0xff]
          %v1879 = vld [vmem:[#allocation3 + $0x78] sm:$0xff]
          %v1880 = vld [vmem:[#allocation3 + $0x80] sm:$0xff]
          %v1881 = vld [vmem:[#allocation3 + $0x88] sm:$0xff]
          %v1882 = vld [vmem:[#allocation3 + $0x90] sm:$0xff]
          %v1883 = vld [vmem:[#allocation3 + $0x98] sm:$0xff]
          %v1884 = vld [vmem:[#allocation3 + $0xa0] sm:$0xff]
          %v1885 = vld [vmem:[#allocation3 + $0xa8] sm:$0xff]
          %v1886 = vld [vmem:[#allocation3 + $0xb0] sm:$0xff]
          %v1887 = vld [vmem:[#allocation3 + $0xb8] sm:$0xff]
          %v1888 = vld [vmem:[#allocation3 + $0xc0] sm:$0xff]
          %v1889 = vld [vmem:[#allocation3 + $0xc8] sm:$0xff]
          %v1890 = vld [vmem:[#allocation3 + $0xd0] sm:$0xff]
          %v1891 = vld [vmem:[#allocation3 + $0xd8] sm:$0xff]
          %v1892 = vld [vmem:[#allocation3 + $0xe0] sm:$0xff]
          %v1893 = vld [vmem:[#allocation3 + $0xe8] sm:$0xff]
          %v1894 = vld [vmem:[#allocation3 + $0xf0] sm:$0xff]
          %v1895 = vld [vmem:[#allocation3 + $0xf8] sm:$0xff]
          %v1897 = vlaneseq
          %v1898 = vshrl.u32 %v1897, 7
          %v1899 = vsub.s32 0, %v1898
          %v1900 = vrot.slane %v1285, %v1899
          %1902 = vmatprep.subr.mxu0 0.0
          %1903 = vmatpush1.msra.mxu0 %v1269
          %1904 = vmatprep.subr.mxu0 0.0
          %1905 = vmatpush1.msra.mxu0 %v1270
          %1906 = vmatprep.subr.mxu0 0.0
          %1907 = vmatpush1.msra.mxu0 %v1271
          %1908 = vmatprep.subr.mxu0 0.0
          %1909 = vmatpush1.msra.mxu0 %v1272
          %1910 = vmatprep.subr.mxu0 0.0
          %1911 = vmatpush1.msra.mxu0 %v1273
          %1912 = vmatprep.subr.mxu0 0.0
          %1913 = vmatpush1.msra.mxu0 %v1274
          %1914 = vmatprep.subr.mxu0 0.0
          %1915 = vmatpush1.msra.mxu0 %v1275
          %1916 = vmatprep.subr.mxu0 0.0
          %1917 = vmatpush1.msra.mxu0 %v1276
          %1918 = vmatprep.subr.mxu0 0.0
          %1919 = vmatpush1.msra.mxu0 %v1277
          %1920 = vmatprep.subr.mxu0 0.0
          %1921 = vmatpush1.msra.mxu0 %v1278
          %1922 = vmatprep.subr.mxu0 0.0
          %1923 = vmatpush1.msra.mxu0 %v1279
          %1924 = vmatprep.subr.mxu0 0.0
          %1925 = vmatpush1.msra.mxu0 %v1280
          %1926 = vmatprep.subr.mxu0 0.0
          %1927 = vmatpush1.msra.mxu0 %v1281
          %1928 = vmatprep.subr.mxu0 0.0
          %1929 = vmatpush1.msra.mxu0 %v1282
          %1930 = vmatprep.subr.mxu0 0.0
          %1931 = vmatpush1.msra.mxu0 %v1283
          %1932 = vmatprep.subr.mxu0 0.0
          %1933 = vmatpush1.msra.mxu0 %v1284
          %1934 = vmatprep.subr.mxu0 0.0
          %1935 = vmatpush1.msra.mxu0 0.0
          %1936 = vmatprep.subr.mxu0 0.0
          %1937 = vmatpush1.msra.mxu0 0.0
          %1938 = vmatprep.subr.mxu0 0.0
          %1939 = vmatpush1.msra.mxu0 0.0
          %1940 = vmatprep.subr.mxu0 0.0
          %1941 = vmatpush1.msra.mxu0 0.0
          %1942 = vmatprep.subr.mxu0 0.0
          %1943 = vmatpush1.msra.mxu0 0.0
          %1944 = vmatprep.subr.mxu0 0.0
          %1945 = vmatpush1.msra.mxu0 0.0
          %1946 = vmatprep.subr.mxu0 0.0
          %1947 = vmatpush1.msra.mxu0 0.0
          %1948 = vmatprep.subr.mxu0 0.0
          %1949 = vmatpush1.msra.mxu0 0.0
          %1950 = vmatprep.subr.mxu0 0.0
          %1951 = vmatpush1.msra.mxu0 0.0
          %1952 = vmatprep.subr.mxu0 0.0
          %1953 = vmatpush1.msra.mxu0 0.0
          %1954 = vmatprep.subr.mxu0 0.0
          %1955 = vmatpush1.msra.mxu0 0.0
          %1956 = vmatprep.subr.mxu0 0.0
          %1957 = vmatpush1.msra.mxu0 0.0
          %1958 = vmatprep.subr.mxu0 0.0
          %1959 = vmatpush1.msra.mxu0 0.0
          %1960 = vmatprep.subr.mxu0 0.0
          %1961 = vmatpush1.msra.mxu0 0.0
          %1962 = vmatprep.subr.mxu0 0.0
          %1963 = vmatpush1.msra.mxu0 0.0
          %1964 = vmatprep.subr.mxu0 0.0
          %1965 = vmatpush1.msra.mxu0 0.0
          %1966 = vmatprep.mubr.f32.mxu0 0.0
          %1967 = vmatmul.mubr.f32.gmra.mrb[0].mxu0 %v1864
          %v1968 = vpop.f32.mrb[0].mxu0
          %v1969 = vadd.f32 %v1900, %v1968
          %v1970 = vpop.f32.mrb[0].mxu0
          %1971 = vmatprep.mubr.f32.mxu0 0.0
          %1972 = vmatmul.mubr.f32.gmra.mrb[0].mxu0 %v1865
          %v1973 = vpop.f32.mrb[0].mxu0
          %v1974 = vadd.f32 %v1900, %v1973
          %v1975 = vpop.f32.mrb[0].mxu0
          %1976 = vmatprep.mubr.f32.mxu0 0.0
          %1977 = vmatmul.mubr.f32.gmra.mrb[0].mxu0 %v1866
          %v1978 = vpop.f32.mrb[0].mxu0
          %v1979 = vadd.f32 %v1900, %v1978
          %v1980 = vpop.f32.mrb[0].mxu0
          %1981 = vmatprep.mubr.f32.mxu0 0.0
          %1982 = vmatmul.mubr.f32.gmra.mrb[0].mxu0 %v1867
          %v1983 = vpop.f32.mrb[0].mxu0
          %v1984 = vadd.f32 %v1900, %v1983
          %v1985 = vpop.f32.mrb[0].mxu0
          %1986 = vmatprep.mubr.f32.mxu0 0.0
          %1987 = vmatmul.mubr.f32.gmra.mrb[0].mxu0 %v1868
          %v1988 = vpop.f32.mrb[0].mxu0
          %v1989 = vadd.f32 %v1900, %v1988
          %v1990 = vpop.f32.mrb[0].mxu0
          %1991 = vmatprep.mubr.f32.mxu0 0.0
          %1992 = vmatmul.mubr.f32.gmra.mrb[0].mxu0 %v1869
          %v1993 = vpop.f32.mrb[0].mxu0
          %v1994 = vadd.f32 %v1900, %v1993
          %v1995 = vpop.f32.mrb[0].mxu0
          %1996 = vmatprep.mubr.f32.mxu0 0.0
          %1997 = vmatmul.mubr.f32.gmra.mrb[0].mxu0 %v1870
          %v1998 = vpop.f32.mrb[0].mxu0
          %v1999 = vadd.f32 %v1900, %v1998
          %v2000 = vpop.f32.mrb[0].mxu0
          %2001 = vmatprep.mubr.f32.mxu0 0.0
          %2002 = vmatmul.mubr.f32.gmra.mrb[0].mxu0 %v1871
          %v2003 = vpop.f32.mrb[0].mxu0
          %v2004 = vadd.f32 %v1900, %v2003
          %v2005 = vpop.f32.mrb[0].mxu0
          %2006 = vmatprep.mubr.f32.mxu0 0.0
          %2007 = vmatmul.mubr.f32.gmra.mrb[0].mxu0 %v1872
          %v2008 = vpop.f32.mrb[0].mxu0
          %v2009 = vadd.f32 %v1900, %v2008
          %v2010 = vpop.f32.mrb[0].mxu0
          %2011 = vmatprep.mubr.f32.mxu0 0.0
          %2012 = vmatmul.mubr.f32.gmra.mrb[0].mxu0 %v1873
          %v2013 = vpop.f32.mrb[0].mxu0
          %v2014 = vadd.f32 %v1900, %v2013
          %v2015 = vpop.f32.mrb[0].mxu0
          %2016 = vmatprep.mubr.f32.mxu0 0.0
          %2017 = vmatmul.mubr.f32.gmra.mrb[0].mxu0 %v1874
          %v2018 = vpop.f32.mrb[0].mxu0
          %v2019 = vadd.f32 %v1900, %v2018
          %v2020 = vpop.f32.mrb[0].mxu0
          %2021 = vmatprep.mubr.f32.mxu0 0.0
          %2022 = vmatmul.mubr.f32.gmra.mrb[0].mxu0 %v1875
          %v2023 = vpop.f32.mrb[0].mxu0
          %v2024 = vadd.f32 %v1900, %v2023
          %v2025 = vpop.f32.mrb[0].mxu0
          %2026 = vmatprep.mubr.f32.mxu0 0.0
          %2027 = vmatmul.mubr.f32.gmra.mrb[0].mxu0 %v1876
          %v2028 = vpop.f32.mrb[0].mxu0
          %v2029 = vadd.f32 %v1900, %v2028
          %v2030 = vpop.f32.mrb[0].mxu0
          %2031 = vmatprep.mubr.f32.mxu0 0.0
          %2032 = vmatmul.mubr.f32.gmra.mrb[0].mxu0 %v1877
          %v2033 = vpop.f32.mrb[0].mxu0
          %v2034 = vadd.f32 %v1900, %v2033
          %v2035 = vpop.f32.mrb[0].mxu0
          %2036 = vmatprep.mubr.f32.mxu0 0.0
          %2037 = vmatmul.mubr.f32.gmra.mrb[0].mxu0 %v1878
          %v2038 = vpop.f32.mrb[0].mxu0
          %v2039 = vadd.f32 %v1900, %v2038
          %v2040 = vpop.f32.mrb[0].mxu0
          %2041 = vmatprep.mubr.f32.mxu0 0.0
          %2042 = vmatmul.mubr.f32.gmra.mrb[0].mxu0 %v1879
          %v2043 = vpop.f32.mrb[0].mxu0
          %v2044 = vadd.f32 %v1900, %v2043
          %v2045 = vpop.f32.mrb[0].mxu0
          %2046 = vmatprep.mubr.f32.mxu0 0.0
          %2047 = vmatmul.mubr.f32.gmra.mrb[0].mxu0 %v1880
          %v2048 = vpop.f32.mrb[0].mxu0
          %v2049 = vadd.f32 %v1900, %v2048
          %v2050 = vpop.f32.mrb[0].mxu0
          %2051 = vmatprep.mubr.f32.mxu0 0.0
          %2052 = vmatmul.mubr.f32.gmra.mrb[0].mxu0 %v1881
          %v2053 = vpop.f32.mrb[0].mxu0
          %v2054 = vadd.f32 %v1900, %v2053
          %v2055 = vpop.f32.mrb[0].mxu0
          %2056 = vmatprep.mubr.f32.mxu0 0.0
          %2057 = vmatmul.mubr.f32.gmra.mrb[0].mxu0 %v1882
          %v2058 = vpop.f32.mrb[0].mxu0
          %v2059 = vadd.f32 %v1900, %v2058
          %v2060 = vpop.f32.mrb[0].mxu0
          %2061 = vmatprep.mubr.f32.mxu0 0.0
          %2062 = vmatmul.mubr.f32.gmra.mrb[0].mxu0 %v1883
          %v2063 = vpop.f32.mrb[0].mxu0
          %v2064 = vadd.f32 %v1900, %v2063
          %v2065 = vpop.f32.mrb[0].mxu0
          %2066 = vmatprep.mubr.f32.mxu0 0.0
          %2067 = vmatmul.mubr.f32.gmra.mrb[0].mxu0 %v1884
          %v2068 = vpop.f32.mrb[0].mxu0
          %v2069 = vadd.f32 %v1900, %v2068
          %v2070 = vpop.f32.mrb[0].mxu0
          %2071 = vmatprep.mubr.f32.mxu0 0.0
          %2072 = vmatmul.mubr.f32.gmra.mrb[0].mxu0 %v1885
          %v2073 = vpop.f32.mrb[0].mxu0
          %v2074 = vadd.f32 %v1900, %v2073
          %v2075 = vpop.f32.mrb[0].mxu0
          %2076 = vmatprep.mubr.f32.mxu0 0.0
          %2077 = vmatmul.mubr.f32.gmra.mrb[0].mxu0 %v1886
          %v2078 = vpop.f32.mrb[0].mxu0
          %v2079 = vadd.f32 %v1900, %v2078
          %v2080 = vpop.f32.mrb[0].mxu0
          %2081 = vmatprep.mubr.f32.mxu0 0.0
          %2082 = vmatmul.mubr.f32.gmra.mrb[0].mxu0 %v1887
          %v2083 = vpop.f32.mrb[0].mxu0
          %v2084 = vadd.f32 %v1900, %v2083
          %v2085 = vpop.f32.mrb[0].mxu0
          %2086 = vmatprep.mubr.f32.mxu0 0.0
          %2087 = vmatmul.mubr.f32.gmra.mrb[0].mxu0 %v1888
          %v2088 = vpop.f32.mrb[0].mxu0
          %v2089 = vadd.f32 %v1900, %v2088
          %v2090 = vpop.f32.mrb[0].mxu0
          %2091 = vmatprep.mubr.f32.mxu0 0.0
          %2092 = vmatmul.mubr.f32.gmra.mrb[0].mxu0 %v1889
          %v2093 = vpop.f32.mrb[0].mxu0
          %v2094 = vadd.f32 %v1900, %v2093
          %v2095 = vpop.f32.mrb[0].mxu0
          %2096 = vmatprep.mubr.f32.mxu0 0.0
          %2097 = vmatmul.mubr.f32.gmra.mrb[0].mxu0 %v1890
          %v2098 = vpop.f32.mrb[0].mxu0
          %v2099 = vadd.f32 %v1900, %v2098
          %v2100 = vpop.f32.mrb[0].mxu0
          %2101 = vmatprep.mubr.f32.mxu0 0.0
          %2102 = vmatmul.mubr.f32.gmra.mrb[0].mxu0 %v1891
          %v2103 = vpop.f32.mrb[0].mxu0
          %v2104 = vadd.f32 %v1900, %v2103
          %v2105 = vpop.f32.mrb[0].mxu0
          %2106 = vmatprep.mubr.f32.mxu0 0.0
          %2107 = vmatmul.mubr.f32.gmra.mrb[0].mxu0 %v1892
          %v2108 = vpop.f32.mrb[0].mxu0
          %v2109 = vadd.f32 %v1900, %v2108
          %v2110 = vpop.f32.mrb[0].mxu0
          %2111 = vmatprep.mubr.f32.mxu0 0.0
          %2112 = vmatmul.mubr.f32.gmra.mrb[0].mxu0 %v1893
          %v2113 = vpop.f32.mrb[0].mxu0
          %v2114 = vadd.f32 %v1900, %v2113
          %v2115 = vpop.f32.mrb[0].mxu0
          %2116 = vmatprep.mubr.f32.mxu0 0.0
          %2117 = vmatmul.mubr.f32.gmra.mrb[0].mxu0 %v1894
          %v2118 = vpop.f32.mrb[0].mxu0
          %v2119 = vadd.f32 %v1900, %v2118
          %v2120 = vpop.f32.mrb[0].mxu0
          %2121 = vmatprep.mubr.f32.mxu0 0.0
          %2122 = vmatmul.mubr.f32.gmra.mrb[0].mxu0 %v1895
          %v2123 = vpop.f32.mrb[0].mxu0
          %v2124 = vadd.f32 %v1900, %v2123
          %v2125 = vpop.f32.mrb[0].mxu0
          %2126 = vdwg.mxu0
          %2127 = vst [vmem:[#allocation12] sm:$0xff] %v1969
          %2128 = vst [vmem:[#allocation12 + $0x8] sm:$0xff] %v1974
          %2129 = vst [vmem:[#allocation12 + $0x10] sm:$0xff] %v1979
          %2130 = vst [vmem:[#allocation12 + $0x18] sm:$0xff] %v1984
          %2131 = vst [vmem:[#allocation12 + $0x20] sm:$0xff] %v1989
          %2132 = vst [vmem:[#allocation12 + $0x28] sm:$0xff] %v1994
          %2133 = vst [vmem:[#allocation12 + $0x30] sm:$0xff] %v1999
          %2134 = vst [vmem:[#allocation12 + $0x38] sm:$0xff] %v2004
          %2135 = vst [vmem:[#allocation12 + $0x40] sm:$0xff] %v2009
          %2136 = vst [vmem:[#allocation12 + $0x48] sm:$0xff] %v2014
          %2137 = vst [vmem:[#allocation12 + $0x50] sm:$0xff] %v2019
          %2138 = vst [vmem:[#allocation12 + $0x58] sm:$0xff] %v2024
          %2139 = vst [vmem:[#allocation12 + $0x60] sm:$0xff] %v2029
          %2140 = vst [vmem:[#allocation12 + $0x68] sm:$0xff] %v2034
          %2141 = vst [vmem:[#allocation12 + $0x70] sm:$0xff] %v2039
          %2142 = vst [vmem:[#allocation12 + $0x78] sm:$0xff] %v2044
          %2143 = vst [vmem:[#allocation12 + $0x80] sm:$0xff] %v2049
          %2144 = vst [vmem:[#allocation12 + $0x88] sm:$0xff] %v2054
          %2145 = vst [vmem:[#allocation12 + $0x90] sm:$0xff] %v2059
          %2146 = vst [vmem:[#allocation12 + $0x98] sm:$0xff] %v2064
          %2147 = vst [vmem:[#allocation12 + $0xa0] sm:$0xff] %v2069
          %2148 = vst [vmem:[#allocation12 + $0xa8] sm:$0xff] %v2074
          %2149 = vst [vmem:[#allocation12 + $0xb0] sm:$0xff] %v2079
          %2150 = vst [vmem:[#allocation12 + $0xb8] sm:$0xff] %v2084
          %2151 = vst [vmem:[#allocation12 + $0xc0] sm:$0xff] %v2089
          %2152 = vst [vmem:[#allocation12 + $0xc8] sm:$0xff] %v2094
          %2153 = vst [vmem:[#allocation12 + $0xd0] sm:$0xff] %v2099
          %2154 = vst [vmem:[#allocation12 + $0xd8] sm:$0xff] %v2104
          %2155 = vst [vmem:[#allocation12 + $0xe0] sm:$0xff] %v2109
          %2156 = vst [vmem:[#allocation12 + $0xe8] sm:$0xff] %v2114
          %2157 = vst [vmem:[#allocation12 + $0xf0] sm:$0xff] %v2119
          %2158 = vst [vmem:[#allocation12 + $0xf8] sm:$0xff] %v2124
        $region64: #{tpu_custom_call.1} parent=43 // pred_fallthru
          _
        // Predicated region
        $region65: #{tpu_custom_call.1} parent=43 // pred_check
          %p2159 = pneg %p167
        $region66: #{tpu_custom_call.1} parent=43 // pred_check_branch
          %2161 = sbr.rel (%p2159) target = $region68
        $region67: #{tpu_custom_call.1} parent=43 // pred_region
          %s2163 = ssub.s32 4096, 4096
          %2164 = vsyncadd [#allocation6], %s2163
          %s2165 = sshll.u32 [#allocation12], 4
          %s2166 = int_to_ptr.vmem [resolvable:$true] %s2165
          %2171 = dma.vmem_to_hbm [thread:$0]  %s2166, 4096, %s6, [#allocation6], 128, 128, 8
        $region68: #{tpu_custom_call.1} parent=43 // pred_fallthru
          _
        // Predicated region
        $region69: #{tpu_custom_call.1} parent=43 // pred_check
          %p2172 = pneg %p167
        $region70: #{tpu_custom_call.1} parent=43 // pred_check_branch
          %2174 = sbr.rel (%p2172) target = $region72
        $region71: #{tpu_custom_call.1} parent=43 // pred_region
          %2175 = dma.done [#allocation6], 4096
        $region72: #{tpu_custom_call.1} parent=43 // pred_fallthru
          _
      $region44: #{tpu_custom_call.1} parent=5 // pred_fallthru
        _
      %p2176 = scmp.le.s32.totalorder 2, %s18
      // Predicated region
      $region73: #{tpu_custom_call.1} parent=5 // pred_check
        %p2177 = pneg %p2176
      $region74: #{tpu_custom_call.1} parent=5 // pred_check_branch
        %2179 = sbr.rel (%p2177) target = $region76
      $region75: #{tpu_custom_call.1} parent=5 // pred_region
        %s2180 = ssub.s32 %s18, 2
      $region76: #{tpu_custom_call.1} parent=5 // pred_fallthru
        _
    $region6: #{tpu_custom_call.1} parent=1 // loop_footer
      %s22 = sadd.s32 1, %s18
    $region7: #{tpu_custom_call.1} parent=1 // loop_footer_branch
      %17 = sbr.rel target = $region3
    $region8: #{tpu_custom_call.1} parent=1 // loop_exit
      _
    %2181 = vsyncpa [#allocation5], 1
    %s2182 = scalar_lea.sflag [#allocation5], 1
    %2183 = vsyncpa %s2182, 1
    %2184 = vsyncpa [#allocation8], 1
    %2185 = vsyncpa [#allocation11], 1
    %2186 = vsyncpa [#allocation6], 1
    %s2187 = scalar_lea.sflag [#allocation6], 1
    %2188 = vsyncpa %s2187, 1

</llo_original>
